<compile_context>
chip_gen: v7x
topology: tpu7x:2x2x1
jax: 0.10.0
libtpu: 0.0.40
codegen_flags: <defaults>
</compile_context>

<pallas_src>
import functools
import math

import numpy as np
import jax
import jax.numpy as jnp
from jax.experimental import pallas as pl
from jax.experimental.pallas import tpu as pltpu

HIDDEN_DIM = 128   # fixed inside IBGConv.__init__
NUM_LAYERS = 2
LANE = 128


def _round_up(x, m):
    return ((x + m - 1) // m) * m


def _vmem_budget():
    """Generation-aware VMEM budget (bytes): ~75% of physical, capped at 100MiB."""
    cap = 64 * 1024 * 1024
    try:
        info = pltpu.get_tpu_info()
        cap = int(getattr(info, "vmem_capacity_bytes", cap)) or cap
    except Exception:
        pass
    return min(int(0.75 * cap), 100 * 1024 * 1024)


def _agg_vmem_bytes(tm, tk, n_pad, g_pad, resident_h):
    """Upper-bound VMEM use of the aggregation / last-pool kernels (double buffered)."""
    c = HIDDEN_DIM
    b = 2 * tm * tk                                    # int8 adjacency tile
    b += (2 * n_pad * c * 2) if resident_h else (2 * tk * c * 2)   # bf16 h
    b += 2 * tm * c * 4                                # base tile (f32)
    b += 2 * c * c * 4                                 # w2t
    b += 2 * tm * c * 4                                # out tile (f32)
    b += tm * c * 4                                    # acc scratch
    b += 2 * g_pad * tm * 4                            # pool tile (last layer)
    b += 2 * g_pad * c * 4                             # pooled-partial out
    return b


def _plan_tiles(n_pad, g_pad, budget):
    """Pick (tm, tk, resident_h). Prefers VMEM-resident h, then large row tiles."""
    cands = [(2048, 2048), (1024, 2048), (1024, 1024),
             (512, 1024), (512, 512), (256, 512), (256, 256)]
    for resident_h in (True, False):
        for tm, tk in cands:
            if n_pad % tm or n_pad % tk:
                continue
            if _agg_vmem_bytes(tm, tk, n_pad, g_pad, resident_h) <= budget:
                return tm, tk, resident_h
    return 256, 256, False


# ---------------------------------------------------------------------------
# Pallas kernels
# ---------------------------------------------------------------------------
def mpconv_prologue_kernel(x_ref, d_ref, s_ref, wcat_ref, blin_ref, w3_ref,
                           bias_ref, h_ref, base_ref, *, c_out):
    # single wide matmul for [W | W_self] (better MXU utilization at small K)
    x = x_ref[...]
    hh = jnp.dot(x, wcat_ref[...], preferred_element_type=jnp.float32)
    h = hh[:, :c_out]
    hs = hh[:, c_out:]
    # h stored bf16 for the downstream A@h matmul (intentional precision trade)
    h_ref[...] = h.astype(jnp.bfloat16)
    # folded self term:  d * (x @ (W @ W1^T) + b_lin) + s * w3 + bias
    base_ref[...] = (d_ref[...] * (hs + blin_ref[...])
                     + s_ref[...] * w3_ref[...] + bias_ref[...])


def _acc_update(acc_ref, prod, k):
    @pl.when(k == 0)
    def _():
        acc_ref[...] = prod            # direct store: no zero-fill + RMW

    @pl.when(k > 0)
    def _():
        acc_ref[...] += prod


def mpconv_agg_kernel(adj_ref, h_ref, base_ref, w2t_ref, out_ref, acc_ref,
                      *, apply_relu, resident_h, tk):
    k = pl.program_id(1)
    if resident_h:
        h = h_ref[pl.ds(pl.multiple_of(k * tk, tk), tk), :]
    else:
        h = h_ref[...]
    # int8 adjacency tile -> bf16 on the VPU (free under DMA-bound pass)
    prod = jnp.dot(adj_ref[...].astype(jnp.bfloat16), h,
                   preferred_element_type=jnp.float32)
    _acc_update(acc_ref, prod, k)

    @pl.when(k == pl.num_programs(1) - 1)
    def _():
        out = base_ref[...] + jnp.dot(acc_ref[...], w2t_ref[...],
                                      preferred_element_type=jnp.float32)
        if apply_relu:
            out = jnp.maximum(out, 0.0)
        out_ref[...] = out
    # TODO(synk): fuse the next layer's prologue (h_next/base_next) into this
    # epilogue to skip the z HBM round trip (small vs O(n^2) adj traffic).


def mpconv_last_pool_kernel(adj_ref, h_ref, base_ref, w2t_ref, pool_ref,
                            out_ref, acc_ref, *, resident_h, tk):
    k = pl.program_id(1)
    if resident_h:
        h = h_ref[pl.ds(pl.multiple_of(k * tk, tk), tk), :]
    else:
        h = h_ref[...]
    prod = jnp.dot(adj_ref[...].astype(jnp.bfloat16), h,
                   preferred_element_type=jnp.float32)
    _acc_update(acc_ref, prod, k)

    @pl.when(k == pl.num_programs(1) - 1)
    def _():
        # finalize this row tile of the last layer, sum-pool into a per-row-tile
        # partial (row axis stays 'parallel' -> v7x megacore sharding, no race).
        z = base_ref[...] + jnp.dot(acc_ref[...], w2t_ref[...],
                                    preferred_element_type=jnp.float32)
        out_ref[0] = jnp.dot(pool_ref[...], z, preferred_element_type=jnp.float32)


def pool_finalize_kernel(part_ref, out_ref, *, num_classes):
    # sum the per-row-tile pooled partials, then masked log_softmax over classes
    g = jnp.sum(part_ref[...], axis=0)
    lane = jax.lax.broadcasted_iota(jnp.int32, g.shape, 1)
    valid = lane < num_classes
    g = jnp.where(valid, g, -jnp.inf)
    m = jnp.max(g, axis=-1, keepdims=True)
    e = jnp.where(valid, jnp.exp(g - m), 0.0)
    lse = jnp.log(jnp.sum(e, axis=-1, keepdims=True)) + m
    out_ref[...] = jnp.where(valid, g - lse, 0.0)


# ---------------------------------------------------------------------------
# pallas_call wrappers
# ---------------------------------------------------------------------------
def mpconv_prologue(x, d, s, params, tm, vmem_limit):
    n, c_in = x.shape
    c_out = params["wcat"].shape[1] // 2
    row = lambda i: (i, 0)
    const = lambda i: (0, 0)
    kern = functools.partial(mpconv_prologue_kernel, c_out=c_out)
    return pl.pallas_call(
        kern,
        out_shape=(jax.ShapeDtypeStruct((n, c_out), jnp.bfloat16),
                   jax.ShapeDtypeStruct((n, c_out), jnp.float32)),
        grid_spec=pltpu.PrefetchScalarGridSpec(
            num_scalar_prefetch=0,
            grid=(n // tm,),
            in_specs=[pl.BlockSpec((tm, c_in), row),
                      pl.BlockSpec((tm, 1), row),
                      pl.BlockSpec((tm, 1), row),
                      pl.BlockSpec((c_in, 2 * c_out), const),
                      pl.BlockSpec((1, c_out), const),
                      pl.BlockSpec((1, c_out), const),
                      pl.BlockSpec((1, c_out), const)],
            out_specs=[pl.BlockSpec((tm, c_out), row),
                       pl.BlockSpec((tm, c_out), row)]),
        compiler_params=pltpu.CompilerParams(
            dimension_semantics=("parallel",),
            vmem_limit_bytes=vmem_limit),
        cost_estimate=pl.CostEstimate(
            flops=4 * n * c_in * c_out,
            transcendentals=0,
            bytes_accessed=4 * n * c_in + 10 * n * c_out),
    )(x, d, s, params["wcat"], params["blin"], params["w3"], params["bias"])


def _h_spec(resident_h, n, tk, c):
    if resident_h:
        return pl.BlockSpec((n, c), lambda i, k: (0, 0))     # DMAed once
    return pl.BlockSpec((tk, c), lambda i, k: (k, 0))


def mpconv_aggregate(adj, h, base, w2t, tm, tk, resident_h, vmem_limit,
                     apply_relu):
    n = adj.shape[0]
    c = h.shape[1]
    kern = functools.partial(mpconv_agg_kernel, apply_relu=apply_relu,
                             resident_h=resident_h, tk=tk)
    h_bytes = n * c * 2 if resident_h else 2 * (n // tm) * n * c
    return pl.pallas_call(
        kern,
        out_shape=jax.ShapeDtypeStruct((n, c), jnp.float32),
        grid_spec=pltpu.PrefetchScalarGridSpec(
            num_scalar_prefetch=0,
            grid=(n // tm, n // tk),
            in_specs=[pl.BlockSpec((tm, tk), lambda i, k: (i, k)),
                      _h_spec(resident_h, n, tk, c),
                      pl.BlockSpec((tm, c), lambda i, k: (i, 0)),
                      pl.BlockSpec((c, c), lambda i, k: (0, 0))],
            out_specs=pl.BlockSpec((tm, c), lambda i, k: (i, 0)),
            scratch_shapes=[pltpu.VMEM((tm, c), jnp.float32)]),
        compiler_params=pltpu.CompilerParams(
            dimension_semantics=("parallel", "arbitrary"),
            vmem_limit_bytes=vmem_limit),
        cost_estimate=pl.CostEstimate(
            flops=2 * n * n * c + 2 * n * c * c,
            transcendentals=0,
            bytes_accessed=n * n + h_bytes + 12 * n * c),
    )(adj, h, base, w2t)
    # TODO(synk): skip all-zero off-diagonal adjacency tiles of the batched
    # block-diagonal graph via scalar-prefetched per-row-tile k-tile lists.


def mpconv_last_pool(adj, h, base, w2t, pool, tm, tk, resident_h, vmem_limit):
    n = adj.shape[0]
    c = h.shape[1]
    g_pad = pool.shape[0]
    nt = n // tm
    kern = functools.partial(mpconv_last_pool_kernel, resident_h=resident_h,
                             tk=tk)
    h_bytes = n * c * 2 if resident_h else 2 * nt * n * c
    return pl.pallas_call(
        kern,
        out_shape=jax.ShapeDtypeStruct((nt, g_pad, c), jnp.float32),
        grid_spec=pltpu.PrefetchScalarGridSpec(
            num_scalar_prefetch=0,
            grid=(nt, n // tk),
            in_specs=[pl.BlockSpec((tm, tk), lambda i, k: (i, k)),
                      _h_spec(resident_h, n, tk, c),
                      pl.BlockSpec((tm, c), lambda i, k: (i, 0)),
                      pl.BlockSpec((c, c), lambda i, k: (0, 0)),
                      pl.BlockSpec((g_pad, tm), lambda i, k: (0, i))],
            out_specs=pl.BlockSpec((1, g_pad, c), lambda i, k: (i, 0, 0)),
            scratch_shapes=[pltpu.VMEM((tm, c), jnp.float32)]),
        compiler_params=pltpu.CompilerParams(
            dimension_semantics=("parallel", "arbitrary"),
            vmem_limit_bytes=vmem_limit),
        cost_estimate=pl.CostEstimate(
            flops=2 * n * n * c + 2 * n * c * c + 2 * g_pad * n * c,
            transcendentals=0,
            bytes_accessed=n * n + h_bytes + 8 * n * c + 4 * g_pad * n),
    )(adj, h, base, w2t, pool)


def pool_finalize(partials, num_classes, vmem_limit):
    nt, g_pad, c = partials.shape
    kern = functools.partial(pool_finalize_kernel, num_classes=num_classes)
    return pl.pallas_call(
        kern,
        out_shape=jax.ShapeDtypeStruct((g_pad, c), jnp.float32),
        grid_spec=pltpu.PrefetchScalarGridSpec(
            num_scalar_prefetch=0,
            grid=(1,),
            in_specs=[pl.BlockSpec((nt, g_pad, c), lambda i: (0, 0, 0))],
            out_specs=pl.BlockSpec((g_pad, c), lambda i: (0, 0))),
        compiler_params=pltpu.CompilerParams(
            dimension_semantics=("arbitrary",),
            vmem_limit_bytes=vmem_limit),
    )(partials)


# ---------------------------------------------------------------------------
# Graph preprocessing (gcn_norm semantics), built on device with jnp scatters
# ---------------------------------------------------------------------------
def build_graph_tensors(edge_index, edge_attr, num_nodes, n_pad, batch, g_pad):
    row = jnp.asarray(edge_index[0], jnp.int32)
    col = jnp.asarray(edge_index[1], jnp.int32)
    ea = jnp.abs(jnp.asarray(edge_attr, jnp.float32))     # edge_attr[ea<0] = -ea
    keep = row != col                                      # remove self loops
    keep_f = keep.astype(jnp.float32)
    nodes = jnp.arange(num_nodes, dtype=jnp.int32)

    # deg = scatter_add(edge_attr, col) incl. added self loops (fill=1.0)
    deg = (jnp.zeros((n_pad,), jnp.float32)
           .at[col].add(ea * keep_f).at[nodes].add(1.0))
    dis = jnp.where(deg > 0.0, deg ** -0.5, 0.0)
    w = dis[row] * ea * dis[col] * keep_f                  # normalized weights

    # int8 adjacency built directly (no dense f32 n^2 transient); values are
    # small exact integer multiplicities -> exact in bf16 after in-kernel cast.
    # TODO(synk): verify per-(target,source) multiplicity <= 127 (int8) for
    # pathological multigraphs; fall back to bf16 storage otherwise.
    adj = (jnp.zeros((n_pad, n_pad), jnp.int8)
           .at[col, row].add(keep.astype(jnp.int8))
           .at[nodes, nodes].add(jnp.int8(1)))
    d = jnp.sum(adj, axis=1, dtype=jnp.float32).reshape(-1, 1)   # msgs / target
    s = (jnp.zeros((n_pad,), jnp.float32)
         .at[col].add(w)
         .at[nodes].add(dis[nodes] * dis[nodes])).reshape(-1, 1)

    pool = (jnp.zeros((g_pad, n_pad), jnp.float32)
            .at[jnp.asarray(batch, jnp.int32), nodes].set(1.0))
    return adj, d, s, pool


# ---------------------------------------------------------------------------
# Deterministic parameter init (matches MPConv.__init__ shapes), lane-padded
# ---------------------------------------------------------------------------
def init_mpconv_params(key, in_channels, out_channels, out_pad=None):
    out_pad = out_channels if out_pad is None else out_pad
    k1, k2, k3 = jax.random.split(key, 3)
    lim_w = math.sqrt(6.0 / (in_channels + out_channels))       # glorot
    w = jax.random.uniform(k1, (in_channels, out_channels), jnp.float32,
                           minval=-lim_w, maxval=lim_w)
    fan_in = out_channels * 2 + 1                                # nn.Linear init
    bound = 1.0 / math.sqrt(fan_in)
    lin_w = jax.random.uniform(k2, (out_channels, fan_in), jnp.float32,
                               minval=-bound, maxval=bound)
    lin_b = jax.random.uniform(k3, (out_channels,), jnp.float32,
                               minval=-bound, maxval=bound)
    bias = jnp.zeros((out_channels,), jnp.float32)               # zeros(self.bias)

    w1 = lin_w[:, :out_channels]                  # x_i (self) part
    w2 = lin_w[:, out_channels:2 * out_channels]  # x_j (neighbor) part
    w3 = lin_w[:, 2 * out_channels]               # edge-weight part
    w_self = w @ w1.T                             # fold: (x@W)@W1^T == x@(W@W1^T)

    pad = out_pad - out_channels

    def pad_cols(a):
        return jnp.pad(a, ((0, 0), (0, pad)))

    w_p = pad_cols(w)
    wself_p = pad_cols(w_self)
    return {
        "w": w_p,
        "wself": wself_p,
        "wcat": jnp.concatenate([w_p, wself_p], axis=1),   # single wide matmul
        "w2t": jnp.pad(w2.T, ((0, pad), (0, pad))),
        "w3": pad_cols(w3.reshape(1, out_channels)),
        "blin": pad_cols(lin_b.reshape(1, out_channels)),
        "bias": pad_cols(bias.reshape(1, out_channels)),
        "out_channels": out_channels,
    }


# ---------------------------------------------------------------------------
# IBGConv forward
# ---------------------------------------------------------------------------
def ibgconv_forward(x, edge_index, edge_attr, edge_flag, batch, params_list,
                    num_graphs, num_classes):
    # TODO(synk): edge_flag is threaded through gcn_norm in the reference but never
    # affects the message computation on this forward path; it is ignored here.
    del edge_flag
    num_nodes = x.shape[0]
    g_pad = _round_up(max(num_graphs, 8), 8)
    budget = _vmem_budget()
    # pad n to a multiple of the tile unit so tk never collapses to tiny tiles
    n_pad = _round_up(num_nodes, 1024)
    tm, tk, resident_h = _plan_tiles(n_pad, g_pad, budget)

    adj, d, s, pool = build_graph_tensors(edge_index, edge_attr, num_nodes,
                                          n_pad, batch, g_pad)
    z = jnp.zeros((n_pad, x.shape[1]), jnp.float32).at[:num_nodes].set(
        jnp.asarray(x, jnp.float32))

    g = None
    for idx, params in enumerate(params_list):
        h, base = mpconv_prologue(z, d, s, params, tm, budget)
        if idx != len(params_list) - 1:
            z = mpconv_aggregate(adj, h, base, params["w2t"], tm, tk,
                                 resident_h, budget, apply_relu=True)
            # TODO(synk): F.dropout is identity here (eval semantics / training=False)
        else:
            partials = mpconv_last_pool(adj, h, base, params["w2t"], pool,
                                        tm, tk, resident_h, budget)
            g = pool_finalize(partials, num_classes, budget)
    return g[:num_graphs, :num_classes]


# ---------------------------------------------------------------------------
# Pure-JAX f32 reference (for correctness check at small scale)
# ---------------------------------------------------------------------------
def ibgconv_reference(x, edge_index, edge_attr, batch, params_list, num_graphs):
    n = x.shape[0]
    row = jnp.asarray(edge_index[0], jnp.int32)
    col = jnp.asarray(edge_index[1], jnp.int32)
    ea = jnp.abs(jnp.asarray(edge_attr, jnp.float32))
    keep = (row != col).astype(jnp.float32)
    nodes = jnp.arange(n)
    deg = jnp.zeros((n,)).at[col].add(ea * keep).at[nodes].add(1.0)
    dis = jnp.where(deg > 0, deg ** -0.5, 0.0)
    w = dis[row] * ea * dis[col] * keep
    adj = jnp.zeros((n, n)).at[col, row].add(keep).at[nodes, nodes].add(1.0)
    d = adj.sum(1, keepdims=True)
    s = (jnp.zeros((n,)).at[col].add(w).at[nodes].add(dis * dis)).reshape(-1, 1)
    pool = jnp.zeros((num_graphs, n)).at[jnp.asarray(batch, jnp.int32),
                                         nodes].set(1.0)
    z = jnp.asarray(x, jnp.float32)
    g = None
    for idx, p in enumerate(params_list):
        c = p["out_channels"]
        h = z @ p["w"][:, :c]
        base = (d * (z @ p["wself"][:, :c] + p["blin"][:, :c])
                + s * p["w3"][:, :c] + p["bias"][:, :c])
        out = base + (adj @ h) @ p["w2t"][:c, :c]
        if idx != len(params_list) - 1:
            z = jnp.maximum(out, 0.0)
        else:
            g = pool @ out
    return jax.nn.log_softmax(g, axis=-1)


# ---------------------------------------------------------------------------
if __name__ == "__main__":
    key = jax.random.PRNGKey(0)
    k_x, k_ei, k_ea, k_p0, k_p1 = jax.random.split(key, 5)

    input_dim = 16
    num_classes = 4
    num_graphs = 2
    nodes_per_graph = 8
    num_nodes = num_graphs * nodes_per_graph
    edges_per_graph = 20

    # node features
    x = jax.random.normal(k_x, (num_nodes, input_dim), jnp.float32)

    # random edges, kept within each graph
    ei_np = np.asarray(
        jax.random.randint(k_ei, (num_graphs, 2, edges_per_graph), 0,
                           nodes_per_graph))
    edge_index = np.concatenate(
        [ei_np[g] + g * nodes_per_graph for g in range(num_graphs)], axis=1
    ).astype(np.int32)                                  # [2, E]
    edge_attr = np.asarray(
        jax.random.normal(k_ea, (edge_index.shape[1],), jnp.float32))
    edge_flag = np.ones((edge_index.shape[1],), dtype=bool)
    batch = np.repeat(np.arange(num_graphs), nodes_per_graph).astype(np.int32)

    # parameters for the two MPConv layers: input_dim->128, 128->num_classes
    # (last layer lane-padded to 128 output channels, sliced back after pooling)
    params_list = [
        init_mpconv_params(k_p0, input_dim, HIDDEN_DIM, out_pad=HIDDEN_DIM),
        init_mpconv_params(k_p1, HIDDEN_DIM, num_classes, out_pad=LANE),
    ]

    out = ibgconv_forward(x, edge_index, edge_attr, edge_flag, batch,
                          params_list, num_graphs, num_classes)
    out = jax.block_until_ready(out)
    out_np = np.asarray(out)

    ref = np.asarray(ibgconv_reference(x, edge_index, edge_attr, batch,
                                       params_list, num_graphs))

    assert out_np.shape == (num_graphs, num_classes)
    assert np.allclose(np.exp(out_np).sum(axis=-1), 1.0, atol=1e-4)
    # relaxed tolerance: kernel uses int8->bf16 adjacency + bf16-rounded h
    # (intentional precision trade; adjacency counts themselves are exact)
    assert np.allclose(out_np, ref, atol=1e-1, rtol=1e-1)
    print("KERNEL_OK")
</pallas_src>

<mosaic_0001>
module attributes {stable_mosaic.version = 11 : i64} {
  func.func @mpconv_prologue_kernel(%arg0: i32, %arg1: memref<1024x16xf32, #tpu.memory_space<vmem>>, %arg2: memref<1024x1xf32, #tpu.memory_space<vmem>>, %arg3: memref<1024x1xf32, #tpu.memory_space<vmem>>, %arg4: memref<16x256xf32, #tpu.memory_space<vmem>>, %arg5: memref<1x128xf32, #tpu.memory_space<vmem>>, %arg6: memref<1x128xf32, #tpu.memory_space<vmem>>, %arg7: memref<1x128xf32, #tpu.memory_space<vmem>>, %arg8: memref<1024x128xbf16, #tpu.memory_space<vmem>>, %arg9: memref<1024x128xf32, #tpu.memory_space<vmem>>) attributes {dimension_semantics = [#tpu.dimension_semantics<parallel>], iteration_bounds = array<i64: 1>, scalar_prefetch = 0 : i64, scratch_operands = 0 : i64, tpu.core_type = #tpu.core_type<tc>, window_params = [{transform_indices = @transform_0, window_bounds = array<i64: 1024, 16>}, {transform_indices = @transform_1, window_bounds = array<i64: 1024, 1>}, {transform_indices = @transform_2, window_bounds = array<i64: 1024, 1>}, {pipeline_mode = #tpu.pipeline_mode<synchronous>, transform_indices = @transform_3, window_bounds = array<i64: 16, 256>}, {pipeline_mode = #tpu.pipeline_mode<synchronous>, transform_indices = @transform_4, window_bounds = array<i64: 1, 128>}, {pipeline_mode = #tpu.pipeline_mode<synchronous>, transform_indices = @transform_5, window_bounds = array<i64: 1, 128>}, {pipeline_mode = #tpu.pipeline_mode<synchronous>, transform_indices = @transform_6, window_bounds = array<i64: 1, 128>}, {transform_indices = @transform_7, window_bounds = array<i64: 1024, 128>}, {transform_indices = @transform_8, window_bounds = array<i64: 1024, 128>}]} {
    %c0 = arith.constant 0 : index
    %c0_0 = arith.constant 0 : index
    %0 = vector.load %arg1[%c0, %c0_0] : memref<1024x16xf32, #tpu.memory_space<vmem>>, vector<1024x16xf32>
    %c0_1 = arith.constant 0 : index
    %c0_2 = arith.constant 0 : index
    %1 = vector.load %arg4[%c0_1, %c0_2] : memref<16x256xf32, #tpu.memory_space<vmem>>, vector<16x256xf32>
    %cst = arith.constant dense<0.000000e+00> : vector<1024x256xf32>
    %2 = tpu.matmul %0, %1, %cst {dimension_numbers = #tpu.dot_dimension_numbers<[1], [0], [0], [1], [0, 0, 1, 1], [], []>} : vector<1024x16xf32>, vector<16x256xf32>, vector<1024x256xf32> -> vector<1024x256xf32>
    %3 = vector.extract_strided_slice %2 {offsets = [0, 0], sizes = [1024, 128], strides = [1, 1]} : vector<1024x256xf32> to vector<1024x128xf32>
    %4 = vector.extract_strided_slice %2 {offsets = [0, 128], sizes = [1024, 128], strides = [1, 1]} : vector<1024x256xf32> to vector<1024x128xf32>
    %5 = arith.truncf %3 : vector<1024x128xf32> to vector<1024x128xbf16>
    %c0_3 = arith.constant 0 : index
    %c0_4 = arith.constant 0 : index
    %6 = vector.load %arg8[%c0_3, %c0_4] : memref<1024x128xbf16, #tpu.memory_space<vmem>>, vector<1024x128xbf16>
    tpu.vector_store %arg8[%c0_3, %c0_4], %5 {strides = array<i32>} : memref<1024x128xbf16, #tpu.memory_space<vmem>>, vector<1024x128xbf16>,
    %c0_5 = arith.constant 0 : index
    %c0_6 = arith.constant 0 : index
    %7 = vector.load %arg2[%c0_5, %c0_6] : memref<1024x1xf32, #tpu.memory_space<vmem>>, vector<1024x1xf32>
    %c0_7 = arith.constant 0 : index
    %c0_8 = arith.constant 0 : index
    %8 = vector.load %arg5[%c0_7, %c0_8] : memref<1x128xf32, #tpu.memory_space<vmem>>, vector<1x128xf32>
    %9 = vector.broadcast %8 : vector<1x128xf32> to vector<1024x128xf32>
    %10 = arith.addf %4, %9 : vector<1024x128xf32>
    %11 = vector.broadcast %7 : vector<1024x1xf32> to vector<1024x128xf32>
    %12 = arith.mulf %11, %10 : vector<1024x128xf32>
    %c0_9 = arith.constant 0 : index
    %c0_10 = arith.constant 0 : index
    %13 = vector.load %arg3[%c0_9, %c0_10] : memref<1024x1xf32, #tpu.memory_space<vmem>>, vector<1024x1xf32>
    %c0_11 = arith.constant 0 : index
    %c0_12 = arith.constant 0 : index
    %14 = vector.load %arg6[%c0_11, %c0_12] : memref<1x128xf32, #tpu.memory_space<vmem>>, vector<1x128xf32>
    %15 = vector.broadcast %13 : vector<1024x1xf32> to vector<1024x128xf32>
    %16 = vector.broadcast %14 : vector<1x128xf32> to vector<1024x128xf32>
    %17 = arith.mulf %15, %16 : vector<1024x128xf32>
    %18 = arith.addf %12, %17 : vector<1024x128xf32>
    %c0_13 = arith.constant 0 : index
    %c0_14 = arith.constant 0 : index
    %19 = vector.load %arg7[%c0_13, %c0_14] : memref<1x128xf32, #tpu.memory_space<vmem>>, vector<1x128xf32>
    %20 = vector.broadcast %19 : vector<1x128xf32> to vector<1024x128xf32>
    %21 = arith.addf %18, %20 : vector<1024x128xf32>
    %c0_15 = arith.constant 0 : index
    %c0_16 = arith.constant 0 : index
    %22 = vector.load %arg9[%c0_15, %c0_16] : memref<1024x128xf32, #tpu.memory_space<vmem>>, vector<1024x128xf32>
    tpu.vector_store %arg9[%c0_15, %c0_16], %21 {strides = array<i32>} : memref<1024x128xf32, #tpu.memory_space<vmem>>, vector<1024x128xf32>,
    return
  }
  func.func @transform_0(%arg0: i32) -> (i32, i32) {
    %c0_i32 = arith.constant 0 : i32
    %c0_i32_0 = arith.constant 0 : i32
    return %arg0, %c0_i32 : i32, i32
  }
  func.func @transform_1(%arg0: i32) -> (i32, i32) {
    %c0_i32 = arith.constant 0 : i32
    %c0_i32_0 = arith.constant 0 : i32
    return %arg0, %c0_i32 : i32, i32
  }
  func.func @transform_2(%arg0: i32) -> (i32, i32) {
    %c0_i32 = arith.constant 0 : i32
    %c0_i32_0 = arith.constant 0 : i32
    return %arg0, %c0_i32 : i32, i32
  }
  func.func @transform_3(%arg0: i32) -> (i32, i32) {
    %c0_i32 = arith.constant 0 : i32
    %c0_i32_0 = arith.constant 0 : i32
    %c0_i32_1 = arith.constant 0 : i32
    return %c0_i32, %c0_i32_0 : i32, i32
  }
  func.func @transform_4(%arg0: i32) -> (i32, i32) {
    %c0_i32 = arith.constant 0 : i32
    %c0_i32_0 = arith.constant 0 : i32
    %c0_i32_1 = arith.constant 0 : i32
    return %c0_i32, %c0_i32_0 : i32, i32
  }
  func.func @transform_5(%arg0: i32) -> (i32, i32) {
    %c0_i32 = arith.constant 0 : i32
    %c0_i32_0 = arith.constant 0 : i32
    %c0_i32_1 = arith.constant 0 : i32
    return %c0_i32, %c0_i32_0 : i32, i32
  }
  func.func @transform_6(%arg0: i32) -> (i32, i32) {
    %c0_i32 = arith.constant 0 : i32
    %c0_i32_0 = arith.constant 0 : i32
    %c0_i32_1 = arith.constant 0 : i32
    return %c0_i32, %c0_i32_0 : i32, i32
  }
  func.func @transform_7(%arg0: i32) -> (i32, i32) {
    %c0_i32 = arith.constant 0 : i32
    %c0_i32_0 = arith.constant 0 : i32
    return %arg0, %c0_i32 : i32, i32
  }
  func.func @transform_8(%arg0: i32) -> (i32, i32) {
    %c0_i32 = arith.constant 0 : i32
    %c0_i32_0 = arith.constant 0 : i32
    return %arg0, %c0_i32 : i32, i32
  }
}

</mosaic_0001>

<llo_original>
// kernel: tpu_custom_call.1
$region0: #{tpu_custom_call.1}
  #allocation0 [shape = 'u32[]', space=smem, size = 0x4, offset = 0x4, fixed_abs, tag = 'smem constant byte address 0x4 - core index']
  #allocation1 [shape = 'u32[144,128]{1,0:T(1,128)}', space=vmem, size = 0x12000, scoped, tag = 'internal scratch']
  %s0 = inlined_call_operand.vmem [shape: f32[1024,16], index: 0, kind: input, shape index: {}]
  %s1 = inlined_call_operand.vmem [shape: f32[1024,1], index: 1, kind: input, shape index: {}]
  %s2 = inlined_call_operand.vmem [shape: f32[1024,1], index: 2, kind: input, shape index: {}]
  %s3 = inlined_call_operand.vmem [shape: f32[16,256], index: 3, kind: input, shape index: {}]
  %s4 = inlined_call_operand.vmem [shape: f32[1,128], index: 4, kind: input, shape index: {}]
  %s5 = inlined_call_operand.vmem [shape: f32[1,128], index: 5, kind: input, shape index: {}]
  %s6 = inlined_call_operand.vmem [shape: f32[1,128], index: 6, kind: input, shape index: {}]
  %s7 = inlined_call_operand.hbm [shape: bf16[1024,128], index: 7, kind: output, shape index: {0}]
  %s8 = inlined_call_operand.hbm [shape: f32[1024,128], index: 8, kind: output, shape index: {1}]
  %9 = xla_tuple %s7, %s8
  %s10 = sld [smem:[#allocation0]]
  $region46: #{tpu_custom_call.1} parent=0
    _
  %s12 = ssub.s32 1, %s10
  %s13 = scalar_select 0, %s12, %s10
  $region1: #{tpu_custom_call.1} parent=0
    #allocation2 [shape = 'u8[262144]{0}', space=vmem, size = 0x40000, scoped, tag = 'output window, operand 0, single buffered']
    #allocation3 [shape = 's32[1]{0}', space=sflag, size = 0x4, scoped, tag = 'scoped memory for tpu_custom_call.1']
    #allocation4 [shape = 'u8[524288]{0}', space=vmem, size = 0x80000, scoped, tag = 'output window, operand 1, single buffered']
    #allocation5 [shape = 's32[1]{0}', space=sflag, size = 0x4, scoped, tag = 'scoped memory for tpu_custom_call.1']
    %14 = vsyncpa [#allocation3], 0
    %15 = vsyncpa [#allocation5], 0
    // Predicated region
    $region2: #{tpu_custom_call.1} parent=1 // pred_check
      _
    $region3: #{tpu_custom_call.1} parent=1 // pred_check_branch
      %17 = sbr.rel (0) target = $region5
    $region4: #{tpu_custom_call.1} parent=1 // pred_region
      _
    $region5: #{tpu_custom_call.1} parent=1 // pred_fallthru
      _
    // Predicated region
    $region6: #{tpu_custom_call.1} parent=1 // pred_check
      _
    $region7: #{tpu_custom_call.1} parent=1 // pred_check_branch
      %19 = sbr.rel (0) target = $region9
    $region8: #{tpu_custom_call.1} parent=1 // pred_region
      _
    $region9: #{tpu_custom_call.1} parent=1 // pred_fallthru
      _
    // Predicated region
    $region10: #{tpu_custom_call.1} parent=1 // pred_check
      _
    $region11: #{tpu_custom_call.1} parent=1 // pred_check_branch
      %21 = sbr.rel (0) target = $region13
    $region12: #{tpu_custom_call.1} parent=1 // pred_region
      _
    $region13: #{tpu_custom_call.1} parent=1 // pred_fallthru
      _
    // Predicated region
    $region14: #{tpu_custom_call.1} parent=1 // pred_check
      _
    $region15: #{tpu_custom_call.1} parent=1 // pred_check_branch
      %23 = sbr.rel (0) target = $region17
    $region16: #{tpu_custom_call.1} parent=1 // pred_region
      _
    $region17: #{tpu_custom_call.1} parent=1 // pred_fallthru
      _
    // Predicated region
    $region18: #{tpu_custom_call.1} parent=1 // pred_check
      _
    $region19: #{tpu_custom_call.1} parent=1 // pred_check_branch
      %25 = sbr.rel (0) target = $region21
    $region20: #{tpu_custom_call.1} parent=1 // pred_region
      _
    $region21: #{tpu_custom_call.1} parent=1 // pred_fallthru
      _
    // Predicated region
    $region22: #{tpu_custom_call.1} parent=1 // pred_check
      _
    $region23: #{tpu_custom_call.1} parent=1 // pred_check_branch
      %27 = sbr.rel (0) target = $region25
    $region24: #{tpu_custom_call.1} parent=1 // pred_region
      _
    $region25: #{tpu_custom_call.1} parent=1 // pred_fallthru
      _
    // Predicated region
    $region26: #{tpu_custom_call.1} parent=1 // pred_check
      _
    $region27: #{tpu_custom_call.1} parent=1 // pred_check_branch
      %29 = sbr.rel (0) target = $region29
    $region28: #{tpu_custom_call.1} parent=1 // pred_region
      _
    $region29: #{tpu_custom_call.1} parent=1 // pred_fallthru
      _
    %v30 = vld [vmem:[%s0] sm:$0xff]
    %v31 = vld [vmem:[%s0 + $0x8] sm:$0xff]
    %v32 = vld [vmem:[%s0 + $0x10] sm:$0xff]
    %v33 = vld [vmem:[%s0 + $0x18] sm:$0xff]
    %v34 = vld [vmem:[%s0 + $0x20] sm:$0xff]
    %v35 = vld [vmem:[%s0 + $0x28] sm:$0xff]
    %v36 = vld [vmem:[%s0 + $0x30] sm:$0xff]
    %v37 = vld [vmem:[%s0 + $0x38] sm:$0xff]
    %v38 = vld [vmem:[%s0 + $0x40] sm:$0xff]
    %v39 = vld [vmem:[%s0 + $0x48] sm:$0xff]
    %v40 = vld [vmem:[%s0 + $0x50] sm:$0xff]
    %v41 = vld [vmem:[%s0 + $0x58] sm:$0xff]
    %v42 = vld [vmem:[%s0 + $0x60] sm:$0xff]
    %v43 = vld [vmem:[%s0 + $0x68] sm:$0xff]
    %v44 = vld [vmem:[%s0 + $0x70] sm:$0xff]
    %v45 = vld [vmem:[%s0 + $0x78] sm:$0xff]
    %v46 = vld [vmem:[%s0 + $0x80] sm:$0xff]
    %v47 = vld [vmem:[%s0 + $0x88] sm:$0xff]
    %v48 = vld [vmem:[%s0 + $0x90] sm:$0xff]
    %v49 = vld [vmem:[%s0 + $0x98] sm:$0xff]
    %v50 = vld [vmem:[%s0 + $0xa0] sm:$0xff]
    %v51 = vld [vmem:[%s0 + $0xa8] sm:$0xff]
    %v52 = vld [vmem:[%s0 + $0xb0] sm:$0xff]
    %v53 = vld [vmem:[%s0 + $0xb8] sm:$0xff]
    %v54 = vld [vmem:[%s0 + $0xc0] sm:$0xff]
    %v55 = vld [vmem:[%s0 + $0xc8] sm:$0xff]
    %v56 = vld [vmem:[%s0 + $0xd0] sm:$0xff]
    %v57 = vld [vmem:[%s0 + $0xd8] sm:$0xff]
    %v58 = vld [vmem:[%s0 + $0xe0] sm:$0xff]
    %v59 = vld [vmem:[%s0 + $0xe8] sm:$0xff]
    %v60 = vld [vmem:[%s0 + $0xf0] sm:$0xff]
    %v61 = vld [vmem:[%s0 + $0xf8] sm:$0xff]
    %v62 = vld [vmem:[%s0 + $0x100] sm:$0xff]
    %v63 = vld [vmem:[%s0 + $0x108] sm:$0xff]
    %v64 = vld [vmem:[%s0 + $0x110] sm:$0xff]
    %v65 = vld [vmem:[%s0 + $0x118] sm:$0xff]
    %v66 = vld [vmem:[%s0 + $0x120] sm:$0xff]
    %v67 = vld [vmem:[%s0 + $0x128] sm:$0xff]
    %v68 = vld [vmem:[%s0 + $0x130] sm:$0xff]
    %v69 = vld [vmem:[%s0 + $0x138] sm:$0xff]
    %v70 = vld [vmem:[%s0 + $0x140] sm:$0xff]
    %v71 = vld [vmem:[%s0 + $0x148] sm:$0xff]
    %v72 = vld [vmem:[%s0 + $0x150] sm:$0xff]
    %v73 = vld [vmem:[%s0 + $0x158] sm:$0xff]
    %v74 = vld [vmem:[%s0 + $0x160] sm:$0xff]
    %v75 = vld [vmem:[%s0 + $0x168] sm:$0xff]
    %v76 = vld [vmem:[%s0 + $0x170] sm:$0xff]
    %v77 = vld [vmem:[%s0 + $0x178] sm:$0xff]
    %v78 = vld [vmem:[%s0 + $0x180] sm:$0xff]
    %v79 = vld [vmem:[%s0 + $0x188] sm:$0xff]
    %v80 = vld [vmem:[%s0 + $0x190] sm:$0xff]
    %v81 = vld [vmem:[%s0 + $0x198] sm:$0xff]
    %v82 = vld [vmem:[%s0 + $0x1a0] sm:$0xff]
    %v83 = vld [vmem:[%s0 + $0x1a8] sm:$0xff]
    %v84 = vld [vmem:[%s0 + $0x1b0] sm:$0xff]
    %v85 = vld [vmem:[%s0 + $0x1b8] sm:$0xff]
    %v86 = vld [vmem:[%s0 + $0x1c0] sm:$0xff]
    %v87 = vld [vmem:[%s0 + $0x1c8] sm:$0xff]
    %v88 = vld [vmem:[%s0 + $0x1d0] sm:$0xff]
    %v89 = vld [vmem:[%s0 + $0x1d8] sm:$0xff]
    %v90 = vld [vmem:[%s0 + $0x1e0] sm:$0xff]
    %v91 = vld [vmem:[%s0 + $0x1e8] sm:$0xff]
    %v92 = vld [vmem:[%s0 + $0x1f0] sm:$0xff]
    %v93 = vld [vmem:[%s0 + $0x1f8] sm:$0xff]
    %v94 = vld [vmem:[%s0 + $0x200] sm:$0xff]
    %v95 = vld [vmem:[%s0 + $0x208] sm:$0xff]
    %v96 = vld [vmem:[%s0 + $0x210] sm:$0xff]
    %v97 = vld [vmem:[%s0 + $0x218] sm:$0xff]
    %v98 = vld [vmem:[%s0 + $0x220] sm:$0xff]
    %v99 = vld [vmem:[%s0 + $0x228] sm:$0xff]
    %v100 = vld [vmem:[%s0 + $0x230] sm:$0xff]
    %v101 = vld [vmem:[%s0 + $0x238] sm:$0xff]
    %v102 = vld [vmem:[%s0 + $0x240] sm:$0xff]
    %v103 = vld [vmem:[%s0 + $0x248] sm:$0xff]
    %v104 = vld [vmem:[%s0 + $0x250] sm:$0xff]
    %v105 = vld [vmem:[%s0 + $0x258] sm:$0xff]
    %v106 = vld [vmem:[%s0 + $0x260] sm:$0xff]
    %v107 = vld [vmem:[%s0 + $0x268] sm:$0xff]
    %v108 = vld [vmem:[%s0 + $0x270] sm:$0xff]
    %v109 = vld [vmem:[%s0 + $0x278] sm:$0xff]
    %v110 = vld [vmem:[%s0 + $0x280] sm:$0xff]
    %v111 = vld [vmem:[%s0 + $0x288] sm:$0xff]
    %v112 = vld [vmem:[%s0 + $0x290] sm:$0xff]
    %v113 = vld [vmem:[%s0 + $0x298] sm:$0xff]
    %v114 = vld [vmem:[%s0 + $0x2a0] sm:$0xff]
    %v115 = vld [vmem:[%s0 + $0x2a8] sm:$0xff]
    %v116 = vld [vmem:[%s0 + $0x2b0] sm:$0xff]
    %v117 = vld [vmem:[%s0 + $0x2b8] sm:$0xff]
    %v118 = vld [vmem:[%s0 + $0x2c0] sm:$0xff]
    %v119 = vld [vmem:[%s0 + $0x2c8] sm:$0xff]
    %v120 = vld [vmem:[%s0 + $0x2d0] sm:$0xff]
    %v121 = vld [vmem:[%s0 + $0x2d8] sm:$0xff]
    %v122 = vld [vmem:[%s0 + $0x2e0] sm:$0xff]
    %v123 = vld [vmem:[%s0 + $0x2e8] sm:$0xff]
    %v124 = vld [vmem:[%s0 + $0x2f0] sm:$0xff]
    %v125 = vld [vmem:[%s0 + $0x2f8] sm:$0xff]
    %v126 = vld [vmem:[%s0 + $0x300] sm:$0xff]
    %v127 = vld [vmem:[%s0 + $0x308] sm:$0xff]
    %v128 = vld [vmem:[%s0 + $0x310] sm:$0xff]
    %v129 = vld [vmem:[%s0 + $0x318] sm:$0xff]
    %v130 = vld [vmem:[%s0 + $0x320] sm:$0xff]
    %v131 = vld [vmem:[%s0 + $0x328] sm:$0xff]
    %v132 = vld [vmem:[%s0 + $0x330] sm:$0xff]
    %v133 = vld [vmem:[%s0 + $0x338] sm:$0xff]
    %v134 = vld [vmem:[%s0 + $0x340] sm:$0xff]
    %v135 = vld [vmem:[%s0 + $0x348] sm:$0xff]
    %v136 = vld [vmem:[%s0 + $0x350] sm:$0xff]
    %v137 = vld [vmem:[%s0 + $0x358] sm:$0xff]
    %v138 = vld [vmem:[%s0 + $0x360] sm:$0xff]
    %v139 = vld [vmem:[%s0 + $0x368] sm:$0xff]
    %v140 = vld [vmem:[%s0 + $0x370] sm:$0xff]
    %v141 = vld [vmem:[%s0 + $0x378] sm:$0xff]
    %v142 = vld [vmem:[%s0 + $0x380] sm:$0xff]
    %v143 = vld [vmem:[%s0 + $0x388] sm:$0xff]
    %v144 = vld [vmem:[%s0 + $0x390] sm:$0xff]
    %v145 = vld [vmem:[%s0 + $0x398] sm:$0xff]
    %v146 = vld [vmem:[%s0 + $0x3a0] sm:$0xff]
    %v147 = vld [vmem:[%s0 + $0x3a8] sm:$0xff]
    %v148 = vld [vmem:[%s0 + $0x3b0] sm:$0xff]
    %v149 = vld [vmem:[%s0 + $0x3b8] sm:$0xff]
    %v150 = vld [vmem:[%s0 + $0x3c0] sm:$0xff]
    %v151 = vld [vmem:[%s0 + $0x3c8] sm:$0xff]
    %v152 = vld [vmem:[%s0 + $0x3d0] sm:$0xff]
    %v153 = vld [vmem:[%s0 + $0x3d8] sm:$0xff]
    %v154 = vld [vmem:[%s0 + $0x3e0] sm:$0xff]
    %v155 = vld [vmem:[%s0 + $0x3e8] sm:$0xff]
    %v156 = vld [vmem:[%s0 + $0x3f0] sm:$0xff]
    %v157 = vld [vmem:[%s0 + $0x3f8] sm:$0xff]
    %v158 = vld [vmem:[%s3] sm:$0xff]
    %v159 = vld [vmem:[%s3 + $0x8] sm:$0xff]
    %v160 = vld [vmem:[%s3 + $0x10] sm:$0xff]
    %v161 = vld [vmem:[%s3 + $0x18] sm:$0xff]
    %vm162 = vcmask 130048
    %v164 = vsel %vm162, %v30, 0
    %v167 = vsel %vm162, %v31, 0
    %v170 = vsel %vm162, %v32, 0
    %v173 = vsel %vm162, %v33, 0
    %v176 = vsel %vm162, %v34, 0
    %v179 = vsel %vm162, %v35, 0
    %v182 = vsel %vm162, %v36, 0
    %v185 = vsel %vm162, %v37, 0
    %v188 = vsel %vm162, %v38, 0
    %v191 = vsel %vm162, %v39, 0
    %v194 = vsel %vm162, %v40, 0
    %v197 = vsel %vm162, %v41, 0
    %v200 = vsel %vm162, %v42, 0
    %v203 = vsel %vm162, %v43, 0
    %v206 = vsel %vm162, %v44, 0
    %v209 = vsel %vm162, %v45, 0
    %v212 = vsel %vm162, %v46, 0
    %v215 = vsel %vm162, %v47, 0
    %v218 = vsel %vm162, %v48, 0
    %v221 = vsel %vm162, %v49, 0
    %v224 = vsel %vm162, %v50, 0
    %v227 = vsel %vm162, %v51, 0
    %v230 = vsel %vm162, %v52, 0
    %v233 = vsel %vm162, %v53, 0
    %v236 = vsel %vm162, %v54, 0
    %v239 = vsel %vm162, %v55, 0
    %v242 = vsel %vm162, %v56, 0
    %v245 = vsel %vm162, %v57, 0
    %v248 = vsel %vm162, %v58, 0
    %v251 = vsel %vm162, %v59, 0
    %v254 = vsel %vm162, %v60, 0
    %v257 = vsel %vm162, %v61, 0
    %v260 = vsel %vm162, %v62, 0
    %v263 = vsel %vm162, %v63, 0
    %v266 = vsel %vm162, %v64, 0
    %v269 = vsel %vm162, %v65, 0
    %v272 = vsel %vm162, %v66, 0
    %v275 = vsel %vm162, %v67, 0
    %v278 = vsel %vm162, %v68, 0
    %v281 = vsel %vm162, %v69, 0
    %v284 = vsel %vm162, %v70, 0
    %v287 = vsel %vm162, %v71, 0
    %v290 = vsel %vm162, %v72, 0
    %v293 = vsel %vm162, %v73, 0
    %v296 = vsel %vm162, %v74, 0
    %v299 = vsel %vm162, %v75, 0
    %v302 = vsel %vm162, %v76, 0
    %v305 = vsel %vm162, %v77, 0
    %v308 = vsel %vm162, %v78, 0
    %v311 = vsel %vm162, %v79, 0
    %v314 = vsel %vm162, %v80, 0
    %v317 = vsel %vm162, %v81, 0
    %v320 = vsel %vm162, %v82, 0
    %v323 = vsel %vm162, %v83, 0
    %v326 = vsel %vm162, %v84, 0
    %v329 = vsel %vm162, %v85, 0
    %v332 = vsel %vm162, %v86, 0
    %v335 = vsel %vm162, %v87, 0
    %v338 = vsel %vm162, %v88, 0
    %v341 = vsel %vm162, %v89, 0
    %v344 = vsel %vm162, %v90, 0
    %v347 = vsel %vm162, %v91, 0
    %v350 = vsel %vm162, %v92, 0
    %v353 = vsel %vm162, %v93, 0
    %v356 = vsel %vm162, %v94, 0
    %v359 = vsel %vm162, %v95, 0
    %v362 = vsel %vm162, %v96, 0
    %v365 = vsel %vm162, %v97, 0
    %v368 = vsel %vm162, %v98, 0
    %v371 = vsel %vm162, %v99, 0
    %v374 = vsel %vm162, %v100, 0
    %v377 = vsel %vm162, %v101, 0
    %v380 = vsel %vm162, %v102, 0
    %v383 = vsel %vm162, %v103, 0
    %v386 = vsel %vm162, %v104, 0
    %v389 = vsel %vm162, %v105, 0
    %v392 = vsel %vm162, %v106, 0
    %v395 = vsel %vm162, %v107, 0
    %v398 = vsel %vm162, %v108, 0
    %v401 = vsel %vm162, %v109, 0
    %v404 = vsel %vm162, %v110, 0
    %v407 = vsel %vm162, %v111, 0
    %v410 = vsel %vm162, %v112, 0
    %v413 = vsel %vm162, %v113, 0
    %v416 = vsel %vm162, %v114, 0
    %v419 = vsel %vm162, %v115, 0
    %v422 = vsel %vm162, %v116, 0
    %v425 = vsel %vm162, %v117, 0
    %v428 = vsel %vm162, %v118, 0
    %v431 = vsel %vm162, %v119, 0
    %v434 = vsel %vm162, %v120, 0
    %v437 = vsel %vm162, %v121, 0
    %v440 = vsel %vm162, %v122, 0
    %v443 = vsel %vm162, %v123, 0
    %v446 = vsel %vm162, %v124, 0
    %v449 = vsel %vm162, %v125, 0
    %v452 = vsel %vm162, %v126, 0
    %v455 = vsel %vm162, %v127, 0
    %v458 = vsel %vm162, %v128, 0
    %v461 = vsel %vm162, %v129, 0
    %v464 = vsel %vm162, %v130, 0
    %v467 = vsel %vm162, %v131, 0
    %v470 = vsel %vm162, %v132, 0
    %v473 = vsel %vm162, %v133, 0
    %v476 = vsel %vm162, %v134, 0
    %v479 = vsel %vm162, %v135, 0
    %v482 = vsel %vm162, %v136, 0
    %v485 = vsel %vm162, %v137, 0
    %v488 = vsel %vm162, %v138, 0
    %v491 = vsel %vm162, %v139, 0
    %v494 = vsel %vm162, %v140, 0
    %v497 = vsel %vm162, %v141, 0
    %v500 = vsel %vm162, %v142, 0
    %v503 = vsel %vm162, %v143, 0
    %v506 = vsel %vm162, %v144, 0
    %v509 = vsel %vm162, %v145, 0
    %v512 = vsel %vm162, %v146, 0
    %v515 = vsel %vm162, %v147, 0
    %v518 = vsel %vm162, %v148, 0
    %v521 = vsel %vm162, %v149, 0
    %v524 = vsel %vm162, %v150, 0
    %v527 = vsel %vm162, %v151, 0
    %v530 = vsel %vm162, %v152, 0
    %v533 = vsel %vm162, %v153, 0
    %v536 = vsel %vm162, %v154, 0
    %v539 = vsel %vm162, %v155, 0
    %v542 = vsel %vm162, %v156, 0
    %v545 = vsel %vm162, %v157, 0
    %547 = vmatprep.subr.mxu0 %v159
    %548 = vmatpush1.msra.mxu0 %v158
    %549 = vmatprep.subr.mxu0 %v161
    %550 = vmatpush1.msra.mxu0 %v160
    %551 = vmatprep.subr.mxu0 0.0
    %552 = vmatpush1.msra.mxu0 0.0
    %553 = vmatprep.subr.mxu0 0.0
    %554 = vmatpush1.msra.mxu0 0.0
    %555 = vmatprep.subr.mxu0 0.0
    %556 = vmatpush1.msra.mxu0 0.0
    %557 = vmatprep.subr.mxu0 0.0
    %558 = vmatpush1.msra.mxu0 0.0
    %559 = vmatprep.subr.mxu0 0.0
    %560 = vmatpush1.msra.mxu0 0.0
    %561 = vmatprep.subr.mxu0 0.0
    %562 = vmatpush1.msra.mxu0 0.0
    %563 = vmatprep.subr.mxu0 0.0
    %564 = vmatpush1.msra.mxu0 0.0
    %565 = vmatprep.subr.mxu0 0.0
    %566 = vmatpush1.msra.mxu0 0.0
    %567 = vmatprep.subr.mxu0 0.0
    %568 = vmatpush1.msra.mxu0 0.0
    %569 = vmatprep.subr.mxu0 0.0
    %570 = vmatpush1.msra.mxu0 0.0
    %571 = vmatprep.subr.mxu0 0.0
    %572 = vmatpush1.msra.mxu0 0.0
    %573 = vmatprep.subr.mxu0 0.0
    %574 = vmatpush1.msra.mxu0 0.0
    %575 = vmatprep.subr.mxu0 0.0
    %576 = vmatpush1.msra.mxu0 0.0
    %577 = vmatprep.subr.mxu0 0.0
    %578 = vmatpush1.msra.mxu0 0.0
    %579 = vmatprep.subr.mxu0 0.0
    %580 = vmatpush1.msra.mxu0 0.0
    %581 = vmatprep.subr.mxu0 0.0
    %582 = vmatpush1.msra.mxu0 0.0
    %583 = vmatprep.subr.mxu0 0.0
    %584 = vmatpush1.msra.mxu0 0.0
    %585 = vmatprep.subr.mxu0 0.0
    %586 = vmatpush1.msra.mxu0 0.0
    %587 = vmatprep.subr.mxu0 0.0
    %588 = vmatpush1.msra.mxu0 0.0
    %589 = vmatprep.subr.mxu0 0.0
    %590 = vmatpush1.msra.mxu0 0.0
    %591 = vmatprep.subr.mxu0 0.0
    %592 = vmatpush1.msra.mxu0 0.0
    %593 = vmatprep.subr.mxu0 0.0
    %594 = vmatpush1.msra.mxu0 0.0
    %595 = vmatprep.subr.mxu0 0.0
    %596 = vmatpush1.msra.mxu0 0.0
    %597 = vmatprep.subr.mxu0 0.0
    %598 = vmatpush1.msra.mxu0 0.0
    %599 = vmatprep.subr.mxu0 0.0
    %600 = vmatpush1.msra.mxu0 0.0
    %601 = vmatprep.subr.mxu0 0.0
    %602 = vmatpush1.msra.mxu0 0.0
    %603 = vmatprep.subr.mxu0 0.0
    %604 = vmatpush1.msra.mxu0 0.0
    %605 = vmatprep.subr.mxu0 0.0
    %606 = vmatpush1.msra.mxu0 0.0
    %607 = vmatprep.subr.mxu0 0.0
    %608 = vmatpush1.msra.mxu0 0.0
    %609 = vmatprep.subr.mxu0 0.0
    %610 = vmatpush1.msra.mxu0 0.0
    %611 = vmatprep.mubr.f32.mxu0 0.0
    %612 = vmatmul.mubr.f32.gmra.mrb[0].mxu0 %v164
    %v613 = vpop.f32.mrb[0].mxu0
    %v614 = vadd.f32 0.0, %v613
    %v615 = vpop.f32.mrb[0].mxu0
    %v616 = vadd.f32 0.0, %v615
    %617 = vmatprep.mubr.f32.mxu0 0.0
    %618 = vmatmul.mubr.f32.gmra.mrb[0].mxu0 %v167
    %v619 = vpop.f32.mrb[0].mxu0
    %v620 = vadd.f32 0.0, %v619
    %v621 = vpop.f32.mrb[0].mxu0
    %v622 = vadd.f32 0.0, %v621
    %623 = vmatprep.mubr.f32.mxu0 0.0
    %624 = vmatmul.mubr.f32.gmra.mrb[0].mxu0 %v170
    %v625 = vpop.f32.mrb[0].mxu0
    %v626 = vadd.f32 0.0, %v625
    %v627 = vpop.f32.mrb[0].mxu0
    %v628 = vadd.f32 0.0, %v627
    %629 = vmatprep.mubr.f32.mxu0 0.0
    %630 = vmatmul.mubr.f32.gmra.mrb[0].mxu0 %v173
    %v631 = vpop.f32.mrb[0].mxu0
    %v632 = vadd.f32 0.0, %v631
    %v633 = vpop.f32.mrb[0].mxu0
    %v634 = vadd.f32 0.0, %v633
    %635 = vmatprep.mubr.f32.mxu0 0.0
    %636 = vmatmul.mubr.f32.gmra.mrb[0].mxu0 %v176
    %v637 = vpop.f32.mrb[0].mxu0
    %v638 = vadd.f32 0.0, %v637
    %v639 = vpop.f32.mrb[0].mxu0
    %v640 = vadd.f32 0.0, %v639
    %641 = vmatprep.mubr.f32.mxu0 0.0
    %642 = vmatmul.mubr.f32.gmra.mrb[0].mxu0 %v179
    %v643 = vpop.f32.mrb[0].mxu0
    %v644 = vadd.f32 0.0, %v643
    %v645 = vpop.f32.mrb[0].mxu0
    %v646 = vadd.f32 0.0, %v645
    %647 = vmatprep.mubr.f32.mxu0 0.0
    %648 = vmatmul.mubr.f32.gmra.mrb[0].mxu0 %v182
    %v649 = vpop.f32.mrb[0].mxu0
    %v650 = vadd.f32 0.0, %v649
    %v651 = vpop.f32.mrb[0].mxu0
    %v652 = vadd.f32 0.0, %v651
    %653 = vmatprep.mubr.f32.mxu0 0.0
    %654 = vmatmul.mubr.f32.gmra.mrb[0].mxu0 %v185
    %v655 = vpop.f32.mrb[0].mxu0
    %v656 = vadd.f32 0.0, %v655
    %v657 = vpop.f32.mrb[0].mxu0
    %v658 = vadd.f32 0.0, %v657
    %659 = vmatprep.mubr.f32.mxu0 0.0
    %660 = vmatmul.mubr.f32.gmra.mrb[0].mxu0 %v188
    %v661 = vpop.f32.mrb[0].mxu0
    %v662 = vadd.f32 0.0, %v661
    %v663 = vpop.f32.mrb[0].mxu0
    %v664 = vadd.f32 0.0, %v663
    %665 = vmatprep.mubr.f32.mxu0 0.0
    %666 = vmatmul.mubr.f32.gmra.mrb[0].mxu0 %v191
    %v667 = vpop.f32.mrb[0].mxu0
    %v668 = vadd.f32 0.0, %v667
    %v669 = vpop.f32.mrb[0].mxu0
    %v670 = vadd.f32 0.0, %v669
    %671 = vmatprep.mubr.f32.mxu0 0.0
    %672 = vmatmul.mubr.f32.gmra.mrb[0].mxu0 %v194
    %v673 = vpop.f32.mrb[0].mxu0
    %v674 = vadd.f32 0.0, %v673
    %v675 = vpop.f32.mrb[0].mxu0
    %v676 = vadd.f32 0.0, %v675
    %677 = vmatprep.mubr.f32.mxu0 0.0
    %678 = vmatmul.mubr.f32.gmra.mrb[0].mxu0 %v197
    %v679 = vpop.f32.mrb[0].mxu0
    %v680 = vadd.f32 0.0, %v679
    %v681 = vpop.f32.mrb[0].mxu0
    %v682 = vadd.f32 0.0, %v681
    %683 = vmatprep.mubr.f32.mxu0 0.0
    %684 = vmatmul.mubr.f32.gmra.mrb[0].mxu0 %v200
    %v685 = vpop.f32.mrb[0].mxu0
    %v686 = vadd.f32 0.0, %v685
    %v687 = vpop.f32.mrb[0].mxu0
    %v688 = vadd.f32 0.0, %v687
    %689 = vmatprep.mubr.f32.mxu0 0.0
    %690 = vmatmul.mubr.f32.gmra.mrb[0].mxu0 %v203
    %v691 = vpop.f32.mrb[0].mxu0
    %v692 = vadd.f32 0.0, %v691
    %v693 = vpop.f32.mrb[0].mxu0
    %v694 = vadd.f32 0.0, %v693
    %695 = vmatprep.mubr.f32.mxu0 0.0
    %696 = vmatmul.mubr.f32.gmra.mrb[0].mxu0 %v206
    %v697 = vpop.f32.mrb[0].mxu0
    %v698 = vadd.f32 0.0, %v697
    %v699 = vpop.f32.mrb[0].mxu0
    %v700 = vadd.f32 0.0, %v699
    %701 = vmatprep.mubr.f32.mxu0 0.0
    %702 = vmatmul.mubr.f32.gmra.mrb[0].mxu0 %v209
    %v703 = vpop.f32.mrb[0].mxu0
    %v704 = vadd.f32 0.0, %v703
    %v705 = vpop.f32.mrb[0].mxu0
    %v706 = vadd.f32 0.0, %v705
    %707 = vmatprep.mubr.f32.mxu0 0.0
    %708 = vmatmul.mubr.f32.gmra.mrb[0].mxu0 %v212
    %v709 = vpop.f32.mrb[0].mxu0
    %v710 = vadd.f32 0.0, %v709
    %v711 = vpop.f32.mrb[0].mxu0
    %v712 = vadd.f32 0.0, %v711
    %713 = vmatprep.mubr.f32.mxu0 0.0
    %714 = vmatmul.mubr.f32.gmra.mrb[0].mxu0 %v215
    %v715 = vpop.f32.mrb[0].mxu0
    %v716 = vadd.f32 0.0, %v715
    %v717 = vpop.f32.mrb[0].mxu0
    %v718 = vadd.f32 0.0, %v717
    %719 = vmatprep.mubr.f32.mxu0 0.0
    %720 = vmatmul.mubr.f32.gmra.mrb[0].mxu0 %v218
    %v721 = vpop.f32.mrb[0].mxu0
    %v722 = vadd.f32 0.0, %v721
    %v723 = vpop.f32.mrb[0].mxu0
    %v724 = vadd.f32 0.0, %v723
    %725 = vmatprep.mubr.f32.mxu0 0.0
    %726 = vmatmul.mubr.f32.gmra.mrb[0].mxu0 %v221
    %v727 = vpop.f32.mrb[0].mxu0
    %v728 = vadd.f32 0.0, %v727
    %v729 = vpop.f32.mrb[0].mxu0
    %v730 = vadd.f32 0.0, %v729
    %731 = vmatprep.mubr.f32.mxu0 0.0
    %732 = vmatmul.mubr.f32.gmra.mrb[0].mxu0 %v224
    %v733 = vpop.f32.mrb[0].mxu0
    %v734 = vadd.f32 0.0, %v733
    %v735 = vpop.f32.mrb[0].mxu0
    %v736 = vadd.f32 0.0, %v735
    %737 = vmatprep.mubr.f32.mxu0 0.0
    %738 = vmatmul.mubr.f32.gmra.mrb[0].mxu0 %v227
    %v739 = vpop.f32.mrb[0].mxu0
    %v740 = vadd.f32 0.0, %v739
    %v741 = vpop.f32.mrb[0].mxu0
    %v742 = vadd.f32 0.0, %v741
    %743 = vmatprep.mubr.f32.mxu0 0.0
    %744 = vmatmul.mubr.f32.gmra.mrb[0].mxu0 %v230
    %v745 = vpop.f32.mrb[0].mxu0
    %v746 = vadd.f32 0.0, %v745
    %v747 = vpop.f32.mrb[0].mxu0
    %v748 = vadd.f32 0.0, %v747
    %749 = vmatprep.mubr.f32.mxu0 0.0
    %750 = vmatmul.mubr.f32.gmra.mrb[0].mxu0 %v233
    %v751 = vpop.f32.mrb[0].mxu0
    %v752 = vadd.f32 0.0, %v751
    %v753 = vpop.f32.mrb[0].mxu0
    %v754 = vadd.f32 0.0, %v753
    %755 = vmatprep.mubr.f32.mxu0 0.0
    %756 = vmatmul.mubr.f32.gmra.mrb[0].mxu0 %v236
    %v757 = vpop.f32.mrb[0].mxu0
    %v758 = vadd.f32 0.0, %v757
    %v759 = vpop.f32.mrb[0].mxu0
    %v760 = vadd.f32 0.0, %v759
    %761 = vmatprep.mubr.f32.mxu0 0.0
    %762 = vmatmul.mubr.f32.gmra.mrb[0].mxu0 %v239
    %v763 = vpop.f32.mrb[0].mxu0
    %v764 = vadd.f32 0.0, %v763
    %v765 = vpop.f32.mrb[0].mxu0
    %v766 = vadd.f32 0.0, %v765
    %767 = vmatprep.mubr.f32.mxu0 0.0
    %768 = vmatmul.mubr.f32.gmra.mrb[0].mxu0 %v242
    %v769 = vpop.f32.mrb[0].mxu0
    %v770 = vadd.f32 0.0, %v769
    %v771 = vpop.f32.mrb[0].mxu0
    %v772 = vadd.f32 0.0, %v771
    %773 = vmatprep.mubr.f32.mxu0 0.0
    %774 = vmatmul.mubr.f32.gmra.mrb[0].mxu0 %v245
    %v775 = vpop.f32.mrb[0].mxu0
    %v776 = vadd.f32 0.0, %v775
    %v777 = vpop.f32.mrb[0].mxu0
    %v778 = vadd.f32 0.0, %v777
    %779 = vmatprep.mubr.f32.mxu0 0.0
    %780 = vmatmul.mubr.f32.gmra.mrb[0].mxu0 %v248
    %v781 = vpop.f32.mrb[0].mxu0
    %v782 = vadd.f32 0.0, %v781
    %v783 = vpop.f32.mrb[0].mxu0
    %v784 = vadd.f32 0.0, %v783
    %785 = vmatprep.mubr.f32.mxu0 0.0
    %786 = vmatmul.mubr.f32.gmra.mrb[0].mxu0 %v251
    %v787 = vpop.f32.mrb[0].mxu0
    %v788 = vadd.f32 0.0, %v787
    %v789 = vpop.f32.mrb[0].mxu0
    %v790 = vadd.f32 0.0, %v789
    %791 = vmatprep.mubr.f32.mxu0 0.0
    %792 = vmatmul.mubr.f32.gmra.mrb[0].mxu0 %v254
    %v793 = vpop.f32.mrb[0].mxu0
    %v794 = vadd.f32 0.0, %v793
    %v795 = vpop.f32.mrb[0].mxu0
    %v796 = vadd.f32 0.0, %v795
    %797 = vmatprep.mubr.f32.mxu0 0.0
    %798 = vmatmul.mubr.f32.gmra.mrb[0].mxu0 %v257
    %v799 = vpop.f32.mrb[0].mxu0
    %v800 = vadd.f32 0.0, %v799
    %v801 = vpop.f32.mrb[0].mxu0
    %v802 = vadd.f32 0.0, %v801
    %803 = vmatprep.mubr.f32.mxu0 0.0
    %804 = vmatmul.mubr.f32.gmra.mrb[0].mxu0 %v260
    %v805 = vpop.f32.mrb[0].mxu0
    %v806 = vadd.f32 0.0, %v805
    %v807 = vpop.f32.mrb[0].mxu0
    %v808 = vadd.f32 0.0, %v807
    %809 = vmatprep.mubr.f32.mxu0 0.0
    %810 = vmatmul.mubr.f32.gmra.mrb[0].mxu0 %v263
    %v811 = vpop.f32.mrb[0].mxu0
    %v812 = vadd.f32 0.0, %v811
    %v813 = vpop.f32.mrb[0].mxu0
    %v814 = vadd.f32 0.0, %v813
    %815 = vmatprep.mubr.f32.mxu0 0.0
    %816 = vmatmul.mubr.f32.gmra.mrb[0].mxu0 %v266
    %v817 = vpop.f32.mrb[0].mxu0
    %v818 = vadd.f32 0.0, %v817
    %v819 = vpop.f32.mrb[0].mxu0
    %v820 = vadd.f32 0.0, %v819
    %821 = vmatprep.mubr.f32.mxu0 0.0
    %822 = vmatmul.mubr.f32.gmra.mrb[0].mxu0 %v269
    %v823 = vpop.f32.mrb[0].mxu0
    %v824 = vadd.f32 0.0, %v823
    %v825 = vpop.f32.mrb[0].mxu0
    %v826 = vadd.f32 0.0, %v825
    %827 = vmatprep.mubr.f32.mxu0 0.0
    %828 = vmatmul.mubr.f32.gmra.mrb[0].mxu0 %v272
    %v829 = vpop.f32.mrb[0].mxu0
    %v830 = vadd.f32 0.0, %v829
    %v831 = vpop.f32.mrb[0].mxu0
    %v832 = vadd.f32 0.0, %v831
    %833 = vmatprep.mubr.f32.mxu0 0.0
    %834 = vmatmul.mubr.f32.gmra.mrb[0].mxu0 %v275
    %v835 = vpop.f32.mrb[0].mxu0
    %v836 = vadd.f32 0.0, %v835
    %v837 = vpop.f32.mrb[0].mxu0
    %v838 = vadd.f32 0.0, %v837
    %839 = vmatprep.mubr.f32.mxu0 0.0
    %840 = vmatmul.mubr.f32.gmra.mrb[0].mxu0 %v278
    %v841 = vpop.f32.mrb[0].mxu0
    %v842 = vadd.f32 0.0, %v841
    %v843 = vpop.f32.mrb[0].mxu0
    %v844 = vadd.f32 0.0, %v843
    %845 = vmatprep.mubr.f32.mxu0 0.0
    %846 = vmatmul.mubr.f32.gmra.mrb[0].mxu0 %v281
    %v847 = vpop.f32.mrb[0].mxu0
    %v848 = vadd.f32 0.0, %v847
    %v849 = vpop.f32.mrb[0].mxu0
    %v850 = vadd.f32 0.0, %v849
    %851 = vmatprep.mubr.f32.mxu0 0.0
    %852 = vmatmul.mubr.f32.gmra.mrb[0].mxu0 %v284
    %v853 = vpop.f32.mrb[0].mxu0
    %v854 = vadd.f32 0.0, %v853
    %v855 = vpop.f32.mrb[0].mxu0
    %v856 = vadd.f32 0.0, %v855
    %857 = vmatprep.mubr.f32.mxu0 0.0
    %858 = vmatmul.mubr.f32.gmra.mrb[0].mxu0 %v287
    %v859 = vpop.f32.mrb[0].mxu0
    %v860 = vadd.f32 0.0, %v859
    %v861 = vpop.f32.mrb[0].mxu0
    %v862 = vadd.f32 0.0, %v861
    %863 = vmatprep.mubr.f32.mxu0 0.0
    %864 = vmatmul.mubr.f32.gmra.mrb[0].mxu0 %v290
    %v865 = vpop.f32.mrb[0].mxu0
    %v866 = vadd.f32 0.0, %v865
    %v867 = vpop.f32.mrb[0].mxu0
    %v868 = vadd.f32 0.0, %v867
    %869 = vmatprep.mubr.f32.mxu0 0.0
    %870 = vmatmul.mubr.f32.gmra.mrb[0].mxu0 %v293
    %v871 = vpop.f32.mrb[0].mxu0
    %v872 = vadd.f32 0.0, %v871
    %v873 = vpop.f32.mrb[0].mxu0
    %v874 = vadd.f32 0.0, %v873
    %875 = vmatprep.mubr.f32.mxu0 0.0
    %876 = vmatmul.mubr.f32.gmra.mrb[0].mxu0 %v296
    %v877 = vpop.f32.mrb[0].mxu0
    %v878 = vadd.f32 0.0, %v877
    %v879 = vpop.f32.mrb[0].mxu0
    %v880 = vadd.f32 0.0, %v879
    %881 = vmatprep.mubr.f32.mxu0 0.0
    %882 = vmatmul.mubr.f32.gmra.mrb[0].mxu0 %v299
    %v883 = vpop.f32.mrb[0].mxu0
    %v884 = vadd.f32 0.0, %v883
    %v885 = vpop.f32.mrb[0].mxu0
    %v886 = vadd.f32 0.0, %v885
    %887 = vmatprep.mubr.f32.mxu0 0.0
    %888 = vmatmul.mubr.f32.gmra.mrb[0].mxu0 %v302
    %v889 = vpop.f32.mrb[0].mxu0
    %v890 = vadd.f32 0.0, %v889
    %v891 = vpop.f32.mrb[0].mxu0
    %v892 = vadd.f32 0.0, %v891
    %893 = vmatprep.mubr.f32.mxu0 0.0
    %894 = vmatmul.mubr.f32.gmra.mrb[0].mxu0 %v305
    %v895 = vpop.f32.mrb[0].mxu0
    %v896 = vadd.f32 0.0, %v895
    %v897 = vpop.f32.mrb[0].mxu0
    %v898 = vadd.f32 0.0, %v897
    %899 = vmatprep.mubr.f32.mxu0 0.0
    %900 = vmatmul.mubr.f32.gmra.mrb[0].mxu0 %v308
    %v901 = vpop.f32.mrb[0].mxu0
    %v902 = vadd.f32 0.0, %v901
    %v903 = vpop.f32.mrb[0].mxu0
    %v904 = vadd.f32 0.0, %v903
    %905 = vmatprep.mubr.f32.mxu0 0.0
    %906 = vmatmul.mubr.f32.gmra.mrb[0].mxu0 %v311
    %v907 = vpop.f32.mrb[0].mxu0
    %v908 = vadd.f32 0.0, %v907
    %v909 = vpop.f32.mrb[0].mxu0
    %v910 = vadd.f32 0.0, %v909
    %911 = vmatprep.mubr.f32.mxu0 0.0
    %912 = vmatmul.mubr.f32.gmra.mrb[0].mxu0 %v314
    %v913 = vpop.f32.mrb[0].mxu0
    %v914 = vadd.f32 0.0, %v913
    %v915 = vpop.f32.mrb[0].mxu0
    %v916 = vadd.f32 0.0, %v915
    %917 = vmatprep.mubr.f32.mxu0 0.0
    %918 = vmatmul.mubr.f32.gmra.mrb[0].mxu0 %v317
    %v919 = vpop.f32.mrb[0].mxu0
    %v920 = vadd.f32 0.0, %v919
    %v921 = vpop.f32.mrb[0].mxu0
    %v922 = vadd.f32 0.0, %v921
    %923 = vmatprep.mubr.f32.mxu0 0.0
    %924 = vmatmul.mubr.f32.gmra.mrb[0].mxu0 %v320
    %v925 = vpop.f32.mrb[0].mxu0
    %v926 = vadd.f32 0.0, %v925
    %v927 = vpop.f32.mrb[0].mxu0
    %v928 = vadd.f32 0.0, %v927
    %929 = vmatprep.mubr.f32.mxu0 0.0
    %930 = vmatmul.mubr.f32.gmra.mrb[0].mxu0 %v323
    %v931 = vpop.f32.mrb[0].mxu0
    %v932 = vadd.f32 0.0, %v931
    %v933 = vpop.f32.mrb[0].mxu0
    %v934 = vadd.f32 0.0, %v933
    %935 = vmatprep.mubr.f32.mxu0 0.0
    %936 = vmatmul.mubr.f32.gmra.mrb[0].mxu0 %v326
    %v937 = vpop.f32.mrb[0].mxu0
    %v938 = vadd.f32 0.0, %v937
    %v939 = vpop.f32.mrb[0].mxu0
    %v940 = vadd.f32 0.0, %v939
    %941 = vmatprep.mubr.f32.mxu0 0.0
    %942 = vmatmul.mubr.f32.gmra.mrb[0].mxu0 %v329
    %v943 = vpop.f32.mrb[0].mxu0
    %v944 = vadd.f32 0.0, %v943
    %v945 = vpop.f32.mrb[0].mxu0
    %v946 = vadd.f32 0.0, %v945
    %947 = vmatprep.mubr.f32.mxu0 0.0
    %948 = vmatmul.mubr.f32.gmra.mrb[0].mxu0 %v332
    %v949 = vpop.f32.mrb[0].mxu0
    %v950 = vadd.f32 0.0, %v949
    %v951 = vpop.f32.mrb[0].mxu0
    %v952 = vadd.f32 0.0, %v951
    %953 = vmatprep.mubr.f32.mxu0 0.0
    %954 = vmatmul.mubr.f32.gmra.mrb[0].mxu0 %v335
    %v955 = vpop.f32.mrb[0].mxu0
    %v956 = vadd.f32 0.0, %v955
    %v957 = vpop.f32.mrb[0].mxu0
    %v958 = vadd.f32 0.0, %v957
    %959 = vmatprep.mubr.f32.mxu0 0.0
    %960 = vmatmul.mubr.f32.gmra.mrb[0].mxu0 %v338
    %v961 = vpop.f32.mrb[0].mxu0
    %v962 = vadd.f32 0.0, %v961
    %v963 = vpop.f32.mrb[0].mxu0
    %v964 = vadd.f32 0.0, %v963
    %965 = vmatprep.mubr.f32.mxu0 0.0
    %966 = vmatmul.mubr.f32.gmra.mrb[0].mxu0 %v341
    %v967 = vpop.f32.mrb[0].mxu0
    %v968 = vadd.f32 0.0, %v967
    %v969 = vpop.f32.mrb[0].mxu0
    %v970 = vadd.f32 0.0, %v969
    %971 = vmatprep.mubr.f32.mxu0 0.0
    %972 = vmatmul.mubr.f32.gmra.mrb[0].mxu0 %v344
    %v973 = vpop.f32.mrb[0].mxu0
    %v974 = vadd.f32 0.0, %v973
    %v975 = vpop.f32.mrb[0].mxu0
    %v976 = vadd.f32 0.0, %v975
    %977 = vmatprep.mubr.f32.mxu0 0.0
    %978 = vmatmul.mubr.f32.gmra.mrb[0].mxu0 %v347
    %v979 = vpop.f32.mrb[0].mxu0
    %v980 = vadd.f32 0.0, %v979
    %v981 = vpop.f32.mrb[0].mxu0
    %v982 = vadd.f32 0.0, %v981
    %983 = vmatprep.mubr.f32.mxu0 0.0
    %984 = vmatmul.mubr.f32.gmra.mrb[0].mxu0 %v350
    %v985 = vpop.f32.mrb[0].mxu0
    %v986 = vadd.f32 0.0, %v985
    %v987 = vpop.f32.mrb[0].mxu0
    %v988 = vadd.f32 0.0, %v987
    %989 = vmatprep.mubr.f32.mxu0 0.0
    %990 = vmatmul.mubr.f32.gmra.mrb[0].mxu0 %v353
    %v991 = vpop.f32.mrb[0].mxu0
    %v992 = vadd.f32 0.0, %v991
    %v993 = vpop.f32.mrb[0].mxu0
    %v994 = vadd.f32 0.0, %v993
    %995 = vmatprep.mubr.f32.mxu0 0.0
    %996 = vmatmul.mubr.f32.gmra.mrb[0].mxu0 %v356
    %v997 = vpop.f32.mrb[0].mxu0
    %v998 = vadd.f32 0.0, %v997
    %v999 = vpop.f32.mrb[0].mxu0
    %v1000 = vadd.f32 0.0, %v999
    %1001 = vmatprep.mubr.f32.mxu0 0.0
    %1002 = vmatmul.mubr.f32.gmra.mrb[0].mxu0 %v359
    %v1003 = vpop.f32.mrb[0].mxu0
    %v1004 = vadd.f32 0.0, %v1003
    %v1005 = vpop.f32.mrb[0].mxu0
    %v1006 = vadd.f32 0.0, %v1005
    %1007 = vmatprep.mubr.f32.mxu0 0.0
    %1008 = vmatmul.mubr.f32.gmra.mrb[0].mxu0 %v362
    %v1009 = vpop.f32.mrb[0].mxu0
    %v1010 = vadd.f32 0.0, %v1009
    %v1011 = vpop.f32.mrb[0].mxu0
    %v1012 = vadd.f32 0.0, %v1011
    %1013 = vmatprep.mubr.f32.mxu0 0.0
    %1014 = vmatmul.mubr.f32.gmra.mrb[0].mxu0 %v365
    %v1015 = vpop.f32.mrb[0].mxu0
    %v1016 = vadd.f32 0.0, %v1015
    %v1017 = vpop.f32.mrb[0].mxu0
    %v1018 = vadd.f32 0.0, %v1017
    %1019 = vmatprep.mubr.f32.mxu0 0.0
    %1020 = vmatmul.mubr.f32.gmra.mrb[0].mxu0 %v368
    %v1021 = vpop.f32.mrb[0].mxu0
    %v1022 = vadd.f32 0.0, %v1021
    %v1023 = vpop.f32.mrb[0].mxu0
    %v1024 = vadd.f32 0.0, %v1023
    %1025 = vmatprep.mubr.f32.mxu0 0.0
    %1026 = vmatmul.mubr.f32.gmra.mrb[0].mxu0 %v371
    %v1027 = vpop.f32.mrb[0].mxu0
    %v1028 = vadd.f32 0.0, %v1027
    %v1029 = vpop.f32.mrb[0].mxu0
    %v1030 = vadd.f32 0.0, %v1029
    %1031 = vmatprep.mubr.f32.mxu0 0.0
    %1032 = vmatmul.mubr.f32.gmra.mrb[0].mxu0 %v374
    %v1033 = vpop.f32.mrb[0].mxu0
    %v1034 = vadd.f32 0.0, %v1033
    %v1035 = vpop.f32.mrb[0].mxu0
    %v1036 = vadd.f32 0.0, %v1035
    %1037 = vmatprep.mubr.f32.mxu0 0.0
    %1038 = vmatmul.mubr.f32.gmra.mrb[0].mxu0 %v377
    %v1039 = vpop.f32.mrb[0].mxu0
    %v1040 = vadd.f32 0.0, %v1039
    %v1041 = vpop.f32.mrb[0].mxu0
    %v1042 = vadd.f32 0.0, %v1041
    %1043 = vmatprep.mubr.f32.mxu0 0.0
    %1044 = vmatmul.mubr.f32.gmra.mrb[0].mxu0 %v380
    %v1045 = vpop.f32.mrb[0].mxu0
    %v1046 = vadd.f32 0.0, %v1045
    %v1047 = vpop.f32.mrb[0].mxu0
    %v1048 = vadd.f32 0.0, %v1047
    %1049 = vmatprep.mubr.f32.mxu0 0.0
    %1050 = vmatmul.mubr.f32.gmra.mrb[0].mxu0 %v383
    %v1051 = vpop.f32.mrb[0].mxu0
    %v1052 = vadd.f32 0.0, %v1051
    %v1053 = vpop.f32.mrb[0].mxu0
    %v1054 = vadd.f32 0.0, %v1053
    %1055 = vmatprep.mubr.f32.mxu0 0.0
    %1056 = vmatmul.mubr.f32.gmra.mrb[0].mxu0 %v386
    %v1057 = vpop.f32.mrb[0].mxu0
    %v1058 = vadd.f32 0.0, %v1057
    %v1059 = vpop.f32.mrb[0].mxu0
    %v1060 = vadd.f32 0.0, %v1059
    %1061 = vmatprep.mubr.f32.mxu0 0.0
    %1062 = vmatmul.mubr.f32.gmra.mrb[0].mxu0 %v389
    %v1063 = vpop.f32.mrb[0].mxu0
    %v1064 = vadd.f32 0.0, %v1063
    %v1065 = vpop.f32.mrb[0].mxu0
    %v1066 = vadd.f32 0.0, %v1065
    %1067 = vmatprep.mubr.f32.mxu0 0.0
    %1068 = vmatmul.mubr.f32.gmra.mrb[0].mxu0 %v392
    %v1069 = vpop.f32.mrb[0].mxu0
    %v1070 = vadd.f32 0.0, %v1069
    %v1071 = vpop.f32.mrb[0].mxu0
    %v1072 = vadd.f32 0.0, %v1071
    %1073 = vmatprep.mubr.f32.mxu0 0.0
    %1074 = vmatmul.mubr.f32.gmra.mrb[0].mxu0 %v395
    %v1075 = vpop.f32.mrb[0].mxu0
    %v1076 = vadd.f32 0.0, %v1075
    %v1077 = vpop.f32.mrb[0].mxu0
    %v1078 = vadd.f32 0.0, %v1077
    %1079 = vmatprep.mubr.f32.mxu0 0.0
    %1080 = vmatmul.mubr.f32.gmra.mrb[0].mxu0 %v398
    %v1081 = vpop.f32.mrb[0].mxu0
    %v1082 = vadd.f32 0.0, %v1081
    %v1083 = vpop.f32.mrb[0].mxu0
    %v1084 = vadd.f32 0.0, %v1083
    %1085 = vmatprep.mubr.f32.mxu0 0.0
    %1086 = vmatmul.mubr.f32.gmra.mrb[0].mxu0 %v401
    %v1087 = vpop.f32.mrb[0].mxu0
    %v1088 = vadd.f32 0.0, %v1087
    %v1089 = vpop.f32.mrb[0].mxu0
    %v1090 = vadd.f32 0.0, %v1089
    %1091 = vmatprep.mubr.f32.mxu0 0.0
    %1092 = vmatmul.mubr.f32.gmra.mrb[0].mxu0 %v404
    %v1093 = vpop.f32.mrb[0].mxu0
    %v1094 = vadd.f32 0.0, %v1093
    %v1095 = vpop.f32.mrb[0].mxu0
    %v1096 = vadd.f32 0.0, %v1095
    %1097 = vmatprep.mubr.f32.mxu0 0.0
    %1098 = vmatmul.mubr.f32.gmra.mrb[0].mxu0 %v407
    %v1099 = vpop.f32.mrb[0].mxu0
    %v1100 = vadd.f32 0.0, %v1099
    %v1101 = vpop.f32.mrb[0].mxu0
    %v1102 = vadd.f32 0.0, %v1101
    %1103 = vmatprep.mubr.f32.mxu0 0.0
    %1104 = vmatmul.mubr.f32.gmra.mrb[0].mxu0 %v410
    %v1105 = vpop.f32.mrb[0].mxu0
    %v1106 = vadd.f32 0.0, %v1105
    %v1107 = vpop.f32.mrb[0].mxu0
    %v1108 = vadd.f32 0.0, %v1107
    %1109 = vmatprep.mubr.f32.mxu0 0.0
    %1110 = vmatmul.mubr.f32.gmra.mrb[0].mxu0 %v413
    %v1111 = vpop.f32.mrb[0].mxu0
    %v1112 = vadd.f32 0.0, %v1111
    %v1113 = vpop.f32.mrb[0].mxu0
    %v1114 = vadd.f32 0.0, %v1113
    %1115 = vmatprep.mubr.f32.mxu0 0.0
    %1116 = vmatmul.mubr.f32.gmra.mrb[0].mxu0 %v416
    %v1117 = vpop.f32.mrb[0].mxu0
    %v1118 = vadd.f32 0.0, %v1117
    %v1119 = vpop.f32.mrb[0].mxu0
    %v1120 = vadd.f32 0.0, %v1119
    %1121 = vmatprep.mubr.f32.mxu0 0.0
    %1122 = vmatmul.mubr.f32.gmra.mrb[0].mxu0 %v419
    %v1123 = vpop.f32.mrb[0].mxu0
    %v1124 = vadd.f32 0.0, %v1123
    %v1125 = vpop.f32.mrb[0].mxu0
    %v1126 = vadd.f32 0.0, %v1125
    %1127 = vmatprep.mubr.f32.mxu0 0.0
    %1128 = vmatmul.mubr.f32.gmra.mrb[0].mxu0 %v422
    %v1129 = vpop.f32.mrb[0].mxu0
    %v1130 = vadd.f32 0.0, %v1129
    %v1131 = vpop.f32.mrb[0].mxu0
    %v1132 = vadd.f32 0.0, %v1131
    %1133 = vmatprep.mubr.f32.mxu0 0.0
    %1134 = vmatmul.mubr.f32.gmra.mrb[0].mxu0 %v425
    %v1135 = vpop.f32.mrb[0].mxu0
    %v1136 = vadd.f32 0.0, %v1135
    %v1137 = vpop.f32.mrb[0].mxu0
    %v1138 = vadd.f32 0.0, %v1137
    %1139 = vmatprep.mubr.f32.mxu0 0.0
    %1140 = vmatmul.mubr.f32.gmra.mrb[0].mxu0 %v428
    %v1141 = vpop.f32.mrb[0].mxu0
    %v1142 = vadd.f32 0.0, %v1141
    %v1143 = vpop.f32.mrb[0].mxu0
    %v1144 = vadd.f32 0.0, %v1143
    %1145 = vmatprep.mubr.f32.mxu0 0.0
    %1146 = vmatmul.mubr.f32.gmra.mrb[0].mxu0 %v431
    %v1147 = vpop.f32.mrb[0].mxu0
    %v1148 = vadd.f32 0.0, %v1147
    %v1149 = vpop.f32.mrb[0].mxu0
    %v1150 = vadd.f32 0.0, %v1149
    %1151 = vmatprep.mubr.f32.mxu0 0.0
    %1152 = vmatmul.mubr.f32.gmra.mrb[0].mxu0 %v434
    %v1153 = vpop.f32.mrb[0].mxu0
    %v1154 = vadd.f32 0.0, %v1153
    %v1155 = vpop.f32.mrb[0].mxu0
    %v1156 = vadd.f32 0.0, %v1155
    %1157 = vmatprep.mubr.f32.mxu0 0.0
    %1158 = vmatmul.mubr.f32.gmra.mrb[0].mxu0 %v437
    %v1159 = vpop.f32.mrb[0].mxu0
    %v1160 = vadd.f32 0.0, %v1159
    %v1161 = vpop.f32.mrb[0].mxu0
    %v1162 = vadd.f32 0.0, %v1161
    %1163 = vmatprep.mubr.f32.mxu0 0.0
    %1164 = vmatmul.mubr.f32.gmra.mrb[0].mxu0 %v440
    %v1165 = vpop.f32.mrb[0].mxu0
    %v1166 = vadd.f32 0.0, %v1165
    %v1167 = vpop.f32.mrb[0].mxu0
    %v1168 = vadd.f32 0.0, %v1167
    %1169 = vmatprep.mubr.f32.mxu0 0.0
    %1170 = vmatmul.mubr.f32.gmra.mrb[0].mxu0 %v443
    %v1171 = vpop.f32.mrb[0].mxu0
    %v1172 = vadd.f32 0.0, %v1171
    %v1173 = vpop.f32.mrb[0].mxu0
    %v1174 = vadd.f32 0.0, %v1173
    %1175 = vmatprep.mubr.f32.mxu0 0.0
    %1176 = vmatmul.mubr.f32.gmra.mrb[0].mxu0 %v446
    %v1177 = vpop.f32.mrb[0].mxu0
    %v1178 = vadd.f32 0.0, %v1177
    %v1179 = vpop.f32.mrb[0].mxu0
    %v1180 = vadd.f32 0.0, %v1179
    %1181 = vmatprep.mubr.f32.mxu0 0.0
    %1182 = vmatmul.mubr.f32.gmra.mrb[0].mxu0 %v449
    %v1183 = vpop.f32.mrb[0].mxu0
    %v1184 = vadd.f32 0.0, %v1183
    %v1185 = vpop.f32.mrb[0].mxu0
    %v1186 = vadd.f32 0.0, %v1185
    %1187 = vmatprep.mubr.f32.mxu0 0.0
    %1188 = vmatmul.mubr.f32.gmra.mrb[0].mxu0 %v452
    %v1189 = vpop.f32.mrb[0].mxu0
    %v1190 = vadd.f32 0.0, %v1189
    %v1191 = vpop.f32.mrb[0].mxu0
    %v1192 = vadd.f32 0.0, %v1191
    %1193 = vmatprep.mubr.f32.mxu0 0.0
    %1194 = vmatmul.mubr.f32.gmra.mrb[0].mxu0 %v455
    %v1195 = vpop.f32.mrb[0].mxu0
    %v1196 = vadd.f32 0.0, %v1195
    %v1197 = vpop.f32.mrb[0].mxu0
    %v1198 = vadd.f32 0.0, %v1197
    %1199 = vmatprep.mubr.f32.mxu0 0.0
    %1200 = vmatmul.mubr.f32.gmra.mrb[0].mxu0 %v458
    %v1201 = vpop.f32.mrb[0].mxu0
    %v1202 = vadd.f32 0.0, %v1201
    %v1203 = vpop.f32.mrb[0].mxu0
    %v1204 = vadd.f32 0.0, %v1203
    %1205 = vmatprep.mubr.f32.mxu0 0.0
    %1206 = vmatmul.mubr.f32.gmra.mrb[0].mxu0 %v461
    %v1207 = vpop.f32.mrb[0].mxu0
    %v1208 = vadd.f32 0.0, %v1207
    %v1209 = vpop.f32.mrb[0].mxu0
    %v1210 = vadd.f32 0.0, %v1209
    %1211 = vmatprep.mubr.f32.mxu0 0.0
    %1212 = vmatmul.mubr.f32.gmra.mrb[0].mxu0 %v464
    %v1213 = vpop.f32.mrb[0].mxu0
    %v1214 = vadd.f32 0.0, %v1213
    %v1215 = vpop.f32.mrb[0].mxu0
    %v1216 = vadd.f32 0.0, %v1215
    %1217 = vmatprep.mubr.f32.mxu0 0.0
    %1218 = vmatmul.mubr.f32.gmra.mrb[0].mxu0 %v467
    %v1219 = vpop.f32.mrb[0].mxu0
    %v1220 = vadd.f32 0.0, %v1219
    %v1221 = vpop.f32.mrb[0].mxu0
    %v1222 = vadd.f32 0.0, %v1221
    %1223 = vmatprep.mubr.f32.mxu0 0.0
    %1224 = vmatmul.mubr.f32.gmra.mrb[0].mxu0 %v470
    %v1225 = vpop.f32.mrb[0].mxu0
    %v1226 = vadd.f32 0.0, %v1225
    %v1227 = vpop.f32.mrb[0].mxu0
    %v1228 = vadd.f32 0.0, %v1227
    %1229 = vmatprep.mubr.f32.mxu0 0.0
    %1230 = vmatmul.mubr.f32.gmra.mrb[0].mxu0 %v473
    %v1231 = vpop.f32.mrb[0].mxu0
    %v1232 = vadd.f32 0.0, %v1231
    %v1233 = vpop.f32.mrb[0].mxu0
    %v1234 = vadd.f32 0.0, %v1233
    %1235 = vmatprep.mubr.f32.mxu0 0.0
    %1236 = vmatmul.mubr.f32.gmra.mrb[0].mxu0 %v476
    %v1237 = vpop.f32.mrb[0].mxu0
    %v1238 = vadd.f32 0.0, %v1237
    %v1239 = vpop.f32.mrb[0].mxu0
    %v1240 = vadd.f32 0.0, %v1239
    %1241 = vmatprep.mubr.f32.mxu0 0.0
    %1242 = vmatmul.mubr.f32.gmra.mrb[0].mxu0 %v479
    %v1243 = vpop.f32.mrb[0].mxu0
    %v1244 = vadd.f32 0.0, %v1243
    %v1245 = vpop.f32.mrb[0].mxu0
    %v1246 = vadd.f32 0.0, %v1245
    %1247 = vmatprep.mubr.f32.mxu0 0.0
    %1248 = vmatmul.mubr.f32.gmra.mrb[0].mxu0 %v482
    %v1249 = vpop.f32.mrb[0].mxu0
    %v1250 = vadd.f32 0.0, %v1249
    %v1251 = vpop.f32.mrb[0].mxu0
    %v1252 = vadd.f32 0.0, %v1251
    %1253 = vmatprep.mubr.f32.mxu0 0.0
    %1254 = vmatmul.mubr.f32.gmra.mrb[0].mxu0 %v485
    %v1255 = vpop.f32.mrb[0].mxu0
    %v1256 = vadd.f32 0.0, %v1255
    %v1257 = vpop.f32.mrb[0].mxu0
    %v1258 = vadd.f32 0.0, %v1257
    %1259 = vmatprep.mubr.f32.mxu0 0.0
    %1260 = vmatmul.mubr.f32.gmra.mrb[0].mxu0 %v488
    %v1261 = vpop.f32.mrb[0].mxu0
    %v1262 = vadd.f32 0.0, %v1261
    %v1263 = vpop.f32.mrb[0].mxu0
    %v1264 = vadd.f32 0.0, %v1263
    %1265 = vmatprep.mubr.f32.mxu0 0.0
    %1266 = vmatmul.mubr.f32.gmra.mrb[0].mxu0 %v491
    %v1267 = vpop.f32.mrb[0].mxu0
    %v1268 = vadd.f32 0.0, %v1267
    %v1269 = vpop.f32.mrb[0].mxu0
    %v1270 = vadd.f32 0.0, %v1269
    %1271 = vmatprep.mubr.f32.mxu0 0.0
    %1272 = vmatmul.mubr.f32.gmra.mrb[0].mxu0 %v494
    %v1273 = vpop.f32.mrb[0].mxu0
    %v1274 = vadd.f32 0.0, %v1273
    %v1275 = vpop.f32.mrb[0].mxu0
    %v1276 = vadd.f32 0.0, %v1275
    %1277 = vmatprep.mubr.f32.mxu0 0.0
    %1278 = vmatmul.mubr.f32.gmra.mrb[0].mxu0 %v497
    %v1279 = vpop.f32.mrb[0].mxu0
    %v1280 = vadd.f32 0.0, %v1279
    %v1281 = vpop.f32.mrb[0].mxu0
    %v1282 = vadd.f32 0.0, %v1281
    %1283 = vmatprep.mubr.f32.mxu0 0.0
    %1284 = vmatmul.mubr.f32.gmra.mrb[0].mxu0 %v500
    %v1285 = vpop.f32.mrb[0].mxu0
    %v1286 = vadd.f32 0.0, %v1285
    %v1287 = vpop.f32.mrb[0].mxu0
    %v1288 = vadd.f32 0.0, %v1287
    %1289 = vmatprep.mubr.f32.mxu0 0.0
    %1290 = vmatmul.mubr.f32.gmra.mrb[0].mxu0 %v503
    %v1291 = vpop.f32.mrb[0].mxu0
    %v1292 = vadd.f32 0.0, %v1291
    %v1293 = vpop.f32.mrb[0].mxu0
    %v1294 = vadd.f32 0.0, %v1293
    %1295 = vmatprep.mubr.f32.mxu0 0.0
    %1296 = vmatmul.mubr.f32.gmra.mrb[0].mxu0 %v506
    %v1297 = vpop.f32.mrb[0].mxu0
    %v1298 = vadd.f32 0.0, %v1297
    %v1299 = vpop.f32.mrb[0].mxu0
    %v1300 = vadd.f32 0.0, %v1299
    %1301 = vmatprep.mubr.f32.mxu0 0.0
    %1302 = vmatmul.mubr.f32.gmra.mrb[0].mxu0 %v509
    %v1303 = vpop.f32.mrb[0].mxu0
    %v1304 = vadd.f32 0.0, %v1303
    %v1305 = vpop.f32.mrb[0].mxu0
    %v1306 = vadd.f32 0.0, %v1305
    %1307 = vmatprep.mubr.f32.mxu0 0.0
    %1308 = vmatmul.mubr.f32.gmra.mrb[0].mxu0 %v512
    %v1309 = vpop.f32.mrb[0].mxu0
    %v1310 = vadd.f32 0.0, %v1309
    %v1311 = vpop.f32.mrb[0].mxu0
    %v1312 = vadd.f32 0.0, %v1311
    %1313 = vmatprep.mubr.f32.mxu0 0.0
    %1314 = vmatmul.mubr.f32.gmra.mrb[0].mxu0 %v515
    %v1315 = vpop.f32.mrb[0].mxu0
    %v1316 = vadd.f32 0.0, %v1315
    %v1317 = vpop.f32.mrb[0].mxu0
    %v1318 = vadd.f32 0.0, %v1317
    %1319 = vmatprep.mubr.f32.mxu0 0.0
    %1320 = vmatmul.mubr.f32.gmra.mrb[0].mxu0 %v518
    %v1321 = vpop.f32.mrb[0].mxu0
    %v1322 = vadd.f32 0.0, %v1321
    %v1323 = vpop.f32.mrb[0].mxu0
    %v1324 = vadd.f32 0.0, %v1323
    %1325 = vmatprep.mubr.f32.mxu0 0.0
    %1326 = vmatmul.mubr.f32.gmra.mrb[0].mxu0 %v521
    %v1327 = vpop.f32.mrb[0].mxu0
    %v1328 = vadd.f32 0.0, %v1327
    %v1329 = vpop.f32.mrb[0].mxu0
    %v1330 = vadd.f32 0.0, %v1329
    %1331 = vmatprep.mubr.f32.mxu0 0.0
    %1332 = vmatmul.mubr.f32.gmra.mrb[0].mxu0 %v524
    %v1333 = vpop.f32.mrb[0].mxu0
    %v1334 = vadd.f32 0.0, %v1333
    %v1335 = vpop.f32.mrb[0].mxu0
    %v1336 = vadd.f32 0.0, %v1335
    %1337 = vmatprep.mubr.f32.mxu0 0.0
    %1338 = vmatmul.mubr.f32.gmra.mrb[0].mxu0 %v527
    %v1339 = vpop.f32.mrb[0].mxu0
    %v1340 = vadd.f32 0.0, %v1339
    %v1341 = vpop.f32.mrb[0].mxu0
    %v1342 = vadd.f32 0.0, %v1341
    %1343 = vmatprep.mubr.f32.mxu0 0.0
    %1344 = vmatmul.mubr.f32.gmra.mrb[0].mxu0 %v530
    %v1345 = vpop.f32.mrb[0].mxu0
    %v1346 = vadd.f32 0.0, %v1345
    %v1347 = vpop.f32.mrb[0].mxu0
    %v1348 = vadd.f32 0.0, %v1347
    %1349 = vmatprep.mubr.f32.mxu0 0.0
    %1350 = vmatmul.mubr.f32.gmra.mrb[0].mxu0 %v533
    %v1351 = vpop.f32.mrb[0].mxu0
    %v1352 = vadd.f32 0.0, %v1351
    %v1353 = vpop.f32.mrb[0].mxu0
    %v1354 = vadd.f32 0.0, %v1353
    %1355 = vmatprep.mubr.f32.mxu0 0.0
    %1356 = vmatmul.mubr.f32.gmra.mrb[0].mxu0 %v536
    %v1357 = vpop.f32.mrb[0].mxu0
    %v1358 = vadd.f32 0.0, %v1357
    %v1359 = vpop.f32.mrb[0].mxu0
    %v1360 = vadd.f32 0.0, %v1359
    %1361 = vmatprep.mubr.f32.mxu0 0.0
    %1362 = vmatmul.mubr.f32.gmra.mrb[0].mxu0 %v539
    %v1363 = vpop.f32.mrb[0].mxu0
    %v1364 = vadd.f32 0.0, %v1363
    %v1365 = vpop.f32.mrb[0].mxu0
    %v1366 = vadd.f32 0.0, %v1365
    %1367 = vmatprep.mubr.f32.mxu0 0.0
    %1368 = vmatmul.mubr.f32.gmra.mrb[0].mxu0 %v542
    %v1369 = vpop.f32.mrb[0].mxu0
    %v1370 = vadd.f32 0.0, %v1369
    %v1371 = vpop.f32.mrb[0].mxu0
    %v1372 = vadd.f32 0.0, %v1371
    %1373 = vmatprep.mubr.f32.mxu0 0.0
    %1374 = vmatmul.mubr.f32.gmra.mrb[0].mxu0 %v545
    %v1375 = vpop.f32.mrb[0].mxu0
    %v1376 = vadd.f32 0.0, %v1375
    %v1377 = vpop.f32.mrb[0].mxu0
    %v1378 = vadd.f32 0.0, %v1377
    %1379 = vdwg.mxu0
    %v1380 = vpack.c.bf16 %v620, %v614
    %v1381 = vpack.c.bf16 %v632, %v626
    %v1382 = vpack.c.bf16 %v644, %v638
    %v1383 = vpack.c.bf16 %v656, %v650
    %v1384 = vpack.c.bf16 %v668, %v662
    %v1385 = vpack.c.bf16 %v680, %v674
    %v1386 = vpack.c.bf16 %v692, %v686
    %v1387 = vpack.c.bf16 %v704, %v698
    %v1388 = vpack.c.bf16 %v716, %v710
    %v1389 = vpack.c.bf16 %v728, %v722
    %v1390 = vpack.c.bf16 %v740, %v734
    %v1391 = vpack.c.bf16 %v752, %v746
    %v1392 = vpack.c.bf16 %v764, %v758
    %v1393 = vpack.c.bf16 %v776, %v770
    %v1394 = vpack.c.bf16 %v788, %v782
    %v1395 = vpack.c.bf16 %v800, %v794
    %v1396 = vpack.c.bf16 %v812, %v806
    %v1397 = vpack.c.bf16 %v824, %v818
    %v1398 = vpack.c.bf16 %v836, %v830
    %v1399 = vpack.c.bf16 %v848, %v842
    %v1400 = vpack.c.bf16 %v860, %v854
    %v1401 = vpack.c.bf16 %v872, %v866
    %v1402 = vpack.c.bf16 %v884, %v878
    %v1403 = vpack.c.bf16 %v896, %v890
    %v1404 = vpack.c.bf16 %v908, %v902
    %v1405 = vpack.c.bf16 %v920, %v914
    %v1406 = vpack.c.bf16 %v932, %v926
    %v1407 = vpack.c.bf16 %v944, %v938
    %v1408 = vpack.c.bf16 %v956, %v950
    %v1409 = vpack.c.bf16 %v968, %v962
    %v1410 = vpack.c.bf16 %v980, %v974
    %v1411 = vpack.c.bf16 %v992, %v986
    %v1412 = vpack.c.bf16 %v1004, %v998
    %v1413 = vpack.c.bf16 %v1016, %v1010
    %v1414 = vpack.c.bf16 %v1028, %v1022
    %v1415 = vpack.c.bf16 %v1040, %v1034
    %v1416 = vpack.c.bf16 %v1052, %v1046
    %v1417 = vpack.c.bf16 %v1064, %v1058
    %v1418 = vpack.c.bf16 %v1076, %v1070
    %v1419 = vpack.c.bf16 %v1088, %v1082
    %v1420 = vpack.c.bf16 %v1100, %v1094
    %v1421 = vpack.c.bf16 %v1112, %v1106
    %v1422 = vpack.c.bf16 %v1124, %v1118
    %v1423 = vpack.c.bf16 %v1136, %v1130
    %v1424 = vpack.c.bf16 %v1148, %v1142
    %v1425 = vpack.c.bf16 %v1160, %v1154
    %v1426 = vpack.c.bf16 %v1172, %v1166
    %v1427 = vpack.c.bf16 %v1184, %v1178
    %v1428 = vpack.c.bf16 %v1196, %v1190
    %v1429 = vpack.c.bf16 %v1208, %v1202
    %v1430 = vpack.c.bf16 %v1220, %v1214
    %v1431 = vpack.c.bf16 %v1232, %v1226
    %v1432 = vpack.c.bf16 %v1244, %v1238
    %v1433 = vpack.c.bf16 %v1256, %v1250
    %v1434 = vpack.c.bf16 %v1268, %v1262
    %v1435 = vpack.c.bf16 %v1280, %v1274
    %v1436 = vpack.c.bf16 %v1292, %v1286
    %v1437 = vpack.c.bf16 %v1304, %v1298
    %v1438 = vpack.c.bf16 %v1316, %v1310
    %v1439 = vpack.c.bf16 %v1328, %v1322
    %v1440 = vpack.c.bf16 %v1340, %v1334
    %v1441 = vpack.c.bf16 %v1352, %v1346
    %v1442 = vpack.c.bf16 %v1364, %v1358
    %v1443 = vpack.c.bf16 %v1376, %v1370
    %v1508 = vunpack.c.l.b16 %v1380
    %v1509 = vunpack.c.h.b16 %v1380
    %v1510 = vunpack.c.l.b16 %v1381
    %v1511 = vunpack.c.h.b16 %v1381
    %v1512 = vunpack.c.l.b16 %v1382
    %v1513 = vunpack.c.h.b16 %v1382
    %v1514 = vunpack.c.l.b16 %v1383
    %v1515 = vunpack.c.h.b16 %v1383
    %v1516 = vunpack.c.l.b16 %v1384
    %v1517 = vunpack.c.h.b16 %v1384
    %v1518 = vunpack.c.l.b16 %v1385
    %v1519 = vunpack.c.h.b16 %v1385
    %v1520 = vunpack.c.l.b16 %v1386
    %v1521 = vunpack.c.h.b16 %v1386
    %v1522 = vunpack.c.l.b16 %v1387
    %v1523 = vunpack.c.h.b16 %v1387
    %v1524 = vunpack.c.l.b16 %v1388
    %v1525 = vunpack.c.h.b16 %v1388
    %v1526 = vunpack.c.l.b16 %v1389
    %v1527 = vunpack.c.h.b16 %v1389
    %v1528 = vunpack.c.l.b16 %v1390
    %v1529 = vunpack.c.h.b16 %v1390
    %v1530 = vunpack.c.l.b16 %v1391
    %v1531 = vunpack.c.h.b16 %v1391
    %v1532 = vunpack.c.l.b16 %v1392
    %v1533 = vunpack.c.h.b16 %v1392
    %v1534 = vunpack.c.l.b16 %v1393
    %v1535 = vunpack.c.h.b16 %v1393
    %v1536 = vunpack.c.l.b16 %v1394
    %v1537 = vunpack.c.h.b16 %v1394
    %v1538 = vunpack.c.l.b16 %v1395
    %v1539 = vunpack.c.h.b16 %v1395
    %v1540 = vunpack.c.l.b16 %v1396
    %v1541 = vunpack.c.h.b16 %v1396
    %v1542 = vunpack.c.l.b16 %v1397
    %v1543 = vunpack.c.h.b16 %v1397
    %v1544 = vunpack.c.l.b16 %v1398
    %v1545 = vunpack.c.h.b16 %v1398
    %v1546 = vunpack.c.l.b16 %v1399
    %v1547 = vunpack.c.h.b16 %v1399
    %v1548 = vunpack.c.l.b16 %v1400
    %v1549 = vunpack.c.h.b16 %v1400
    %v1550 = vunpack.c.l.b16 %v1401
    %v1551 = vunpack.c.h.b16 %v1401
    %v1552 = vunpack.c.l.b16 %v1402
    %v1553 = vunpack.c.h.b16 %v1402
    %v1554 = vunpack.c.l.b16 %v1403
    %v1555 = vunpack.c.h.b16 %v1403
    %v1556 = vunpack.c.l.b16 %v1404
    %v1557 = vunpack.c.h.b16 %v1404
    %v1558 = vunpack.c.l.b16 %v1405
    %v1559 = vunpack.c.h.b16 %v1405
    %v1560 = vunpack.c.l.b16 %v1406
    %v1561 = vunpack.c.h.b16 %v1406
    %v1562 = vunpack.c.l.b16 %v1407
    %v1563 = vunpack.c.h.b16 %v1407
    %v1564 = vunpack.c.l.b16 %v1408
    %v1565 = vunpack.c.h.b16 %v1408
    %v1566 = vunpack.c.l.b16 %v1409
    %v1567 = vunpack.c.h.b16 %v1409
    %v1568 = vunpack.c.l.b16 %v1410
    %v1569 = vunpack.c.h.b16 %v1410
    %v1570 = vunpack.c.l.b16 %v1411
    %v1571 = vunpack.c.h.b16 %v1411
    %v1572 = vunpack.c.l.b16 %v1412
    %v1573 = vunpack.c.h.b16 %v1412
    %v1574 = vunpack.c.l.b16 %v1413
    %v1575 = vunpack.c.h.b16 %v1413
    %v1576 = vunpack.c.l.b16 %v1414
    %v1577 = vunpack.c.h.b16 %v1414
    %v1578 = vunpack.c.l.b16 %v1415
    %v1579 = vunpack.c.h.b16 %v1415
    %v1580 = vunpack.c.l.b16 %v1416
    %v1581 = vunpack.c.h.b16 %v1416
    %v1582 = vunpack.c.l.b16 %v1417
    %v1583 = vunpack.c.h.b16 %v1417
    %v1584 = vunpack.c.l.b16 %v1418
    %v1585 = vunpack.c.h.b16 %v1418
    %v1586 = vunpack.c.l.b16 %v1419
    %v1587 = vunpack.c.h.b16 %v1419
    %v1588 = vunpack.c.l.b16 %v1420
    %v1589 = vunpack.c.h.b16 %v1420
    %v1590 = vunpack.c.l.b16 %v1421
    %v1591 = vunpack.c.h.b16 %v1421
    %v1592 = vunpack.c.l.b16 %v1422
    %v1593 = vunpack.c.h.b16 %v1422
    %v1594 = vunpack.c.l.b16 %v1423
    %v1595 = vunpack.c.h.b16 %v1423
    %v1596 = vunpack.c.l.b16 %v1424
    %v1597 = vunpack.c.h.b16 %v1424
    %v1598 = vunpack.c.l.b16 %v1425
    %v1599 = vunpack.c.h.b16 %v1425
    %v1600 = vunpack.c.l.b16 %v1426
    %v1601 = vunpack.c.h.b16 %v1426
    %v1602 = vunpack.c.l.b16 %v1427
    %v1603 = vunpack.c.h.b16 %v1427
    %v1604 = vunpack.c.l.b16 %v1428
    %v1605 = vunpack.c.h.b16 %v1428
    %v1606 = vunpack.c.l.b16 %v1429
    %v1607 = vunpack.c.h.b16 %v1429
    %v1608 = vunpack.c.l.b16 %v1430
    %v1609 = vunpack.c.h.b16 %v1430
    %v1610 = vunpack.c.l.b16 %v1431
    %v1611 = vunpack.c.h.b16 %v1431
    %v1612 = vunpack.c.l.b16 %v1432
    %v1613 = vunpack.c.h.b16 %v1432
    %v1614 = vunpack.c.l.b16 %v1433
    %v1615 = vunpack.c.h.b16 %v1433
    %v1616 = vunpack.c.l.b16 %v1434
    %v1617 = vunpack.c.h.b16 %v1434
    %v1618 = vunpack.c.l.b16 %v1435
    %v1619 = vunpack.c.h.b16 %v1435
    %v1620 = vunpack.c.l.b16 %v1436
    %v1621 = vunpack.c.h.b16 %v1436
    %v1622 = vunpack.c.l.b16 %v1437
    %v1623 = vunpack.c.h.b16 %v1437
    %v1624 = vunpack.c.l.b16 %v1438
    %v1625 = vunpack.c.h.b16 %v1438
    %v1626 = vunpack.c.l.b16 %v1439
    %v1627 = vunpack.c.h.b16 %v1439
    %v1628 = vunpack.c.l.b16 %v1440
    %v1629 = vunpack.c.h.b16 %v1440
    %v1630 = vunpack.c.l.b16 %v1441
    %v1631 = vunpack.c.h.b16 %v1441
    %v1632 = vunpack.c.l.b16 %v1442
    %v1633 = vunpack.c.h.b16 %v1442
    %v1634 = vunpack.c.l.b16 %v1443
    %v1635 = vunpack.c.h.b16 %v1443
    %v1636 = vpack.c.b16 %v1508, %v1508
    %v1637 = vpack.c.b16 %v1509, %v1509
    %v1638 = vpack.c.b16 %v1510, %v1510
    %v1639 = vpack.c.b16 %v1511, %v1511
    %v1640 = vpack.c.b16 %v1512, %v1512
    %v1641 = vpack.c.b16 %v1513, %v1513
    %v1642 = vpack.c.b16 %v1514, %v1514
    %v1643 = vpack.c.b16 %v1515, %v1515
    %v1644 = vpack.c.b16 %v1516, %v1516
    %v1645 = vpack.c.b16 %v1517, %v1517
    %v1646 = vpack.c.b16 %v1518, %v1518
    %v1647 = vpack.c.b16 %v1519, %v1519
    %v1648 = vpack.c.b16 %v1520, %v1520
    %v1649 = vpack.c.b16 %v1521, %v1521
    %v1650 = vpack.c.b16 %v1522, %v1522
    %v1651 = vpack.c.b16 %v1523, %v1523
    %v1652 = vpack.c.b16 %v1524, %v1524
    %v1653 = vpack.c.b16 %v1525, %v1525
    %v1654 = vpack.c.b16 %v1526, %v1526
    %v1655 = vpack.c.b16 %v1527, %v1527
    %v1656 = vpack.c.b16 %v1528, %v1528
    %v1657 = vpack.c.b16 %v1529, %v1529
    %v1658 = vpack.c.b16 %v1530, %v1530
    %v1659 = vpack.c.b16 %v1531, %v1531
    %v1660 = vpack.c.b16 %v1532, %v1532
    %v1661 = vpack.c.b16 %v1533, %v1533
    %v1662 = vpack.c.b16 %v1534, %v1534
    %v1663 = vpack.c.b16 %v1535, %v1535
    %v1664 = vpack.c.b16 %v1536, %v1536
    %v1665 = vpack.c.b16 %v1537, %v1537
    %v1666 = vpack.c.b16 %v1538, %v1538
    %v1667 = vpack.c.b16 %v1539, %v1539
    %v1668 = vpack.c.b16 %v1540, %v1540
    %v1669 = vpack.c.b16 %v1541, %v1541
    %v1670 = vpack.c.b16 %v1542, %v1542
    %v1671 = vpack.c.b16 %v1543, %v1543
    %v1672 = vpack.c.b16 %v1544, %v1544
    %v1673 = vpack.c.b16 %v1545, %v1545
    %v1674 = vpack.c.b16 %v1546, %v1546
    %v1675 = vpack.c.b16 %v1547, %v1547
    %v1676 = vpack.c.b16 %v1548, %v1548
    %v1677 = vpack.c.b16 %v1549, %v1549
    %v1678 = vpack.c.b16 %v1550, %v1550
    %v1679 = vpack.c.b16 %v1551, %v1551
    %v1680 = vpack.c.b16 %v1552, %v1552
    %v1681 = vpack.c.b16 %v1553, %v1553
    %v1682 = vpack.c.b16 %v1554, %v1554
    %v1683 = vpack.c.b16 %v1555, %v1555
    %v1684 = vpack.c.b16 %v1556, %v1556
    %v1685 = vpack.c.b16 %v1557, %v1557
    %v1686 = vpack.c.b16 %v1558, %v1558
    %v1687 = vpack.c.b16 %v1559, %v1559
    %v1688 = vpack.c.b16 %v1560, %v1560
    %v1689 = vpack.c.b16 %v1561, %v1561
    %v1690 = vpack.c.b16 %v1562, %v1562
    %v1691 = vpack.c.b16 %v1563, %v1563
    %v1692 = vpack.c.b16 %v1564, %v1564
    %v1693 = vpack.c.b16 %v1565, %v1565
    %v1694 = vpack.c.b16 %v1566, %v1566
    %v1695 = vpack.c.b16 %v1567, %v1567
    %v1696 = vpack.c.b16 %v1568, %v1568
    %v1697 = vpack.c.b16 %v1569, %v1569
    %v1698 = vpack.c.b16 %v1570, %v1570
    %v1699 = vpack.c.b16 %v1571, %v1571
    %v1700 = vpack.c.b16 %v1572, %v1572
    %v1701 = vpack.c.b16 %v1573, %v1573
    %v1702 = vpack.c.b16 %v1574, %v1574
    %v1703 = vpack.c.b16 %v1575, %v1575
    %v1704 = vpack.c.b16 %v1576, %v1576
    %v1705 = vpack.c.b16 %v1577, %v1577
    %v1706 = vpack.c.b16 %v1578, %v1578
    %v1707 = vpack.c.b16 %v1579, %v1579
    %v1708 = vpack.c.b16 %v1580, %v1580
    %v1709 = vpack.c.b16 %v1581, %v1581
    %v1710 = vpack.c.b16 %v1582, %v1582
    %v1711 = vpack.c.b16 %v1583, %v1583
    %v1712 = vpack.c.b16 %v1584, %v1584
    %v1713 = vpack.c.b16 %v1585, %v1585
    %v1714 = vpack.c.b16 %v1586, %v1586
    %v1715 = vpack.c.b16 %v1587, %v1587
    %v1716 = vpack.c.b16 %v1588, %v1588
    %v1717 = vpack.c.b16 %v1589, %v1589
    %v1718 = vpack.c.b16 %v1590, %v1590
    %v1719 = vpack.c.b16 %v1591, %v1591
    %v1720 = vpack.c.b16 %v1592, %v1592
    %v1721 = vpack.c.b16 %v1593, %v1593
    %v1722 = vpack.c.b16 %v1594, %v1594
    %v1723 = vpack.c.b16 %v1595, %v1595
    %v1724 = vpack.c.b16 %v1596, %v1596
    %v1725 = vpack.c.b16 %v1597, %v1597
    %v1726 = vpack.c.b16 %v1598, %v1598
    %v1727 = vpack.c.b16 %v1599, %v1599
    %v1728 = vpack.c.b16 %v1600, %v1600
    %v1729 = vpack.c.b16 %v1601, %v1601
    %v1730 = vpack.c.b16 %v1602, %v1602
    %v1731 = vpack.c.b16 %v1603, %v1603
    %v1732 = vpack.c.b16 %v1604, %v1604
    %v1733 = vpack.c.b16 %v1605, %v1605
    %v1734 = vpack.c.b16 %v1606, %v1606
    %v1735 = vpack.c.b16 %v1607, %v1607
    %v1736 = vpack.c.b16 %v1608, %v1608
    %v1737 = vpack.c.b16 %v1609, %v1609
    %v1738 = vpack.c.b16 %v1610, %v1610
    %v1739 = vpack.c.b16 %v1611, %v1611
    %v1740 = vpack.c.b16 %v1612, %v1612
    %v1741 = vpack.c.b16 %v1613, %v1613
    %v1742 = vpack.c.b16 %v1614, %v1614
    %v1743 = vpack.c.b16 %v1615, %v1615
    %v1744 = vpack.c.b16 %v1616, %v1616
    %v1745 = vpack.c.b16 %v1617, %v1617
    %v1746 = vpack.c.b16 %v1618, %v1618
    %v1747 = vpack.c.b16 %v1619, %v1619
    %v1748 = vpack.c.b16 %v1620, %v1620
    %v1749 = vpack.c.b16 %v1621, %v1621
    %v1750 = vpack.c.b16 %v1622, %v1622
    %v1751 = vpack.c.b16 %v1623, %v1623
    %v1752 = vpack.c.b16 %v1624, %v1624
    %v1753 = vpack.c.b16 %v1625, %v1625
    %v1754 = vpack.c.b16 %v1626, %v1626
    %v1755 = vpack.c.b16 %v1627, %v1627
    %v1756 = vpack.c.b16 %v1628, %v1628
    %v1757 = vpack.c.b16 %v1629, %v1629
    %v1758 = vpack.c.b16 %v1630, %v1630
    %v1759 = vpack.c.b16 %v1631, %v1631
    %v1760 = vpack.c.b16 %v1632, %v1632
    %v1761 = vpack.c.b16 %v1633, %v1633
    %v1762 = vpack.c.b16 %v1634, %v1634
    %v1763 = vpack.c.b16 %v1635, %v1635
    %1892 = vst [vmem:[#allocation2] sm:$0xf] %v1636
    %1893 = vst [vmem:[#allocation2 + $0x4] sm:$0xf] %v1637
    %1894 = vst [vmem:[#allocation2 + $0x8] sm:$0xf] %v1638
    %1895 = vst [vmem:[#allocation2 + $0xc] sm:$0xf] %v1639
    %1896 = vst [vmem:[#allocation2 + $0x10] sm:$0xf] %v1640
    %1897 = vst [vmem:[#allocation2 + $0x14] sm:$0xf] %v1641
    %1898 = vst [vmem:[#allocation2 + $0x18] sm:$0xf] %v1642
    %1899 = vst [vmem:[#allocation2 + $0x1c] sm:$0xf] %v1643
    %1900 = vst [vmem:[#allocation2 + $0x20] sm:$0xf] %v1644
    %1901 = vst [vmem:[#allocation2 + $0x24] sm:$0xf] %v1645
    %1902 = vst [vmem:[#allocation2 + $0x28] sm:$0xf] %v1646
    %1903 = vst [vmem:[#allocation2 + $0x2c] sm:$0xf] %v1647
    %1904 = vst [vmem:[#allocation2 + $0x30] sm:$0xf] %v1648
    %1905 = vst [vmem:[#allocation2 + $0x34] sm:$0xf] %v1649
    %1906 = vst [vmem:[#allocation2 + $0x38] sm:$0xf] %v1650
    %1907 = vst [vmem:[#allocation2 + $0x3c] sm:$0xf] %v1651
    %1908 = vst [vmem:[#allocation2 + $0x40] sm:$0xf] %v1652
    %1909 = vst [vmem:[#allocation2 + $0x44] sm:$0xf] %v1653
    %1910 = vst [vmem:[#allocation2 + $0x48] sm:$0xf] %v1654
    %1911 = vst [vmem:[#allocation2 + $0x4c] sm:$0xf] %v1655
    %1912 = vst [vmem:[#allocation2 + $0x50] sm:$0xf] %v1656
    %1913 = vst [vmem:[#allocation2 + $0x54] sm:$0xf] %v1657
    %1914 = vst [vmem:[#allocation2 + $0x58] sm:$0xf] %v1658
    %1915 = vst [vmem:[#allocation2 + $0x5c] sm:$0xf] %v1659
    %1916 = vst [vmem:[#allocation2 + $0x60] sm:$0xf] %v1660
    %1917 = vst [vmem:[#allocation2 + $0x64] sm:$0xf] %v1661
    %1918 = vst [vmem:[#allocation2 + $0x68] sm:$0xf] %v1662
    %1919 = vst [vmem:[#allocation2 + $0x6c] sm:$0xf] %v1663
    %1920 = vst [vmem:[#allocation2 + $0x70] sm:$0xf] %v1664
    %1921 = vst [vmem:[#allocation2 + $0x74] sm:$0xf] %v1665
    %1922 = vst [vmem:[#allocation2 + $0x78] sm:$0xf] %v1666
    %1923 = vst [vmem:[#allocation2 + $0x7c] sm:$0xf] %v1667
    %1924 = vst [vmem:[#allocation2 + $0x80] sm:$0xf] %v1668
    %1925 = vst [vmem:[#allocation2 + $0x84] sm:$0xf] %v1669
    %1926 = vst [vmem:[#allocation2 + $0x88] sm:$0xf] %v1670
    %1927 = vst [vmem:[#allocation2 + $0x8c] sm:$0xf] %v1671
    %1928 = vst [vmem:[#allocation2 + $0x90] sm:$0xf] %v1672
    %1929 = vst [vmem:[#allocation2 + $0x94] sm:$0xf] %v1673
    %1930 = vst [vmem:[#allocation2 + $0x98] sm:$0xf] %v1674
    %1931 = vst [vmem:[#allocation2 + $0x9c] sm:$0xf] %v1675
    %1932 = vst [vmem:[#allocation2 + $0xa0] sm:$0xf] %v1676
    %1933 = vst [vmem:[#allocation2 + $0xa4] sm:$0xf] %v1677
    %1934 = vst [vmem:[#allocation2 + $0xa8] sm:$0xf] %v1678
    %1935 = vst [vmem:[#allocation2 + $0xac] sm:$0xf] %v1679
    %1936 = vst [vmem:[#allocation2 + $0xb0] sm:$0xf] %v1680
    %1937 = vst [vmem:[#allocation2 + $0xb4] sm:$0xf] %v1681
    %1938 = vst [vmem:[#allocation2 + $0xb8] sm:$0xf] %v1682
    %1939 = vst [vmem:[#allocation2 + $0xbc] sm:$0xf] %v1683
    %1940 = vst [vmem:[#allocation2 + $0xc0] sm:$0xf] %v1684
    %1941 = vst [vmem:[#allocation2 + $0xc4] sm:$0xf] %v1685
    %1942 = vst [vmem:[#allocation2 + $0xc8] sm:$0xf] %v1686
    %1943 = vst [vmem:[#allocation2 + $0xcc] sm:$0xf] %v1687
    %1944 = vst [vmem:[#allocation2 + $0xd0] sm:$0xf] %v1688
    %1945 = vst [vmem:[#allocation2 + $0xd4] sm:$0xf] %v1689
    %1946 = vst [vmem:[#allocation2 + $0xd8] sm:$0xf] %v1690
    %1947 = vst [vmem:[#allocation2 + $0xdc] sm:$0xf] %v1691
    %1948 = vst [vmem:[#allocation2 + $0xe0] sm:$0xf] %v1692
    %1949 = vst [vmem:[#allocation2 + $0xe4] sm:$0xf] %v1693
    %1950 = vst [vmem:[#allocation2 + $0xe8] sm:$0xf] %v1694
    %1951 = vst [vmem:[#allocation2 + $0xec] sm:$0xf] %v1695
    %1952 = vst [vmem:[#allocation2 + $0xf0] sm:$0xf] %v1696
    %1953 = vst [vmem:[#allocation2 + $0xf4] sm:$0xf] %v1697
    %1954 = vst [vmem:[#allocation2 + $0xf8] sm:$0xf] %v1698
    %1955 = vst [vmem:[#allocation2 + $0xfc] sm:$0xf] %v1699
    %1956 = vst [vmem:[#allocation2 + $0x100] sm:$0xf] %v1700
    %1957 = vst [vmem:[#allocation2 + $0x104] sm:$0xf] %v1701
    %1958 = vst [vmem:[#allocation2 + $0x108] sm:$0xf] %v1702
    %1959 = vst [vmem:[#allocation2 + $0x10c] sm:$0xf] %v1703
    %1960 = vst [vmem:[#allocation2 + $0x110] sm:$0xf] %v1704
    %1961 = vst [vmem:[#allocation2 + $0x114] sm:$0xf] %v1705
    %1962 = vst [vmem:[#allocation2 + $0x118] sm:$0xf] %v1706
    %1963 = vst [vmem:[#allocation2 + $0x11c] sm:$0xf] %v1707
    %1964 = vst [vmem:[#allocation2 + $0x120] sm:$0xf] %v1708
    %1965 = vst [vmem:[#allocation2 + $0x124] sm:$0xf] %v1709
    %1966 = vst [vmem:[#allocation2 + $0x128] sm:$0xf] %v1710
    %1967 = vst [vmem:[#allocation2 + $0x12c] sm:$0xf] %v1711
    %1968 = vst [vmem:[#allocation2 + $0x130] sm:$0xf] %v1712
    %1969 = vst [vmem:[#allocation2 + $0x134] sm:$0xf] %v1713
    %1970 = vst [vmem:[#allocation2 + $0x138] sm:$0xf] %v1714
    %1971 = vst [vmem:[#allocation2 + $0x13c] sm:$0xf] %v1715
    %1972 = vst [vmem:[#allocation2 + $0x140] sm:$0xf] %v1716
    %1973 = vst [vmem:[#allocation2 + $0x144] sm:$0xf] %v1717
    %1974 = vst [vmem:[#allocation2 + $0x148] sm:$0xf] %v1718
    %1975 = vst [vmem:[#allocation2 + $0x14c] sm:$0xf] %v1719
    %1976 = vst [vmem:[#allocation2 + $0x150] sm:$0xf] %v1720
    %1977 = vst [vmem:[#allocation2 + $0x154] sm:$0xf] %v1721
    %1978 = vst [vmem:[#allocation2 + $0x158] sm:$0xf] %v1722
    %1979 = vst [vmem:[#allocation2 + $0x15c] sm:$0xf] %v1723
    %1980 = vst [vmem:[#allocation2 + $0x160] sm:$0xf] %v1724
    %1981 = vst [vmem:[#allocation2 + $0x164] sm:$0xf] %v1725
    %1982 = vst [vmem:[#allocation2 + $0x168] sm:$0xf] %v1726
    %1983 = vst [vmem:[#allocation2 + $0x16c] sm:$0xf] %v1727
    %1984 = vst [vmem:[#allocation2 + $0x170] sm:$0xf] %v1728
    %1985 = vst [vmem:[#allocation2 + $0x174] sm:$0xf] %v1729
    %1986 = vst [vmem:[#allocation2 + $0x178] sm:$0xf] %v1730
    %1987 = vst [vmem:[#allocation2 + $0x17c] sm:$0xf] %v1731
    %1988 = vst [vmem:[#allocation2 + $0x180] sm:$0xf] %v1732
    %1989 = vst [vmem:[#allocation2 + $0x184] sm:$0xf] %v1733
    %1990 = vst [vmem:[#allocation2 + $0x188] sm:$0xf] %v1734
    %1991 = vst [vmem:[#allocation2 + $0x18c] sm:$0xf] %v1735
    %1992 = vst [vmem:[#allocation2 + $0x190] sm:$0xf] %v1736
    %1993 = vst [vmem:[#allocation2 + $0x194] sm:$0xf] %v1737
    %1994 = vst [vmem:[#allocation2 + $0x198] sm:$0xf] %v1738
    %1995 = vst [vmem:[#allocation2 + $0x19c] sm:$0xf] %v1739
    %1996 = vst [vmem:[#allocation2 + $0x1a0] sm:$0xf] %v1740
    %1997 = vst [vmem:[#allocation2 + $0x1a4] sm:$0xf] %v1741
    %1998 = vst [vmem:[#allocation2 + $0x1a8] sm:$0xf] %v1742
    %1999 = vst [vmem:[#allocation2 + $0x1ac] sm:$0xf] %v1743
    %2000 = vst [vmem:[#allocation2 + $0x1b0] sm:$0xf] %v1744
    %2001 = vst [vmem:[#allocation2 + $0x1b4] sm:$0xf] %v1745
    %2002 = vst [vmem:[#allocation2 + $0x1b8] sm:$0xf] %v1746
    %2003 = vst [vmem:[#allocation2 + $0x1bc] sm:$0xf] %v1747
    %2004 = vst [vmem:[#allocation2 + $0x1c0] sm:$0xf] %v1748
    %2005 = vst [vmem:[#allocation2 + $0x1c4] sm:$0xf] %v1749
    %2006 = vst [vmem:[#allocation2 + $0x1c8] sm:$0xf] %v1750
    %2007 = vst [vmem:[#allocation2 + $0x1cc] sm:$0xf] %v1751
    %2008 = vst [vmem:[#allocation2 + $0x1d0] sm:$0xf] %v1752
    %2009 = vst [vmem:[#allocation2 + $0x1d4] sm:$0xf] %v1753
    %2010 = vst [vmem:[#allocation2 + $0x1d8] sm:$0xf] %v1754
    %2011 = vst [vmem:[#allocation2 + $0x1dc] sm:$0xf] %v1755
    %2012 = vst [vmem:[#allocation2 + $0x1e0] sm:$0xf] %v1756
    %2013 = vst [vmem:[#allocation2 + $0x1e4] sm:$0xf] %v1757
    %2014 = vst [vmem:[#allocation2 + $0x1e8] sm:$0xf] %v1758
    %2015 = vst [vmem:[#allocation2 + $0x1ec] sm:$0xf] %v1759
    %2016 = vst [vmem:[#allocation2 + $0x1f0] sm:$0xf] %v1760
    %2017 = vst [vmem:[#allocation2 + $0x1f4] sm:$0xf] %v1761
    %2018 = vst [vmem:[#allocation2 + $0x1f8] sm:$0xf] %v1762
    %2019 = vst [vmem:[#allocation2 + $0x1fc] sm:$0xf] %v1763
    %v2020 = vld [vmem:[%s1] sm:$0xff]
    %v2021 = vld [vmem:[%s1 + $0x8] sm:$0xff]
    %v2022 = vld [vmem:[%s1 + $0x10] sm:$0xff]
    %v2023 = vld [vmem:[%s1 + $0x18] sm:$0xff]
    %v2024 = vld [vmem:[%s1 + $0x20] sm:$0xff]
    %v2025 = vld [vmem:[%s1 + $0x28] sm:$0xff]
    %v2026 = vld [vmem:[%s1 + $0x30] sm:$0xff]
    %v2027 = vld [vmem:[%s1 + $0x38] sm:$0xff]
    %v2028 = vld [vmem:[%s1 + $0x40] sm:$0xff]
    %v2029 = vld [vmem:[%s1 + $0x48] sm:$0xff]
    %v2030 = vld [vmem:[%s1 + $0x50] sm:$0xff]
    %v2031 = vld [vmem:[%s1 + $0x58] sm:$0xff]
    %v2032 = vld [vmem:[%s1 + $0x60] sm:$0xff]
    %v2033 = vld [vmem:[%s1 + $0x68] sm:$0xff]
    %v2034 = vld [vmem:[%s1 + $0x70] sm:$0xff]
    %v2035 = vld [vmem:[%s1 + $0x78] sm:$0xff]
    %v2036 = vld [vmem:[%s1 + $0x80] sm:$0xff]
    %v2037 = vld [vmem:[%s1 + $0x88] sm:$0xff]
    %v2038 = vld [vmem:[%s1 + $0x90] sm:$0xff]
    %v2039 = vld [vmem:[%s1 + $0x98] sm:$0xff]
    %v2040 = vld [vmem:[%s1 + $0xa0] sm:$0xff]
    %v2041 = vld [vmem:[%s1 + $0xa8] sm:$0xff]
    %v2042 = vld [vmem:[%s1 + $0xb0] sm:$0xff]
    %v2043 = vld [vmem:[%s1 + $0xb8] sm:$0xff]
    %v2044 = vld [vmem:[%s1 + $0xc0] sm:$0xff]
    %v2045 = vld [vmem:[%s1 + $0xc8] sm:$0xff]
    %v2046 = vld [vmem:[%s1 + $0xd0] sm:$0xff]
    %v2047 = vld [vmem:[%s1 + $0xd8] sm:$0xff]
    %v2048 = vld [vmem:[%s1 + $0xe0] sm:$0xff]
    %v2049 = vld [vmem:[%s1 + $0xe8] sm:$0xff]
    %v2050 = vld [vmem:[%s1 + $0xf0] sm:$0xff]
    %v2051 = vld [vmem:[%s1 + $0xf8] sm:$0xff]
    %v2052 = vld [vmem:[%s1 + $0x100] sm:$0xff]
    %v2053 = vld [vmem:[%s1 + $0x108] sm:$0xff]
    %v2054 = vld [vmem:[%s1 + $0x110] sm:$0xff]
    %v2055 = vld [vmem:[%s1 + $0x118] sm:$0xff]
    %v2056 = vld [vmem:[%s1 + $0x120] sm:$0xff]
    %v2057 = vld [vmem:[%s1 + $0x128] sm:$0xff]
    %v2058 = vld [vmem:[%s1 + $0x130] sm:$0xff]
    %v2059 = vld [vmem:[%s1 + $0x138] sm:$0xff]
    %v2060 = vld [vmem:[%s1 + $0x140] sm:$0xff]
    %v2061 = vld [vmem:[%s1 + $0x148] sm:$0xff]
    %v2062 = vld [vmem:[%s1 + $0x150] sm:$0xff]
    %v2063 = vld [vmem:[%s1 + $0x158] sm:$0xff]
    %v2064 = vld [vmem:[%s1 + $0x160] sm:$0xff]
    %v2065 = vld [vmem:[%s1 + $0x168] sm:$0xff]
    %v2066 = vld [vmem:[%s1 + $0x170] sm:$0xff]
    %v2067 = vld [vmem:[%s1 + $0x178] sm:$0xff]
    %v2068 = vld [vmem:[%s1 + $0x180] sm:$0xff]
    %v2069 = vld [vmem:[%s1 + $0x188] sm:$0xff]
    %v2070 = vld [vmem:[%s1 + $0x190] sm:$0xff]
    %v2071 = vld [vmem:[%s1 + $0x198] sm:$0xff]
    %v2072 = vld [vmem:[%s1 + $0x1a0] sm:$0xff]
    %v2073 = vld [vmem:[%s1 + $0x1a8] sm:$0xff]
    %v2074 = vld [vmem:[%s1 + $0x1b0] sm:$0xff]
    %v2075 = vld [vmem:[%s1 + $0x1b8] sm:$0xff]
    %v2076 = vld [vmem:[%s1 + $0x1c0] sm:$0xff]
    %v2077 = vld [vmem:[%s1 + $0x1c8] sm:$0xff]
    %v2078 = vld [vmem:[%s1 + $0x1d0] sm:$0xff]
    %v2079 = vld [vmem:[%s1 + $0x1d8] sm:$0xff]
    %v2080 = vld [vmem:[%s1 + $0x1e0] sm:$0xff]
    %v2081 = vld [vmem:[%s1 + $0x1e8] sm:$0xff]
    %v2082 = vld [vmem:[%s1 + $0x1f0] sm:$0xff]
    %v2083 = vld [vmem:[%s1 + $0x1f8] sm:$0xff]
    %v2084 = vld [vmem:[%s1 + $0x200] sm:$0xff]
    %v2085 = vld [vmem:[%s1 + $0x208] sm:$0xff]
    %v2086 = vld [vmem:[%s1 + $0x210] sm:$0xff]
    %v2087 = vld [vmem:[%s1 + $0x218] sm:$0xff]
    %v2088 = vld [vmem:[%s1 + $0x220] sm:$0xff]
    %v2089 = vld [vmem:[%s1 + $0x228] sm:$0xff]
    %v2090 = vld [vmem:[%s1 + $0x230] sm:$0xff]
    %v2091 = vld [vmem:[%s1 + $0x238] sm:$0xff]
    %v2092 = vld [vmem:[%s1 + $0x240] sm:$0xff]
    %v2093 = vld [vmem:[%s1 + $0x248] sm:$0xff]
    %v2094 = vld [vmem:[%s1 + $0x250] sm:$0xff]
    %v2095 = vld [vmem:[%s1 + $0x258] sm:$0xff]
    %v2096 = vld [vmem:[%s1 + $0x260] sm:$0xff]
    %v2097 = vld [vmem:[%s1 + $0x268] sm:$0xff]
    %v2098 = vld [vmem:[%s1 + $0x270] sm:$0xff]
    %v2099 = vld [vmem:[%s1 + $0x278] sm:$0xff]
    %v2100 = vld [vmem:[%s1 + $0x280] sm:$0xff]
    %v2101 = vld [vmem:[%s1 + $0x288] sm:$0xff]
    %v2102 = vld [vmem:[%s1 + $0x290] sm:$0xff]
    %v2103 = vld [vmem:[%s1 + $0x298] sm:$0xff]
    %v2104 = vld [vmem:[%s1 + $0x2a0] sm:$0xff]
    %v2105 = vld [vmem:[%s1 + $0x2a8] sm:$0xff]
    %v2106 = vld [vmem:[%s1 + $0x2b0] sm:$0xff]
    %v2107 = vld [vmem:[%s1 + $0x2b8] sm:$0xff]
    %v2108 = vld [vmem:[%s1 + $0x2c0] sm:$0xff]
    %v2109 = vld [vmem:[%s1 + $0x2c8] sm:$0xff]
    %v2110 = vld [vmem:[%s1 + $0x2d0] sm:$0xff]
    %v2111 = vld [vmem:[%s1 + $0x2d8] sm:$0xff]
    %v2112 = vld [vmem:[%s1 + $0x2e0] sm:$0xff]
    %v2113 = vld [vmem:[%s1 + $0x2e8] sm:$0xff]
    %v2114 = vld [vmem:[%s1 + $0x2f0] sm:$0xff]
    %v2115 = vld [vmem:[%s1 + $0x2f8] sm:$0xff]
    %v2116 = vld [vmem:[%s1 + $0x300] sm:$0xff]
    %v2117 = vld [vmem:[%s1 + $0x308] sm:$0xff]
    %v2118 = vld [vmem:[%s1 + $0x310] sm:$0xff]
    %v2119 = vld [vmem:[%s1 + $0x318] sm:$0xff]
    %v2120 = vld [vmem:[%s1 + $0x320] sm:$0xff]
    %v2121 = vld [vmem:[%s1 + $0x328] sm:$0xff]
    %v2122 = vld [vmem:[%s1 + $0x330] sm:$0xff]
    %v2123 = vld [vmem:[%s1 + $0x338] sm:$0xff]
    %v2124 = vld [vmem:[%s1 + $0x340] sm:$0xff]
    %v2125 = vld [vmem:[%s1 + $0x348] sm:$0xff]
    %v2126 = vld [vmem:[%s1 + $0x350] sm:$0xff]
    %v2127 = vld [vmem:[%s1 + $0x358] sm:$0xff]
    %v2128 = vld [vmem:[%s1 + $0x360] sm:$0xff]
    %v2129 = vld [vmem:[%s1 + $0x368] sm:$0xff]
    %v2130 = vld [vmem:[%s1 + $0x370] sm:$0xff]
    %v2131 = vld [vmem:[%s1 + $0x378] sm:$0xff]
    %v2132 = vld [vmem:[%s1 + $0x380] sm:$0xff]
    %v2133 = vld [vmem:[%s1 + $0x388] sm:$0xff]
    %v2134 = vld [vmem:[%s1 + $0x390] sm:$0xff]
    %v2135 = vld [vmem:[%s1 + $0x398] sm:$0xff]
    %v2136 = vld [vmem:[%s1 + $0x3a0] sm:$0xff]
    %v2137 = vld [vmem:[%s1 + $0x3a8] sm:$0xff]
    %v2138 = vld [vmem:[%s1 + $0x3b0] sm:$0xff]
    %v2139 = vld [vmem:[%s1 + $0x3b8] sm:$0xff]
    %v2140 = vld [vmem:[%s1 + $0x3c0] sm:$0xff]
    %v2141 = vld [vmem:[%s1 + $0x3c8] sm:$0xff]
    %v2142 = vld [vmem:[%s1 + $0x3d0] sm:$0xff]
    %v2143 = vld [vmem:[%s1 + $0x3d8] sm:$0xff]
    %v2144 = vld [vmem:[%s1 + $0x3e0] sm:$0xff]
    %v2145 = vld [vmem:[%s1 + $0x3e8] sm:$0xff]
    %v2146 = vld [vmem:[%s1 + $0x3f0] sm:$0xff]
    %v2147 = vld [vmem:[%s1 + $0x3f8] sm:$0xff]
    %v2148 = vld [vmem:[%s4] sm:$0x1]
    %v2150 = vlaneseq
    %v2151 = vshrl.u32 %v2150, 7
    %v2152 = vsub.s32 0, %v2151
    %v2153 = vrot.slane %v2148, %v2152
    %v2155 = vadd.f32 %v616, %v2153
    %v2156 = vadd.f32 %v622, %v2153
    %v2157 = vadd.f32 %v628, %v2153
    %v2158 = vadd.f32 %v634, %v2153
    %v2159 = vadd.f32 %v640, %v2153
    %v2160 = vadd.f32 %v646, %v2153
    %v2161 = vadd.f32 %v652, %v2153
    %v2162 = vadd.f32 %v658, %v2153
    %v2163 = vadd.f32 %v664, %v2153
    %v2164 = vadd.f32 %v670, %v2153
    %v2165 = vadd.f32 %v676, %v2153
    %v2166 = vadd.f32 %v682, %v2153
    %v2167 = vadd.f32 %v688, %v2153
    %v2168 = vadd.f32 %v694, %v2153
    %v2169 = vadd.f32 %v700, %v2153
    %v2170 = vadd.f32 %v706, %v2153
    %v2171 = vadd.f32 %v712, %v2153
    %v2172 = vadd.f32 %v718, %v2153
    %v2173 = vadd.f32 %v724, %v2153
    %v2174 = vadd.f32 %v730, %v2153
    %v2175 = vadd.f32 %v736, %v2153
    %v2176 = vadd.f32 %v742, %v2153
    %v2177 = vadd.f32 %v748, %v2153
    %v2178 = vadd.f32 %v754, %v2153
    %v2179 = vadd.f32 %v760, %v2153
    %v2180 = vadd.f32 %v766, %v2153
    %v2181 = vadd.f32 %v772, %v2153
    %v2182 = vadd.f32 %v778, %v2153
    %v2183 = vadd.f32 %v784, %v2153
    %v2184 = vadd.f32 %v790, %v2153
    %v2185 = vadd.f32 %v796, %v2153
    %v2186 = vadd.f32 %v802, %v2153
    %v2187 = vadd.f32 %v808, %v2153
    %v2188 = vadd.f32 %v814, %v2153
    %v2189 = vadd.f32 %v820, %v2153
    %v2190 = vadd.f32 %v826, %v2153
    %v2191 = vadd.f32 %v832, %v2153
    %v2192 = vadd.f32 %v838, %v2153
    %v2193 = vadd.f32 %v844, %v2153
    %v2194 = vadd.f32 %v850, %v2153
    %v2195 = vadd.f32 %v856, %v2153
    %v2196 = vadd.f32 %v862, %v2153
    %v2197 = vadd.f32 %v868, %v2153
    %v2198 = vadd.f32 %v874, %v2153
    %v2199 = vadd.f32 %v880, %v2153
    %v2200 = vadd.f32 %v886, %v2153
    %v2201 = vadd.f32 %v892, %v2153
    %v2202 = vadd.f32 %v898, %v2153
    %v2203 = vadd.f32 %v904, %v2153
    %v2204 = vadd.f32 %v910, %v2153
    %v2205 = vadd.f32 %v916, %v2153
    %v2206 = vadd.f32 %v922, %v2153
    %v2207 = vadd.f32 %v928, %v2153
    %v2208 = vadd.f32 %v934, %v2153
    %v2209 = vadd.f32 %v940, %v2153
    %v2210 = vadd.f32 %v946, %v2153
    %v2211 = vadd.f32 %v952, %v2153
    %v2212 = vadd.f32 %v958, %v2153
    %v2213 = vadd.f32 %v964, %v2153
    %v2214 = vadd.f32 %v970, %v2153
    %v2215 = vadd.f32 %v976, %v2153
    %v2216 = vadd.f32 %v982, %v2153
    %v2217 = vadd.f32 %v988, %v2153
    %v2218 = vadd.f32 %v994, %v2153
    %v2219 = vadd.f32 %v1000, %v2153
    %v2220 = vadd.f32 %v1006, %v2153
    %v2221 = vadd.f32 %v1012, %v2153
    %v2222 = vadd.f32 %v1018, %v2153
    %v2223 = vadd.f32 %v1024, %v2153
    %v2224 = vadd.f32 %v1030, %v2153
    %v2225 = vadd.f32 %v1036, %v2153
    %v2226 = vadd.f32 %v1042, %v2153
    %v2227 = vadd.f32 %v1048, %v2153
    %v2228 = vadd.f32 %v1054, %v2153
    %v2229 = vadd.f32 %v1060, %v2153
    %v2230 = vadd.f32 %v1066, %v2153
    %v2231 = vadd.f32 %v1072, %v2153
    %v2232 = vadd.f32 %v1078, %v2153
    %v2233 = vadd.f32 %v1084, %v2153
    %v2234 = vadd.f32 %v1090, %v2153
    %v2235 = vadd.f32 %v1096, %v2153
    %v2236 = vadd.f32 %v1102, %v2153
    %v2237 = vadd.f32 %v1108, %v2153
    %v2238 = vadd.f32 %v1114, %v2153
    %v2239 = vadd.f32 %v1120, %v2153
    %v2240 = vadd.f32 %v1126, %v2153
    %v2241 = vadd.f32 %v1132, %v2153
    %v2242 = vadd.f32 %v1138, %v2153
    %v2243 = vadd.f32 %v1144, %v2153
    %v2244 = vadd.f32 %v1150, %v2153
    %v2245 = vadd.f32 %v1156, %v2153
    %v2246 = vadd.f32 %v1162, %v2153
    %v2247 = vadd.f32 %v1168, %v2153
    %v2248 = vadd.f32 %v1174, %v2153
    %v2249 = vadd.f32 %v1180, %v2153
    %v2250 = vadd.f32 %v1186, %v2153
    %v2251 = vadd.f32 %v1192, %v2153
    %v2252 = vadd.f32 %v1198, %v2153
    %v2253 = vadd.f32 %v1204, %v2153
    %v2254 = vadd.f32 %v1210, %v2153
    %v2255 = vadd.f32 %v1216, %v2153
    %v2256 = vadd.f32 %v1222, %v2153
    %v2257 = vadd.f32 %v1228, %v2153
    %v2258 = vadd.f32 %v1234, %v2153
    %v2259 = vadd.f32 %v1240, %v2153
    %v2260 = vadd.f32 %v1246, %v2153
    %v2261 = vadd.f32 %v1252, %v2153
    %v2262 = vadd.f32 %v1258, %v2153
    %v2263 = vadd.f32 %v1264, %v2153
    %v2264 = vadd.f32 %v1270, %v2153
    %v2265 = vadd.f32 %v1276, %v2153
    %v2266 = vadd.f32 %v1282, %v2153
    %v2267 = vadd.f32 %v1288, %v2153
    %v2268 = vadd.f32 %v1294, %v2153
    %v2269 = vadd.f32 %v1300, %v2153
    %v2270 = vadd.f32 %v1306, %v2153
    %v2271 = vadd.f32 %v1312, %v2153
    %v2272 = vadd.f32 %v1318, %v2153
    %v2273 = vadd.f32 %v1324, %v2153
    %v2274 = vadd.f32 %v1330, %v2153
    %v2275 = vadd.f32 %v1336, %v2153
    %v2276 = vadd.f32 %v1342, %v2153
    %v2277 = vadd.f32 %v1348, %v2153
    %v2278 = vadd.f32 %v1354, %v2153
    %v2279 = vadd.f32 %v1360, %v2153
    %v2280 = vadd.f32 %v1366, %v2153
    %v2281 = vadd.f32 %v1372, %v2153
    %v2282 = vadd.f32 %v1378, %v2153
    %2284 = vset.pattern.permute.xlu0 0
    %2285 = vperm.xlu0 %2284, %v2020
    %v2286 = vpop.permute.xlu0 %2285
    %2289 = vset.pattern.permute.xlu0 0
    %2290 = vperm.xlu0 %2289, %v2021
    %v2291 = vpop.permute.xlu0 %2290
    %2294 = vset.pattern.permute.xlu0 0
    %2295 = vperm.xlu0 %2294, %v2022
    %v2296 = vpop.permute.xlu0 %2295
    %2299 = vset.pattern.permute.xlu0 0
    %2300 = vperm.xlu0 %2299, %v2023
    %v2301 = vpop.permute.xlu0 %2300
    %2304 = vset.pattern.permute.xlu0 0
    %2305 = vperm.xlu0 %2304, %v2024
    %v2306 = vpop.permute.xlu0 %2305
    %2309 = vset.pattern.permute.xlu0 0
    %2310 = vperm.xlu0 %2309, %v2025
    %v2311 = vpop.permute.xlu0 %2310
    %2314 = vset.pattern.permute.xlu0 0
    %2315 = vperm.xlu0 %2314, %v2026
    %v2316 = vpop.permute.xlu0 %2315
    %2319 = vset.pattern.permute.xlu0 0
    %2320 = vperm.xlu0 %2319, %v2027
    %v2321 = vpop.permute.xlu0 %2320
    %2324 = vset.pattern.permute.xlu0 0
    %2325 = vperm.xlu0 %2324, %v2028
    %v2326 = vpop.permute.xlu0 %2325
    %2329 = vset.pattern.permute.xlu0 0
    %2330 = vperm.xlu0 %2329, %v2029
    %v2331 = vpop.permute.xlu0 %2330
    %2334 = vset.pattern.permute.xlu0 0
    %2335 = vperm.xlu0 %2334, %v2030
    %v2336 = vpop.permute.xlu0 %2335
    %2339 = vset.pattern.permute.xlu0 0
    %2340 = vperm.xlu0 %2339, %v2031
    %v2341 = vpop.permute.xlu0 %2340
    %2344 = vset.pattern.permute.xlu0 0
    %2345 = vperm.xlu0 %2344, %v2032
    %v2346 = vpop.permute.xlu0 %2345
    %2349 = vset.pattern.permute.xlu0 0
    %2350 = vperm.xlu0 %2349, %v2033
    %v2351 = vpop.permute.xlu0 %2350
    %2354 = vset.pattern.permute.xlu0 0
    %2355 = vperm.xlu0 %2354, %v2034
    %v2356 = vpop.permute.xlu0 %2355
    %2359 = vset.pattern.permute.xlu0 0
    %2360 = vperm.xlu0 %2359, %v2035
    %v2361 = vpop.permute.xlu0 %2360
    %2364 = vset.pattern.permute.xlu0 0
    %2365 = vperm.xlu0 %2364, %v2036
    %v2366 = vpop.permute.xlu0 %2365
    %2369 = vset.pattern.permute.xlu0 0
    %2370 = vperm.xlu0 %2369, %v2037
    %v2371 = vpop.permute.xlu0 %2370
    %2374 = vset.pattern.permute.xlu0 0
    %2375 = vperm.xlu0 %2374, %v2038
    %v2376 = vpop.permute.xlu0 %2375
    %2379 = vset.pattern.permute.xlu0 0
    %2380 = vperm.xlu0 %2379, %v2039
    %v2381 = vpop.permute.xlu0 %2380
    %2384 = vset.pattern.permute.xlu0 0
    %2385 = vperm.xlu0 %2384, %v2040
    %v2386 = vpop.permute.xlu0 %2385
    %2389 = vset.pattern.permute.xlu0 0
    %2390 = vperm.xlu0 %2389, %v2041
    %v2391 = vpop.permute.xlu0 %2390
    %2394 = vset.pattern.permute.xlu0 0
    %2395 = vperm.xlu0 %2394, %v2042
    %v2396 = vpop.permute.xlu0 %2395
    %2399 = vset.pattern.permute.xlu0 0
    %2400 = vperm.xlu0 %2399, %v2043
    %v2401 = vpop.permute.xlu0 %2400
    %2404 = vset.pattern.permute.xlu0 0
    %2405 = vperm.xlu0 %2404, %v2044
    %v2406 = vpop.permute.xlu0 %2405
    %2409 = vset.pattern.permute.xlu0 0
    %2410 = vperm.xlu0 %2409, %v2045
    %v2411 = vpop.permute.xlu0 %2410
    %2414 = vset.pattern.permute.xlu0 0
    %2415 = vperm.xlu0 %2414, %v2046
    %v2416 = vpop.permute.xlu0 %2415
    %2419 = vset.pattern.permute.xlu0 0
    %2420 = vperm.xlu0 %2419, %v2047
    %v2421 = vpop.permute.xlu0 %2420
    %2424 = vset.pattern.permute.xlu0 0
    %2425 = vperm.xlu0 %2424, %v2048
    %v2426 = vpop.permute.xlu0 %2425
    %2429 = vset.pattern.permute.xlu0 0
    %2430 = vperm.xlu0 %2429, %v2049
    %v2431 = vpop.permute.xlu0 %2430
    %2434 = vset.pattern.permute.xlu0 0
    %2435 = vperm.xlu0 %2434, %v2050
    %v2436 = vpop.permute.xlu0 %2435
    %2439 = vset.pattern.permute.xlu0 0
    %2440 = vperm.xlu0 %2439, %v2051
    %v2441 = vpop.permute.xlu0 %2440
    %2444 = vset.pattern.permute.xlu0 0
    %2445 = vperm.xlu0 %2444, %v2052
    %v2446 = vpop.permute.xlu0 %2445
    %2449 = vset.pattern.permute.xlu0 0
    %2450 = vperm.xlu0 %2449, %v2053
    %v2451 = vpop.permute.xlu0 %2450
    %2454 = vset.pattern.permute.xlu0 0
    %2455 = vperm.xlu0 %2454, %v2054
    %v2456 = vpop.permute.xlu0 %2455
    %2459 = vset.pattern.permute.xlu0 0
    %2460 = vperm.xlu0 %2459, %v2055
    %v2461 = vpop.permute.xlu0 %2460
    %2464 = vset.pattern.permute.xlu0 0
    %2465 = vperm.xlu0 %2464, %v2056
    %v2466 = vpop.permute.xlu0 %2465
    %2469 = vset.pattern.permute.xlu0 0
    %2470 = vperm.xlu0 %2469, %v2057
    %v2471 = vpop.permute.xlu0 %2470
    %2474 = vset.pattern.permute.xlu0 0
    %2475 = vperm.xlu0 %2474, %v2058
    %v2476 = vpop.permute.xlu0 %2475
    %2479 = vset.pattern.permute.xlu0 0
    %2480 = vperm.xlu0 %2479, %v2059
    %v2481 = vpop.permute.xlu0 %2480
    %2484 = vset.pattern.permute.xlu0 0
    %2485 = vperm.xlu0 %2484, %v2060
    %v2486 = vpop.permute.xlu0 %2485
    %2489 = vset.pattern.permute.xlu0 0
    %2490 = vperm.xlu0 %2489, %v2061
    %v2491 = vpop.permute.xlu0 %2490
    %2494 = vset.pattern.permute.xlu0 0
    %2495 = vperm.xlu0 %2494, %v2062
    %v2496 = vpop.permute.xlu0 %2495
    %2499 = vset.pattern.permute.xlu0 0
    %2500 = vperm.xlu0 %2499, %v2063
    %v2501 = vpop.permute.xlu0 %2500
    %2504 = vset.pattern.permute.xlu0 0
    %2505 = vperm.xlu0 %2504, %v2064
    %v2506 = vpop.permute.xlu0 %2505
    %2509 = vset.pattern.permute.xlu0 0
    %2510 = vperm.xlu0 %2509, %v2065
    %v2511 = vpop.permute.xlu0 %2510
    %2514 = vset.pattern.permute.xlu0 0
    %2515 = vperm.xlu0 %2514, %v2066
    %v2516 = vpop.permute.xlu0 %2515
    %2519 = vset.pattern.permute.xlu0 0
    %2520 = vperm.xlu0 %2519, %v2067
    %v2521 = vpop.permute.xlu0 %2520
    %2524 = vset.pattern.permute.xlu0 0
    %2525 = vperm.xlu0 %2524, %v2068
    %v2526 = vpop.permute.xlu0 %2525
    %2529 = vset.pattern.permute.xlu0 0
    %2530 = vperm.xlu0 %2529, %v2069
    %v2531 = vpop.permute.xlu0 %2530
    %2534 = vset.pattern.permute.xlu0 0
    %2535 = vperm.xlu0 %2534, %v2070
    %v2536 = vpop.permute.xlu0 %2535
    %2539 = vset.pattern.permute.xlu0 0
    %2540 = vperm.xlu0 %2539, %v2071
    %v2541 = vpop.permute.xlu0 %2540
    %2544 = vset.pattern.permute.xlu0 0
    %2545 = vperm.xlu0 %2544, %v2072
    %v2546 = vpop.permute.xlu0 %2545
    %2549 = vset.pattern.permute.xlu0 0
    %2550 = vperm.xlu0 %2549, %v2073
    %v2551 = vpop.permute.xlu0 %2550
    %2554 = vset.pattern.permute.xlu0 0
    %2555 = vperm.xlu0 %2554, %v2074
    %v2556 = vpop.permute.xlu0 %2555
    %2559 = vset.pattern.permute.xlu0 0
    %2560 = vperm.xlu0 %2559, %v2075
    %v2561 = vpop.permute.xlu0 %2560
    %2564 = vset.pattern.permute.xlu0 0
    %2565 = vperm.xlu0 %2564, %v2076
    %v2566 = vpop.permute.xlu0 %2565
    %2569 = vset.pattern.permute.xlu0 0
    %2570 = vperm.xlu0 %2569, %v2077
    %v2571 = vpop.permute.xlu0 %2570
    %2574 = vset.pattern.permute.xlu0 0
    %2575 = vperm.xlu0 %2574, %v2078
    %v2576 = vpop.permute.xlu0 %2575
    %2579 = vset.pattern.permute.xlu0 0
    %2580 = vperm.xlu0 %2579, %v2079
    %v2581 = vpop.permute.xlu0 %2580
    %2584 = vset.pattern.permute.xlu0 0
    %2585 = vperm.xlu0 %2584, %v2080
    %v2586 = vpop.permute.xlu0 %2585
    %2589 = vset.pattern.permute.xlu0 0
    %2590 = vperm.xlu0 %2589, %v2081
    %v2591 = vpop.permute.xlu0 %2590
    %2594 = vset.pattern.permute.xlu0 0
    %2595 = vperm.xlu0 %2594, %v2082
    %v2596 = vpop.permute.xlu0 %2595
    %2599 = vset.pattern.permute.xlu0 0
    %2600 = vperm.xlu0 %2599, %v2083
    %v2601 = vpop.permute.xlu0 %2600
    %2604 = vset.pattern.permute.xlu0 0
    %2605 = vperm.xlu0 %2604, %v2084
    %v2606 = vpop.permute.xlu0 %2605
    %2609 = vset.pattern.permute.xlu0 0
    %2610 = vperm.xlu0 %2609, %v2085
    %v2611 = vpop.permute.xlu0 %2610
    %2614 = vset.pattern.permute.xlu0 0
    %2615 = vperm.xlu0 %2614, %v2086
    %v2616 = vpop.permute.xlu0 %2615
    %2619 = vset.pattern.permute.xlu0 0
    %2620 = vperm.xlu0 %2619, %v2087
    %v2621 = vpop.permute.xlu0 %2620
    %2624 = vset.pattern.permute.xlu0 0
    %2625 = vperm.xlu0 %2624, %v2088
    %v2626 = vpop.permute.xlu0 %2625
    %2629 = vset.pattern.permute.xlu0 0
    %2630 = vperm.xlu0 %2629, %v2089
    %v2631 = vpop.permute.xlu0 %2630
    %2634 = vset.pattern.permute.xlu0 0
    %2635 = vperm.xlu0 %2634, %v2090
    %v2636 = vpop.permute.xlu0 %2635
    %2639 = vset.pattern.permute.xlu0 0
    %2640 = vperm.xlu0 %2639, %v2091
    %v2641 = vpop.permute.xlu0 %2640
    %2644 = vset.pattern.permute.xlu0 0
    %2645 = vperm.xlu0 %2644, %v2092
    %v2646 = vpop.permute.xlu0 %2645
    %2649 = vset.pattern.permute.xlu0 0
    %2650 = vperm.xlu0 %2649, %v2093
    %v2651 = vpop.permute.xlu0 %2650
    %2654 = vset.pattern.permute.xlu0 0
    %2655 = vperm.xlu0 %2654, %v2094
    %v2656 = vpop.permute.xlu0 %2655
    %2659 = vset.pattern.permute.xlu0 0
    %2660 = vperm.xlu0 %2659, %v2095
    %v2661 = vpop.permute.xlu0 %2660
    %2664 = vset.pattern.permute.xlu0 0
    %2665 = vperm.xlu0 %2664, %v2096
    %v2666 = vpop.permute.xlu0 %2665
    %2669 = vset.pattern.permute.xlu0 0
    %2670 = vperm.xlu0 %2669, %v2097
    %v2671 = vpop.permute.xlu0 %2670
    %2674 = vset.pattern.permute.xlu0 0
    %2675 = vperm.xlu0 %2674, %v2098
    %v2676 = vpop.permute.xlu0 %2675
    %2679 = vset.pattern.permute.xlu0 0
    %2680 = vperm.xlu0 %2679, %v2099
    %v2681 = vpop.permute.xlu0 %2680
    %2684 = vset.pattern.permute.xlu0 0
    %2685 = vperm.xlu0 %2684, %v2100
    %v2686 = vpop.permute.xlu0 %2685
    %2689 = vset.pattern.permute.xlu0 0
    %2690 = vperm.xlu0 %2689, %v2101
    %v2691 = vpop.permute.xlu0 %2690
    %2694 = vset.pattern.permute.xlu0 0
    %2695 = vperm.xlu0 %2694, %v2102
    %v2696 = vpop.permute.xlu0 %2695
    %2699 = vset.pattern.permute.xlu0 0
    %2700 = vperm.xlu0 %2699, %v2103
    %v2701 = vpop.permute.xlu0 %2700
    %2704 = vset.pattern.permute.xlu0 0
    %2705 = vperm.xlu0 %2704, %v2104
    %v2706 = vpop.permute.xlu0 %2705
    %2709 = vset.pattern.permute.xlu0 0
    %2710 = vperm.xlu0 %2709, %v2105
    %v2711 = vpop.permute.xlu0 %2710
    %2714 = vset.pattern.permute.xlu0 0
    %2715 = vperm.xlu0 %2714, %v2106
    %v2716 = vpop.permute.xlu0 %2715
    %2719 = vset.pattern.permute.xlu0 0
    %2720 = vperm.xlu0 %2719, %v2107
    %v2721 = vpop.permute.xlu0 %2720
    %2724 = vset.pattern.permute.xlu0 0
    %2725 = vperm.xlu0 %2724, %v2108
    %v2726 = vpop.permute.xlu0 %2725
    %2729 = vset.pattern.permute.xlu0 0
    %2730 = vperm.xlu0 %2729, %v2109
    %v2731 = vpop.permute.xlu0 %2730
    %2734 = vset.pattern.permute.xlu0 0
    %2735 = vperm.xlu0 %2734, %v2110
    %v2736 = vpop.permute.xlu0 %2735
    %2739 = vset.pattern.permute.xlu0 0
    %2740 = vperm.xlu0 %2739, %v2111
    %v2741 = vpop.permute.xlu0 %2740
    %2744 = vset.pattern.permute.xlu0 0
    %2745 = vperm.xlu0 %2744, %v2112
    %v2746 = vpop.permute.xlu0 %2745
    %2749 = vset.pattern.permute.xlu0 0
    %2750 = vperm.xlu0 %2749, %v2113
    %v2751 = vpop.permute.xlu0 %2750
    %2754 = vset.pattern.permute.xlu0 0
    %2755 = vperm.xlu0 %2754, %v2114
    %v2756 = vpop.permute.xlu0 %2755
    %2759 = vset.pattern.permute.xlu0 0
    %2760 = vperm.xlu0 %2759, %v2115
    %v2761 = vpop.permute.xlu0 %2760
    %2764 = vset.pattern.permute.xlu0 0
    %2765 = vperm.xlu0 %2764, %v2116
    %v2766 = vpop.permute.xlu0 %2765
    %2769 = vset.pattern.permute.xlu0 0
    %2770 = vperm.xlu0 %2769, %v2117
    %v2771 = vpop.permute.xlu0 %2770
    %2774 = vset.pattern.permute.xlu0 0
    %2775 = vperm.xlu0 %2774, %v2118
    %v2776 = vpop.permute.xlu0 %2775
    %2779 = vset.pattern.permute.xlu0 0
    %2780 = vperm.xlu0 %2779, %v2119
    %v2781 = vpop.permute.xlu0 %2780
    %2784 = vset.pattern.permute.xlu0 0
    %2785 = vperm.xlu0 %2784, %v2120
    %v2786 = vpop.permute.xlu0 %2785
    %2789 = vset.pattern.permute.xlu0 0
    %2790 = vperm.xlu0 %2789, %v2121
    %v2791 = vpop.permute.xlu0 %2790
    %2794 = vset.pattern.permute.xlu0 0
    %2795 = vperm.xlu0 %2794, %v2122
    %v2796 = vpop.permute.xlu0 %2795
    %2799 = vset.pattern.permute.xlu0 0
    %2800 = vperm.xlu0 %2799, %v2123
    %v2801 = vpop.permute.xlu0 %2800
    %2804 = vset.pattern.permute.xlu0 0
    %2805 = vperm.xlu0 %2804, %v2124
    %v2806 = vpop.permute.xlu0 %2805
    %2809 = vset.pattern.permute.xlu0 0
    %2810 = vperm.xlu0 %2809, %v2125
    %v2811 = vpop.permute.xlu0 %2810
    %2814 = vset.pattern.permute.xlu0 0
    %2815 = vperm.xlu0 %2814, %v2126
    %v2816 = vpop.permute.xlu0 %2815
    %2819 = vset.pattern.permute.xlu0 0
    %2820 = vperm.xlu0 %2819, %v2127
    %v2821 = vpop.permute.xlu0 %2820
    %2824 = vset.pattern.permute.xlu0 0
    %2825 = vperm.xlu0 %2824, %v2128
    %v2826 = vpop.permute.xlu0 %2825
    %2829 = vset.pattern.permute.xlu0 0
    %2830 = vperm.xlu0 %2829, %v2129
    %v2831 = vpop.permute.xlu0 %2830
    %2834 = vset.pattern.permute.xlu0 0
    %2835 = vperm.xlu0 %2834, %v2130
    %v2836 = vpop.permute.xlu0 %2835
    %2839 = vset.pattern.permute.xlu0 0
    %2840 = vperm.xlu0 %2839, %v2131
    %v2841 = vpop.permute.xlu0 %2840
    %2844 = vset.pattern.permute.xlu0 0
    %2845 = vperm.xlu0 %2844, %v2132
    %v2846 = vpop.permute.xlu0 %2845
    %2849 = vset.pattern.permute.xlu0 0
    %2850 = vperm.xlu0 %2849, %v2133
    %v2851 = vpop.permute.xlu0 %2850
    %2854 = vset.pattern.permute.xlu0 0
    %2855 = vperm.xlu0 %2854, %v2134
    %v2856 = vpop.permute.xlu0 %2855
    %2859 = vset.pattern.permute.xlu0 0
    %2860 = vperm.xlu0 %2859, %v2135
    %v2861 = vpop.permute.xlu0 %2860
    %2864 = vset.pattern.permute.xlu0 0
    %2865 = vperm.xlu0 %2864, %v2136
    %v2866 = vpop.permute.xlu0 %2865
    %2869 = vset.pattern.permute.xlu0 0
    %2870 = vperm.xlu0 %2869, %v2137
    %v2871 = vpop.permute.xlu0 %2870
    %2874 = vset.pattern.permute.xlu0 0
    %2875 = vperm.xlu0 %2874, %v2138
    %v2876 = vpop.permute.xlu0 %2875
    %2879 = vset.pattern.permute.xlu0 0
    %2880 = vperm.xlu0 %2879, %v2139
    %v2881 = vpop.permute.xlu0 %2880
    %2884 = vset.pattern.permute.xlu0 0
    %2885 = vperm.xlu0 %2884, %v2140
    %v2886 = vpop.permute.xlu0 %2885
    %2889 = vset.pattern.permute.xlu0 0
    %2890 = vperm.xlu0 %2889, %v2141
    %v2891 = vpop.permute.xlu0 %2890
    %2894 = vset.pattern.permute.xlu0 0
    %2895 = vperm.xlu0 %2894, %v2142
    %v2896 = vpop.permute.xlu0 %2895
    %2899 = vset.pattern.permute.xlu0 0
    %2900 = vperm.xlu0 %2899, %v2143
    %v2901 = vpop.permute.xlu0 %2900
    %2904 = vset.pattern.permute.xlu0 0
    %2905 = vperm.xlu0 %2904, %v2144
    %v2906 = vpop.permute.xlu0 %2905
    %2909 = vset.pattern.permute.xlu0 0
    %2910 = vperm.xlu0 %2909, %v2145
    %v2911 = vpop.permute.xlu0 %2910
    %2914 = vset.pattern.permute.xlu0 0
    %2915 = vperm.xlu0 %2914, %v2146
    %v2916 = vpop.permute.xlu0 %2915
    %2919 = vset.pattern.permute.xlu0 0
    %2920 = vperm.xlu0 %2919, %v2147
    %v2921 = vpop.permute.xlu0 %2920
    %v2923 = vmul.f32 %v2286, %v2155
    %v2924 = vmul.f32 %v2291, %v2156
    %v2925 = vmul.f32 %v2296, %v2157
    %v2926 = vmul.f32 %v2301, %v2158
    %v2927 = vmul.f32 %v2306, %v2159
    %v2928 = vmul.f32 %v2311, %v2160
    %v2929 = vmul.f32 %v2316, %v2161
    %v2930 = vmul.f32 %v2321, %v2162
    %v2931 = vmul.f32 %v2326, %v2163
    %v2932 = vmul.f32 %v2331, %v2164
    %v2933 = vmul.f32 %v2336, %v2165
    %v2934 = vmul.f32 %v2341, %v2166
    %v2935 = vmul.f32 %v2346, %v2167
    %v2936 = vmul.f32 %v2351, %v2168
    %v2937 = vmul.f32 %v2356, %v2169
    %v2938 = vmul.f32 %v2361, %v2170
    %v2939 = vmul.f32 %v2366, %v2171
    %v2940 = vmul.f32 %v2371, %v2172
    %v2941 = vmul.f32 %v2376, %v2173
    %v2942 = vmul.f32 %v2381, %v2174
    %v2943 = vmul.f32 %v2386, %v2175
    %v2944 = vmul.f32 %v2391, %v2176
    %v2945 = vmul.f32 %v2396, %v2177
    %v2946 = vmul.f32 %v2401, %v2178
    %v2947 = vmul.f32 %v2406, %v2179
    %v2948 = vmul.f32 %v2411, %v2180
    %v2949 = vmul.f32 %v2416, %v2181
    %v2950 = vmul.f32 %v2421, %v2182
    %v2951 = vmul.f32 %v2426, %v2183
    %v2952 = vmul.f32 %v2431, %v2184
    %v2953 = vmul.f32 %v2436, %v2185
    %v2954 = vmul.f32 %v2441, %v2186
    %v2955 = vmul.f32 %v2446, %v2187
    %v2956 = vmul.f32 %v2451, %v2188
    %v2957 = vmul.f32 %v2456, %v2189
    %v2958 = vmul.f32 %v2461, %v2190
    %v2959 = vmul.f32 %v2466, %v2191
    %v2960 = vmul.f32 %v2471, %v2192
    %v2961 = vmul.f32 %v2476, %v2193
    %v2962 = vmul.f32 %v2481, %v2194
    %v2963 = vmul.f32 %v2486, %v2195
    %v2964 = vmul.f32 %v2491, %v2196
    %v2965 = vmul.f32 %v2496, %v2197
    %v2966 = vmul.f32 %v2501, %v2198
    %v2967 = vmul.f32 %v2506, %v2199
    %v2968 = vmul.f32 %v2511, %v2200
    %v2969 = vmul.f32 %v2516, %v2201
    %v2970 = vmul.f32 %v2521, %v2202
    %v2971 = vmul.f32 %v2526, %v2203
    %v2972 = vmul.f32 %v2531, %v2204
    %v2973 = vmul.f32 %v2536, %v2205
    %v2974 = vmul.f32 %v2541, %v2206
    %v2975 = vmul.f32 %v2546, %v2207
    %v2976 = vmul.f32 %v2551, %v2208
    %v2977 = vmul.f32 %v2556, %v2209
    %v2978 = vmul.f32 %v2561, %v2210
    %v2979 = vmul.f32 %v2566, %v2211
    %v2980 = vmul.f32 %v2571, %v2212
    %v2981 = vmul.f32 %v2576, %v2213
    %v2982 = vmul.f32 %v2581, %v2214
    %v2983 = vmul.f32 %v2586, %v2215
    %v2984 = vmul.f32 %v2591, %v2216
    %v2985 = vmul.f32 %v2596, %v2217
    %v2986 = vmul.f32 %v2601, %v2218
    %v2987 = vmul.f32 %v2606, %v2219
    %v2988 = vmul.f32 %v2611, %v2220
    %v2989 = vmul.f32 %v2616, %v2221
    %v2990 = vmul.f32 %v2621, %v2222
    %v2991 = vmul.f32 %v2626, %v2223
    %v2992 = vmul.f32 %v2631, %v2224
    %v2993 = vmul.f32 %v2636, %v2225
    %v2994 = vmul.f32 %v2641, %v2226
    %v2995 = vmul.f32 %v2646, %v2227
    %v2996 = vmul.f32 %v2651, %v2228
    %v2997 = vmul.f32 %v2656, %v2229
    %v2998 = vmul.f32 %v2661, %v2230
    %v2999 = vmul.f32 %v2666, %v2231
    %v3000 = vmul.f32 %v2671, %v2232
    %v3001 = vmul.f32 %v2676, %v2233
    %v3002 = vmul.f32 %v2681, %v2234
    %v3003 = vmul.f32 %v2686, %v2235
    %v3004 = vmul.f32 %v2691, %v2236
    %v3005 = vmul.f32 %v2696, %v2237
    %v3006 = vmul.f32 %v2701, %v2238
    %v3007 = vmul.f32 %v2706, %v2239
    %v3008 = vmul.f32 %v2711, %v2240
    %v3009 = vmul.f32 %v2716, %v2241
    %v3010 = vmul.f32 %v2721, %v2242
    %v3011 = vmul.f32 %v2726, %v2243
    %v3012 = vmul.f32 %v2731, %v2244
    %v3013 = vmul.f32 %v2736, %v2245
    %v3014 = vmul.f32 %v2741, %v2246
    %v3015 = vmul.f32 %v2746, %v2247
    %v3016 = vmul.f32 %v2751, %v2248
    %v3017 = vmul.f32 %v2756, %v2249
    %v3018 = vmul.f32 %v2761, %v2250
    %v3019 = vmul.f32 %v2766, %v2251
    %v3020 = vmul.f32 %v2771, %v2252
    %v3021 = vmul.f32 %v2776, %v2253
    %v3022 = vmul.f32 %v2781, %v2254
    %v3023 = vmul.f32 %v2786, %v2255
    %v3024 = vmul.f32 %v2791, %v2256
    %v3025 = vmul.f32 %v2796, %v2257
    %v3026 = vmul.f32 %v2801, %v2258
    %v3027 = vmul.f32 %v2806, %v2259
    %v3028 = vmul.f32 %v2811, %v2260
    %v3029 = vmul.f32 %v2816, %v2261
    %v3030 = vmul.f32 %v2821, %v2262
    %v3031 = vmul.f32 %v2826, %v2263
    %v3032 = vmul.f32 %v2831, %v2264
    %v3033 = vmul.f32 %v2836, %v2265
    %v3034 = vmul.f32 %v2841, %v2266
    %v3035 = vmul.f32 %v2846, %v2267
    %v3036 = vmul.f32 %v2851, %v2268
    %v3037 = vmul.f32 %v2856, %v2269
    %v3038 = vmul.f32 %v2861, %v2270
    %v3039 = vmul.f32 %v2866, %v2271
    %v3040 = vmul.f32 %v2871, %v2272
    %v3041 = vmul.f32 %v2876, %v2273
    %v3042 = vmul.f32 %v2881, %v2274
    %v3043 = vmul.f32 %v2886, %v2275
    %v3044 = vmul.f32 %v2891, %v2276
    %v3045 = vmul.f32 %v2896, %v2277
    %v3046 = vmul.f32 %v2901, %v2278
    %v3047 = vmul.f32 %v2906, %v2279
    %v3048 = vmul.f32 %v2911, %v2280
    %v3049 = vmul.f32 %v2916, %v2281
    %v3050 = vmul.f32 %v2921, %v2282
    %v3051 = vld [vmem:[%s2] sm:$0xff]
    %v3052 = vld [vmem:[%s2 + $0x8] sm:$0xff]
    %v3053 = vld [vmem:[%s2 + $0x10] sm:$0xff]
    %v3054 = vld [vmem:[%s2 + $0x18] sm:$0xff]
    %v3055 = vld [vmem:[%s2 + $0x20] sm:$0xff]
    %v3056 = vld [vmem:[%s2 + $0x28] sm:$0xff]
    %v3057 = vld [vmem:[%s2 + $0x30] sm:$0xff]
    %v3058 = vld [vmem:[%s2 + $0x38] sm:$0xff]
    %v3059 = vld [vmem:[%s2 + $0x40] sm:$0xff]
    %v3060 = vld [vmem:[%s2 + $0x48] sm:$0xff]
    %v3061 = vld [vmem:[%s2 + $0x50] sm:$0xff]
    %v3062 = vld [vmem:[%s2 + $0x58] sm:$0xff]
    %v3063 = vld [vmem:[%s2 + $0x60] sm:$0xff]
    %v3064 = vld [vmem:[%s2 + $0x68] sm:$0xff]
    %v3065 = vld [vmem:[%s2 + $0x70] sm:$0xff]
    %v3066 = vld [vmem:[%s2 + $0x78] sm:$0xff]
    %v3067 = vld [vmem:[%s2 + $0x80] sm:$0xff]
    %v3068 = vld [vmem:[%s2 + $0x88] sm:$0xff]
    %v3069 = vld [vmem:[%s2 + $0x90] sm:$0xff]
    %v3070 = vld [vmem:[%s2 + $0x98] sm:$0xff]
    %v3071 = vld [vmem:[%s2 + $0xa0] sm:$0xff]
    %v3072 = vld [vmem:[%s2 + $0xa8] sm:$0xff]
    %v3073 = vld [vmem:[%s2 + $0xb0] sm:$0xff]
    %v3074 = vld [vmem:[%s2 + $0xb8] sm:$0xff]
    %v3075 = vld [vmem:[%s2 + $0xc0] sm:$0xff]
    %v3076 = vld [vmem:[%s2 + $0xc8] sm:$0xff]
    %v3077 = vld [vmem:[%s2 + $0xd0] sm:$0xff]
    %v3078 = vld [vmem:[%s2 + $0xd8] sm:$0xff]
    %v3079 = vld [vmem:[%s2 + $0xe0] sm:$0xff]
    %v3080 = vld [vmem:[%s2 + $0xe8] sm:$0xff]
    %v3081 = vld [vmem:[%s2 + $0xf0] sm:$0xff]
    %v3082 = vld [vmem:[%s2 + $0xf8] sm:$0xff]
    %v3083 = vld [vmem:[%s2 + $0x100] sm:$0xff]
    %v3084 = vld [vmem:[%s2 + $0x108] sm:$0xff]
    %v3085 = vld [vmem:[%s2 + $0x110] sm:$0xff]
    %v3086 = vld [vmem:[%s2 + $0x118] sm:$0xff]
    %v3087 = vld [vmem:[%s2 + $0x120] sm:$0xff]
    %v3088 = vld [vmem:[%s2 + $0x128] sm:$0xff]
    %v3089 = vld [vmem:[%s2 + $0x130] sm:$0xff]
    %v3090 = vld [vmem:[%s2 + $0x138] sm:$0xff]
    %v3091 = vld [vmem:[%s2 + $0x140] sm:$0xff]
    %v3092 = vld [vmem:[%s2 + $0x148] sm:$0xff]
    %v3093 = vld [vmem:[%s2 + $0x150] sm:$0xff]
    %v3094 = vld [vmem:[%s2 + $0x158] sm:$0xff]
    %v3095 = vld [vmem:[%s2 + $0x160] sm:$0xff]
    %v3096 = vld [vmem:[%s2 + $0x168] sm:$0xff]
    %v3097 = vld [vmem:[%s2 + $0x170] sm:$0xff]
    %v3098 = vld [vmem:[%s2 + $0x178] sm:$0xff]
    %v3099 = vld [vmem:[%s2 + $0x180] sm:$0xff]
    %v3100 = vld [vmem:[%s2 + $0x188] sm:$0xff]
    %v3101 = vld [vmem:[%s2 + $0x190] sm:$0xff]
    %v3102 = vld [vmem:[%s2 + $0x198] sm:$0xff]
    %v3103 = vld [vmem:[%s2 + $0x1a0] sm:$0xff]
    %v3104 = vld [vmem:[%s2 + $0x1a8] sm:$0xff]
    %v3105 = vld [vmem:[%s2 + $0x1b0] sm:$0xff]
    %v3106 = vld [vmem:[%s2 + $0x1b8] sm:$0xff]
    %v3107 = vld [vmem:[%s2 + $0x1c0] sm:$0xff]
    %v3108 = vld [vmem:[%s2 + $0x1c8] sm:$0xff]
    %v3109 = vld [vmem:[%s2 + $0x1d0] sm:$0xff]
    %v3110 = vld [vmem:[%s2 + $0x1d8] sm:$0xff]
    %v3111 = vld [vmem:[%s2 + $0x1e0] sm:$0xff]
    %v3112 = vld [vmem:[%s2 + $0x1e8] sm:$0xff]
    %v3113 = vld [vmem:[%s2 + $0x1f0] sm:$0xff]
    %v3114 = vld [vmem:[%s2 + $0x1f8] sm:$0xff]
    %v3115 = vld [vmem:[%s2 + $0x200] sm:$0xff]
    %v3116 = vld [vmem:[%s2 + $0x208] sm:$0xff]
    %v3117 = vld [vmem:[%s2 + $0x210] sm:$0xff]
    %v3118 = vld [vmem:[%s2 + $0x218] sm:$0xff]
    %v3119 = vld [vmem:[%s2 + $0x220] sm:$0xff]
    %v3120 = vld [vmem:[%s2 + $0x228] sm:$0xff]
    %v3121 = vld [vmem:[%s2 + $0x230] sm:$0xff]
    %v3122 = vld [vmem:[%s2 + $0x238] sm:$0xff]
    %v3123 = vld [vmem:[%s2 + $0x240] sm:$0xff]
    %v3124 = vld [vmem:[%s2 + $0x248] sm:$0xff]
    %v3125 = vld [vmem:[%s2 + $0x250] sm:$0xff]
    %v3126 = vld [vmem:[%s2 + $0x258] sm:$0xff]
    %v3127 = vld [vmem:[%s2 + $0x260] sm:$0xff]
    %v3128 = vld [vmem:[%s2 + $0x268] sm:$0xff]
    %v3129 = vld [vmem:[%s2 + $0x270] sm:$0xff]
    %v3130 = vld [vmem:[%s2 + $0x278] sm:$0xff]
    %v3131 = vld [vmem:[%s2 + $0x280] sm:$0xff]
    %v3132 = vld [vmem:[%s2 + $0x288] sm:$0xff]
    %v3133 = vld [vmem:[%s2 + $0x290] sm:$0xff]
    %v3134 = vld [vmem:[%s2 + $0x298] sm:$0xff]
    %v3135 = vld [vmem:[%s2 + $0x2a0] sm:$0xff]
    %v3136 = vld [vmem:[%s2 + $0x2a8] sm:$0xff]
    %v3137 = vld [vmem:[%s2 + $0x2b0] sm:$0xff]
    %v3138 = vld [vmem:[%s2 + $0x2b8] sm:$0xff]
    %v3139 = vld [vmem:[%s2 + $0x2c0] sm:$0xff]
    %v3140 = vld [vmem:[%s2 + $0x2c8] sm:$0xff]
    %v3141 = vld [vmem:[%s2 + $0x2d0] sm:$0xff]
    %v3142 = vld [vmem:[%s2 + $0x2d8] sm:$0xff]
    %v3143 = vld [vmem:[%s2 + $0x2e0] sm:$0xff]
    %v3144 = vld [vmem:[%s2 + $0x2e8] sm:$0xff]
    %v3145 = vld [vmem:[%s2 + $0x2f0] sm:$0xff]
    %v3146 = vld [vmem:[%s2 + $0x2f8] sm:$0xff]
    %v3147 = vld [vmem:[%s2 + $0x300] sm:$0xff]
    %v3148 = vld [vmem:[%s2 + $0x308] sm:$0xff]
    %v3149 = vld [vmem:[%s2 + $0x310] sm:$0xff]
    %v3150 = vld [vmem:[%s2 + $0x318] sm:$0xff]
    %v3151 = vld [vmem:[%s2 + $0x320] sm:$0xff]
    %v3152 = vld [vmem:[%s2 + $0x328] sm:$0xff]
    %v3153 = vld [vmem:[%s2 + $0x330] sm:$0xff]
    %v3154 = vld [vmem:[%s2 + $0x338] sm:$0xff]
    %v3155 = vld [vmem:[%s2 + $0x340] sm:$0xff]
    %v3156 = vld [vmem:[%s2 + $0x348] sm:$0xff]
    %v3157 = vld [vmem:[%s2 + $0x350] sm:$0xff]
    %v3158 = vld [vmem:[%s2 + $0x358] sm:$0xff]
    %v3159 = vld [vmem:[%s2 + $0x360] sm:$0xff]
    %v3160 = vld [vmem:[%s2 + $0x368] sm:$0xff]
    %v3161 = vld [vmem:[%s2 + $0x370] sm:$0xff]
    %v3162 = vld [vmem:[%s2 + $0x378] sm:$0xff]
    %v3163 = vld [vmem:[%s2 + $0x380] sm:$0xff]
    %v3164 = vld [vmem:[%s2 + $0x388] sm:$0xff]
    %v3165 = vld [vmem:[%s2 + $0x390] sm:$0xff]
    %v3166 = vld [vmem:[%s2 + $0x398] sm:$0xff]
    %v3167 = vld [vmem:[%s2 + $0x3a0] sm:$0xff]
    %v3168 = vld [vmem:[%s2 + $0x3a8] sm:$0xff]
    %v3169 = vld [vmem:[%s2 + $0x3b0] sm:$0xff]
    %v3170 = vld [vmem:[%s2 + $0x3b8] sm:$0xff]
    %v3171 = vld [vmem:[%s2 + $0x3c0] sm:$0xff]
    %v3172 = vld [vmem:[%s2 + $0x3c8] sm:$0xff]
    %v3173 = vld [vmem:[%s2 + $0x3d0] sm:$0xff]
    %v3174 = vld [vmem:[%s2 + $0x3d8] sm:$0xff]
    %v3175 = vld [vmem:[%s2 + $0x3e0] sm:$0xff]
    %v3176 = vld [vmem:[%s2 + $0x3e8] sm:$0xff]
    %v3177 = vld [vmem:[%s2 + $0x3f0] sm:$0xff]
    %v3178 = vld [vmem:[%s2 + $0x3f8] sm:$0xff]
    %v3179 = vld [vmem:[%s5] sm:$0x1]
    %3181 = vset.pattern.permute.xlu0 0
    %3182 = vperm.xlu0 %3181, %v3051
    %v3183 = vpop.permute.xlu0 %3182
    %3186 = vset.pattern.permute.xlu0 0
    %3187 = vperm.xlu0 %3186, %v3052
    %v3188 = vpop.permute.xlu0 %3187
    %3191 = vset.pattern.permute.xlu0 0
    %3192 = vperm.xlu0 %3191, %v3053
    %v3193 = vpop.permute.xlu0 %3192
    %3196 = vset.pattern.permute.xlu0 0
    %3197 = vperm.xlu0 %3196, %v3054
    %v3198 = vpop.permute.xlu0 %3197
    %3201 = vset.pattern.permute.xlu0 0
    %3202 = vperm.xlu0 %3201, %v3055
    %v3203 = vpop.permute.xlu0 %3202
    %3206 = vset.pattern.permute.xlu0 0
    %3207 = vperm.xlu0 %3206, %v3056
    %v3208 = vpop.permute.xlu0 %3207
    %3211 = vset.pattern.permute.xlu0 0
    %3212 = vperm.xlu0 %3211, %v3057
    %v3213 = vpop.permute.xlu0 %3212
    %3216 = vset.pattern.permute.xlu0 0
    %3217 = vperm.xlu0 %3216, %v3058
    %v3218 = vpop.permute.xlu0 %3217
    %3221 = vset.pattern.permute.xlu0 0
    %3222 = vperm.xlu0 %3221, %v3059
    %v3223 = vpop.permute.xlu0 %3222
    %3226 = vset.pattern.permute.xlu0 0
    %3227 = vperm.xlu0 %3226, %v3060
    %v3228 = vpop.permute.xlu0 %3227
    %3231 = vset.pattern.permute.xlu0 0
    %3232 = vperm.xlu0 %3231, %v3061
    %v3233 = vpop.permute.xlu0 %3232
    %3236 = vset.pattern.permute.xlu0 0
    %3237 = vperm.xlu0 %3236, %v3062
    %v3238 = vpop.permute.xlu0 %3237
    %3241 = vset.pattern.permute.xlu0 0
    %3242 = vperm.xlu0 %3241, %v3063
    %v3243 = vpop.permute.xlu0 %3242
    %3246 = vset.pattern.permute.xlu0 0
    %3247 = vperm.xlu0 %3246, %v3064
    %v3248 = vpop.permute.xlu0 %3247
    %3251 = vset.pattern.permute.xlu0 0
    %3252 = vperm.xlu0 %3251, %v3065
    %v3253 = vpop.permute.xlu0 %3252
    %3256 = vset.pattern.permute.xlu0 0
    %3257 = vperm.xlu0 %3256, %v3066
    %v3258 = vpop.permute.xlu0 %3257
    %3261 = vset.pattern.permute.xlu0 0
    %3262 = vperm.xlu0 %3261, %v3067
    %v3263 = vpop.permute.xlu0 %3262
    %3266 = vset.pattern.permute.xlu0 0
    %3267 = vperm.xlu0 %3266, %v3068
    %v3268 = vpop.permute.xlu0 %3267
    %3271 = vset.pattern.permute.xlu0 0
    %3272 = vperm.xlu0 %3271, %v3069
    %v3273 = vpop.permute.xlu0 %3272
    %3276 = vset.pattern.permute.xlu0 0
    %3277 = vperm.xlu0 %3276, %v3070
    %v3278 = vpop.permute.xlu0 %3277
    %3281 = vset.pattern.permute.xlu0 0
    %3282 = vperm.xlu0 %3281, %v3071
    %v3283 = vpop.permute.xlu0 %3282
    %3286 = vset.pattern.permute.xlu0 0
    %3287 = vperm.xlu0 %3286, %v3072
    %v3288 = vpop.permute.xlu0 %3287
    %3291 = vset.pattern.permute.xlu0 0
    %3292 = vperm.xlu0 %3291, %v3073
    %v3293 = vpop.permute.xlu0 %3292
    %3296 = vset.pattern.permute.xlu0 0
    %3297 = vperm.xlu0 %3296, %v3074
    %v3298 = vpop.permute.xlu0 %3297
    %3301 = vset.pattern.permute.xlu0 0
    %3302 = vperm.xlu0 %3301, %v3075
    %v3303 = vpop.permute.xlu0 %3302
    %3306 = vset.pattern.permute.xlu0 0
    %3307 = vperm.xlu0 %3306, %v3076
    %v3308 = vpop.permute.xlu0 %3307
    %3311 = vset.pattern.permute.xlu0 0
    %3312 = vperm.xlu0 %3311, %v3077
    %v3313 = vpop.permute.xlu0 %3312
    %3316 = vset.pattern.permute.xlu0 0
    %3317 = vperm.xlu0 %3316, %v3078
    %v3318 = vpop.permute.xlu0 %3317
    %3321 = vset.pattern.permute.xlu0 0
    %3322 = vperm.xlu0 %3321, %v3079
    %v3323 = vpop.permute.xlu0 %3322
    %3326 = vset.pattern.permute.xlu0 0
    %3327 = vperm.xlu0 %3326, %v3080
    %v3328 = vpop.permute.xlu0 %3327
    %3331 = vset.pattern.permute.xlu0 0
    %3332 = vperm.xlu0 %3331, %v3081
    %v3333 = vpop.permute.xlu0 %3332
    %3336 = vset.pattern.permute.xlu0 0
    %3337 = vperm.xlu0 %3336, %v3082
    %v3338 = vpop.permute.xlu0 %3337
    %3341 = vset.pattern.permute.xlu0 0
    %3342 = vperm.xlu0 %3341, %v3083
    %v3343 = vpop.permute.xlu0 %3342
    %3346 = vset.pattern.permute.xlu0 0
    %3347 = vperm.xlu0 %3346, %v3084
    %v3348 = vpop.permute.xlu0 %3347
    %3351 = vset.pattern.permute.xlu0 0
    %3352 = vperm.xlu0 %3351, %v3085
    %v3353 = vpop.permute.xlu0 %3352
    %3356 = vset.pattern.permute.xlu0 0
    %3357 = vperm.xlu0 %3356, %v3086
    %v3358 = vpop.permute.xlu0 %3357
    %3361 = vset.pattern.permute.xlu0 0
    %3362 = vperm.xlu0 %3361, %v3087
    %v3363 = vpop.permute.xlu0 %3362
    %3366 = vset.pattern.permute.xlu0 0
    %3367 = vperm.xlu0 %3366, %v3088
    %v3368 = vpop.permute.xlu0 %3367
    %3371 = vset.pattern.permute.xlu0 0
    %3372 = vperm.xlu0 %3371, %v3089
    %v3373 = vpop.permute.xlu0 %3372
    %3376 = vset.pattern.permute.xlu0 0
    %3377 = vperm.xlu0 %3376, %v3090
    %v3378 = vpop.permute.xlu0 %3377
    %3381 = vset.pattern.permute.xlu0 0
    %3382 = vperm.xlu0 %3381, %v3091
    %v3383 = vpop.permute.xlu0 %3382
    %3386 = vset.pattern.permute.xlu0 0
    %3387 = vperm.xlu0 %3386, %v3092
    %v3388 = vpop.permute.xlu0 %3387
    %3391 = vset.pattern.permute.xlu0 0
    %3392 = vperm.xlu0 %3391, %v3093
    %v3393 = vpop.permute.xlu0 %3392
    %3396 = vset.pattern.permute.xlu0 0
    %3397 = vperm.xlu0 %3396, %v3094
    %v3398 = vpop.permute.xlu0 %3397
    %3401 = vset.pattern.permute.xlu0 0
    %3402 = vperm.xlu0 %3401, %v3095
    %v3403 = vpop.permute.xlu0 %3402
    %3406 = vset.pattern.permute.xlu0 0
    %3407 = vperm.xlu0 %3406, %v3096
    %v3408 = vpop.permute.xlu0 %3407
    %3411 = vset.pattern.permute.xlu0 0
    %3412 = vperm.xlu0 %3411, %v3097
    %v3413 = vpop.permute.xlu0 %3412
    %3416 = vset.pattern.permute.xlu0 0
    %3417 = vperm.xlu0 %3416, %v3098
    %v3418 = vpop.permute.xlu0 %3417
    %3421 = vset.pattern.permute.xlu0 0
    %3422 = vperm.xlu0 %3421, %v3099
    %v3423 = vpop.permute.xlu0 %3422
    %3426 = vset.pattern.permute.xlu0 0
    %3427 = vperm.xlu0 %3426, %v3100
    %v3428 = vpop.permute.xlu0 %3427
    %3431 = vset.pattern.permute.xlu0 0
    %3432 = vperm.xlu0 %3431, %v3101
    %v3433 = vpop.permute.xlu0 %3432
    %3436 = vset.pattern.permute.xlu0 0
    %3437 = vperm.xlu0 %3436, %v3102
    %v3438 = vpop.permute.xlu0 %3437
    %3441 = vset.pattern.permute.xlu0 0
    %3442 = vperm.xlu0 %3441, %v3103
    %v3443 = vpop.permute.xlu0 %3442
    %3446 = vset.pattern.permute.xlu0 0
    %3447 = vperm.xlu0 %3446, %v3104
    %v3448 = vpop.permute.xlu0 %3447
    %3451 = vset.pattern.permute.xlu0 0
    %3452 = vperm.xlu0 %3451, %v3105
    %v3453 = vpop.permute.xlu0 %3452
    %3456 = vset.pattern.permute.xlu0 0
    %3457 = vperm.xlu0 %3456, %v3106
    %v3458 = vpop.permute.xlu0 %3457
    %3461 = vset.pattern.permute.xlu0 0
    %3462 = vperm.xlu0 %3461, %v3107
    %v3463 = vpop.permute.xlu0 %3462
    %3466 = vset.pattern.permute.xlu0 0
    %3467 = vperm.xlu0 %3466, %v3108
    %v3468 = vpop.permute.xlu0 %3467
    %3471 = vset.pattern.permute.xlu0 0
    %3472 = vperm.xlu0 %3471, %v3109
    %v3473 = vpop.permute.xlu0 %3472
    %3476 = vset.pattern.permute.xlu0 0
    %3477 = vperm.xlu0 %3476, %v3110
    %v3478 = vpop.permute.xlu0 %3477
    %3481 = vset.pattern.permute.xlu0 0
    %3482 = vperm.xlu0 %3481, %v3111
    %v3483 = vpop.permute.xlu0 %3482
    %3486 = vset.pattern.permute.xlu0 0
    %3487 = vperm.xlu0 %3486, %v3112
    %v3488 = vpop.permute.xlu0 %3487
    %3491 = vset.pattern.permute.xlu0 0
    %3492 = vperm.xlu0 %3491, %v3113
    %v3493 = vpop.permute.xlu0 %3492
    %3496 = vset.pattern.permute.xlu0 0
    %3497 = vperm.xlu0 %3496, %v3114
    %v3498 = vpop.permute.xlu0 %3497
    %3501 = vset.pattern.permute.xlu0 0
    %3502 = vperm.xlu0 %3501, %v3115
    %v3503 = vpop.permute.xlu0 %3502
    %3506 = vset.pattern.permute.xlu0 0
    %3507 = vperm.xlu0 %3506, %v3116
    %v3508 = vpop.permute.xlu0 %3507
    %3511 = vset.pattern.permute.xlu0 0
    %3512 = vperm.xlu0 %3511, %v3117
    %v3513 = vpop.permute.xlu0 %3512
    %3516 = vset.pattern.permute.xlu0 0
    %3517 = vperm.xlu0 %3516, %v3118
    %v3518 = vpop.permute.xlu0 %3517
    %3521 = vset.pattern.permute.xlu0 0
    %3522 = vperm.xlu0 %3521, %v3119
    %v3523 = vpop.permute.xlu0 %3522
    %3526 = vset.pattern.permute.xlu0 0
    %3527 = vperm.xlu0 %3526, %v3120
    %v3528 = vpop.permute.xlu0 %3527
    %3531 = vset.pattern.permute.xlu0 0
    %3532 = vperm.xlu0 %3531, %v3121
    %v3533 = vpop.permute.xlu0 %3532
    %3536 = vset.pattern.permute.xlu0 0
    %3537 = vperm.xlu0 %3536, %v3122
    %v3538 = vpop.permute.xlu0 %3537
    %3541 = vset.pattern.permute.xlu0 0
    %3542 = vperm.xlu0 %3541, %v3123
    %v3543 = vpop.permute.xlu0 %3542
    %3546 = vset.pattern.permute.xlu0 0
    %3547 = vperm.xlu0 %3546, %v3124
    %v3548 = vpop.permute.xlu0 %3547
    %3551 = vset.pattern.permute.xlu0 0
    %3552 = vperm.xlu0 %3551, %v3125
    %v3553 = vpop.permute.xlu0 %3552
    %3556 = vset.pattern.permute.xlu0 0
    %3557 = vperm.xlu0 %3556, %v3126
    %v3558 = vpop.permute.xlu0 %3557
    %3561 = vset.pattern.permute.xlu0 0
    %3562 = vperm.xlu0 %3561, %v3127
    %v3563 = vpop.permute.xlu0 %3562
    %3566 = vset.pattern.permute.xlu0 0
    %3567 = vperm.xlu0 %3566, %v3128
    %v3568 = vpop.permute.xlu0 %3567
    %3571 = vset.pattern.permute.xlu0 0
    %3572 = vperm.xlu0 %3571, %v3129
    %v3573 = vpop.permute.xlu0 %3572
    %3576 = vset.pattern.permute.xlu0 0
    %3577 = vperm.xlu0 %3576, %v3130
    %v3578 = vpop.permute.xlu0 %3577
    %3581 = vset.pattern.permute.xlu0 0
    %3582 = vperm.xlu0 %3581, %v3131
    %v3583 = vpop.permute.xlu0 %3582
    %3586 = vset.pattern.permute.xlu0 0
    %3587 = vperm.xlu0 %3586, %v3132
    %v3588 = vpop.permute.xlu0 %3587
    %3591 = vset.pattern.permute.xlu0 0
    %3592 = vperm.xlu0 %3591, %v3133
    %v3593 = vpop.permute.xlu0 %3592
    %3596 = vset.pattern.permute.xlu0 0
    %3597 = vperm.xlu0 %3596, %v3134
    %v3598 = vpop.permute.xlu0 %3597
    %3601 = vset.pattern.permute.xlu0 0
    %3602 = vperm.xlu0 %3601, %v3135
    %v3603 = vpop.permute.xlu0 %3602
    %3606 = vset.pattern.permute.xlu0 0
    %3607 = vperm.xlu0 %3606, %v3136
    %v3608 = vpop.permute.xlu0 %3607
    %3611 = vset.pattern.permute.xlu0 0
    %3612 = vperm.xlu0 %3611, %v3137
    %v3613 = vpop.permute.xlu0 %3612
    %3616 = vset.pattern.permute.xlu0 0
    %3617 = vperm.xlu0 %3616, %v3138
    %v3618 = vpop.permute.xlu0 %3617
    %3621 = vset.pattern.permute.xlu0 0
    %3622 = vperm.xlu0 %3621, %v3139
    %v3623 = vpop.permute.xlu0 %3622
    %3626 = vset.pattern.permute.xlu0 0
    %3627 = vperm.xlu0 %3626, %v3140
    %v3628 = vpop.permute.xlu0 %3627
    %3631 = vset.pattern.permute.xlu0 0
    %3632 = vperm.xlu0 %3631, %v3141
    %v3633 = vpop.permute.xlu0 %3632
    %3636 = vset.pattern.permute.xlu0 0
    %3637 = vperm.xlu0 %3636, %v3142
    %v3638 = vpop.permute.xlu0 %3637
    %3641 = vset.pattern.permute.xlu0 0
    %3642 = vperm.xlu0 %3641, %v3143
    %v3643 = vpop.permute.xlu0 %3642
    %3646 = vset.pattern.permute.xlu0 0
    %3647 = vperm.xlu0 %3646, %v3144
    %v3648 = vpop.permute.xlu0 %3647
    %3651 = vset.pattern.permute.xlu0 0
    %3652 = vperm.xlu0 %3651, %v3145
    %v3653 = vpop.permute.xlu0 %3652
    %3656 = vset.pattern.permute.xlu0 0
    %3657 = vperm.xlu0 %3656, %v3146
    %v3658 = vpop.permute.xlu0 %3657
    %3661 = vset.pattern.permute.xlu0 0
    %3662 = vperm.xlu0 %3661, %v3147
    %v3663 = vpop.permute.xlu0 %3662
    %3666 = vset.pattern.permute.xlu0 0
    %3667 = vperm.xlu0 %3666, %v3148
    %v3668 = vpop.permute.xlu0 %3667
    %3671 = vset.pattern.permute.xlu0 0
    %3672 = vperm.xlu0 %3671, %v3149
    %v3673 = vpop.permute.xlu0 %3672
    %3676 = vset.pattern.permute.xlu0 0
    %3677 = vperm.xlu0 %3676, %v3150
    %v3678 = vpop.permute.xlu0 %3677
    %3681 = vset.pattern.permute.xlu0 0
    %3682 = vperm.xlu0 %3681, %v3151
    %v3683 = vpop.permute.xlu0 %3682
    %3686 = vset.pattern.permute.xlu0 0
    %3687 = vperm.xlu0 %3686, %v3152
    %v3688 = vpop.permute.xlu0 %3687
    %3691 = vset.pattern.permute.xlu0 0
    %3692 = vperm.xlu0 %3691, %v3153
    %v3693 = vpop.permute.xlu0 %3692
    %3696 = vset.pattern.permute.xlu0 0
    %3697 = vperm.xlu0 %3696, %v3154
    %v3698 = vpop.permute.xlu0 %3697
    %3701 = vset.pattern.permute.xlu0 0
    %3702 = vperm.xlu0 %3701, %v3155
    %v3703 = vpop.permute.xlu0 %3702
    %3706 = vset.pattern.permute.xlu0 0
    %3707 = vperm.xlu0 %3706, %v3156
    %v3708 = vpop.permute.xlu0 %3707
    %3711 = vset.pattern.permute.xlu0 0
    %3712 = vperm.xlu0 %3711, %v3157
    %v3713 = vpop.permute.xlu0 %3712
    %3716 = vset.pattern.permute.xlu0 0
    %3717 = vperm.xlu0 %3716, %v3158
    %v3718 = vpop.permute.xlu0 %3717
    %3721 = vset.pattern.permute.xlu0 0
    %3722 = vperm.xlu0 %3721, %v3159
    %v3723 = vpop.permute.xlu0 %3722
    %3726 = vset.pattern.permute.xlu0 0
    %3727 = vperm.xlu0 %3726, %v3160
    %v3728 = vpop.permute.xlu0 %3727
    %3731 = vset.pattern.permute.xlu0 0
    %3732 = vperm.xlu0 %3731, %v3161
    %v3733 = vpop.permute.xlu0 %3732
    %3736 = vset.pattern.permute.xlu0 0
    %3737 = vperm.xlu0 %3736, %v3162
    %v3738 = vpop.permute.xlu0 %3737
    %3741 = vset.pattern.permute.xlu0 0
    %3742 = vperm.xlu0 %3741, %v3163
    %v3743 = vpop.permute.xlu0 %3742
    %3746 = vset.pattern.permute.xlu0 0
    %3747 = vperm.xlu0 %3746, %v3164
    %v3748 = vpop.permute.xlu0 %3747
    %3751 = vset.pattern.permute.xlu0 0
    %3752 = vperm.xlu0 %3751, %v3165
    %v3753 = vpop.permute.xlu0 %3752
    %3756 = vset.pattern.permute.xlu0 0
    %3757 = vperm.xlu0 %3756, %v3166
    %v3758 = vpop.permute.xlu0 %3757
    %3761 = vset.pattern.permute.xlu0 0
    %3762 = vperm.xlu0 %3761, %v3167
    %v3763 = vpop.permute.xlu0 %3762
    %3766 = vset.pattern.permute.xlu0 0
    %3767 = vperm.xlu0 %3766, %v3168
    %v3768 = vpop.permute.xlu0 %3767
    %3771 = vset.pattern.permute.xlu0 0
    %3772 = vperm.xlu0 %3771, %v3169
    %v3773 = vpop.permute.xlu0 %3772
    %3776 = vset.pattern.permute.xlu0 0
    %3777 = vperm.xlu0 %3776, %v3170
    %v3778 = vpop.permute.xlu0 %3777
    %3781 = vset.pattern.permute.xlu0 0
    %3782 = vperm.xlu0 %3781, %v3171
    %v3783 = vpop.permute.xlu0 %3782
    %3786 = vset.pattern.permute.xlu0 0
    %3787 = vperm.xlu0 %3786, %v3172
    %v3788 = vpop.permute.xlu0 %3787
    %3791 = vset.pattern.permute.xlu0 0
    %3792 = vperm.xlu0 %3791, %v3173
    %v3793 = vpop.permute.xlu0 %3792
    %3796 = vset.pattern.permute.xlu0 0
    %3797 = vperm.xlu0 %3796, %v3174
    %v3798 = vpop.permute.xlu0 %3797
    %3801 = vset.pattern.permute.xlu0 0
    %3802 = vperm.xlu0 %3801, %v3175
    %v3803 = vpop.permute.xlu0 %3802
    %3806 = vset.pattern.permute.xlu0 0
    %3807 = vperm.xlu0 %3806, %v3176
    %v3808 = vpop.permute.xlu0 %3807
    %3811 = vset.pattern.permute.xlu0 0
    %3812 = vperm.xlu0 %3811, %v3177
    %v3813 = vpop.permute.xlu0 %3812
    %3816 = vset.pattern.permute.xlu0 0
    %3817 = vperm.xlu0 %3816, %v3178
    %v3818 = vpop.permute.xlu0 %3817
    %v3821 = vlaneseq
    %v3822 = vshrl.u32 %v3821, 7
    %v3823 = vsub.s32 0, %v3822
    %v3824 = vrot.slane %v3179, %v3823
    %v3826 = vmul.f32 %v3183, %v3824
    %v3827 = vmul.f32 %v3188, %v3824
    %v3828 = vmul.f32 %v3193, %v3824
    %v3829 = vmul.f32 %v3198, %v3824
    %v3830 = vmul.f32 %v3203, %v3824
    %v3831 = vmul.f32 %v3208, %v3824
    %v3832 = vmul.f32 %v3213, %v3824
    %v3833 = vmul.f32 %v3218, %v3824
    %v3834 = vmul.f32 %v3223, %v3824
    %v3835 = vmul.f32 %v3228, %v3824
    %v3836 = vmul.f32 %v3233, %v3824
    %v3837 = vmul.f32 %v3238, %v3824
    %v3838 = vmul.f32 %v3243, %v3824
    %v3839 = vmul.f32 %v3248, %v3824
    %v3840 = vmul.f32 %v3253, %v3824
    %v3841 = vmul.f32 %v3258, %v3824
    %v3842 = vmul.f32 %v3263, %v3824
    %v3843 = vmul.f32 %v3268, %v3824
    %v3844 = vmul.f32 %v3273, %v3824
    %v3845 = vmul.f32 %v3278, %v3824
    %v3846 = vmul.f32 %v3283, %v3824
    %v3847 = vmul.f32 %v3288, %v3824
    %v3848 = vmul.f32 %v3293, %v3824
    %v3849 = vmul.f32 %v3298, %v3824
    %v3850 = vmul.f32 %v3303, %v3824
    %v3851 = vmul.f32 %v3308, %v3824
    %v3852 = vmul.f32 %v3313, %v3824
    %v3853 = vmul.f32 %v3318, %v3824
    %v3854 = vmul.f32 %v3323, %v3824
    %v3855 = vmul.f32 %v3328, %v3824
    %v3856 = vmul.f32 %v3333, %v3824
    %v3857 = vmul.f32 %v3338, %v3824
    %v3858 = vmul.f32 %v3343, %v3824
    %v3859 = vmul.f32 %v3348, %v3824
    %v3860 = vmul.f32 %v3353, %v3824
    %v3861 = vmul.f32 %v3358, %v3824
    %v3862 = vmul.f32 %v3363, %v3824
    %v3863 = vmul.f32 %v3368, %v3824
    %v3864 = vmul.f32 %v3373, %v3824
    %v3865 = vmul.f32 %v3378, %v3824
    %v3866 = vmul.f32 %v3383, %v3824
    %v3867 = vmul.f32 %v3388, %v3824
    %v3868 = vmul.f32 %v3393, %v3824
    %v3869 = vmul.f32 %v3398, %v3824
    %v3870 = vmul.f32 %v3403, %v3824
    %v3871 = vmul.f32 %v3408, %v3824
    %v3872 = vmul.f32 %v3413, %v3824
    %v3873 = vmul.f32 %v3418, %v3824
    %v3874 = vmul.f32 %v3423, %v3824
    %v3875 = vmul.f32 %v3428, %v3824
    %v3876 = vmul.f32 %v3433, %v3824
    %v3877 = vmul.f32 %v3438, %v3824
    %v3878 = vmul.f32 %v3443, %v3824
    %v3879 = vmul.f32 %v3448, %v3824
    %v3880 = vmul.f32 %v3453, %v3824
    %v3881 = vmul.f32 %v3458, %v3824
    %v3882 = vmul.f32 %v3463, %v3824
    %v3883 = vmul.f32 %v3468, %v3824
    %v3884 = vmul.f32 %v3473, %v3824
    %v3885 = vmul.f32 %v3478, %v3824
    %v3886 = vmul.f32 %v3483, %v3824
    %v3887 = vmul.f32 %v3488, %v3824
    %v3888 = vmul.f32 %v3493, %v3824
    %v3889 = vmul.f32 %v3498, %v3824
    %v3890 = vmul.f32 %v3503, %v3824
    %v3891 = vmul.f32 %v3508, %v3824
    %v3892 = vmul.f32 %v3513, %v3824
    %v3893 = vmul.f32 %v3518, %v3824
    %v3894 = vmul.f32 %v3523, %v3824
    %v3895 = vmul.f32 %v3528, %v3824
    %v3896 = vmul.f32 %v3533, %v3824
    %v3897 = vmul.f32 %v3538, %v3824
    %v3898 = vmul.f32 %v3543, %v3824
    %v3899 = vmul.f32 %v3548, %v3824
    %v3900 = vmul.f32 %v3553, %v3824
    %v3901 = vmul.f32 %v3558, %v3824
    %v3902 = vmul.f32 %v3563, %v3824
    %v3903 = vmul.f32 %v3568, %v3824
    %v3904 = vmul.f32 %v3573, %v3824
    %v3905 = vmul.f32 %v3578, %v3824
    %v3906 = vmul.f32 %v3583, %v3824
    %v3907 = vmul.f32 %v3588, %v3824
    %v3908 = vmul.f32 %v3593, %v3824
    %v3909 = vmul.f32 %v3598, %v3824
    %v3910 = vmul.f32 %v3603, %v3824
    %v3911 = vmul.f32 %v3608, %v3824
    %v3912 = vmul.f32 %v3613, %v3824
    %v3913 = vmul.f32 %v3618, %v3824
    %v3914 = vmul.f32 %v3623, %v3824
    %v3915 = vmul.f32 %v3628, %v3824
    %v3916 = vmul.f32 %v3633, %v3824
    %v3917 = vmul.f32 %v3638, %v3824
    %v3918 = vmul.f32 %v3643, %v3824
    %v3919 = vmul.f32 %v3648, %v3824
    %v3920 = vmul.f32 %v3653, %v3824
    %v3921 = vmul.f32 %v3658, %v3824
    %v3922 = vmul.f32 %v3663, %v3824
    %v3923 = vmul.f32 %v3668, %v3824
    %v3924 = vmul.f32 %v3673, %v3824
    %v3925 = vmul.f32 %v3678, %v3824
    %v3926 = vmul.f32 %v3683, %v3824
    %v3927 = vmul.f32 %v3688, %v3824
    %v3928 = vmul.f32 %v3693, %v3824
    %v3929 = vmul.f32 %v3698, %v3824
    %v3930 = vmul.f32 %v3703, %v3824
    %v3931 = vmul.f32 %v3708, %v3824
    %v3932 = vmul.f32 %v3713, %v3824
    %v3933 = vmul.f32 %v3718, %v3824
    %v3934 = vmul.f32 %v3723, %v3824
    %v3935 = vmul.f32 %v3728, %v3824
    %v3936 = vmul.f32 %v3733, %v3824
    %v3937 = vmul.f32 %v3738, %v3824
    %v3938 = vmul.f32 %v3743, %v3824
    %v3939 = vmul.f32 %v3748, %v3824
    %v3940 = vmul.f32 %v3753, %v3824
    %v3941 = vmul.f32 %v3758, %v3824
    %v3942 = vmul.f32 %v3763, %v3824
    %v3943 = vmul.f32 %v3768, %v3824
    %v3944 = vmul.f32 %v3773, %v3824
    %v3945 = vmul.f32 %v3778, %v3824
    %v3946 = vmul.f32 %v3783, %v3824
    %v3947 = vmul.f32 %v3788, %v3824
    %v3948 = vmul.f32 %v3793, %v3824
    %v3949 = vmul.f32 %v3798, %v3824
    %v3950 = vmul.f32 %v3803, %v3824
    %v3951 = vmul.f32 %v3808, %v3824
    %v3952 = vmul.f32 %v3813, %v3824
    %v3953 = vmul.f32 %v3818, %v3824
    %v3954 = vadd.f32 %v2923, %v3826
    %v3955 = vadd.f32 %v2924, %v3827
    %v3956 = vadd.f32 %v2925, %v3828
    %v3957 = vadd.f32 %v2926, %v3829
    %v3958 = vadd.f32 %v2927, %v3830
    %v3959 = vadd.f32 %v2928, %v3831
    %v3960 = vadd.f32 %v2929, %v3832
    %v3961 = vadd.f32 %v2930, %v3833
    %v3962 = vadd.f32 %v2931, %v3834
    %v3963 = vadd.f32 %v2932, %v3835
    %v3964 = vadd.f32 %v2933, %v3836
    %v3965 = vadd.f32 %v2934, %v3837
    %v3966 = vadd.f32 %v2935, %v3838
    %v3967 = vadd.f32 %v2936, %v3839
    %v3968 = vadd.f32 %v2937, %v3840
    %v3969 = vadd.f32 %v2938, %v3841
    %v3970 = vadd.f32 %v2939, %v3842
    %v3971 = vadd.f32 %v2940, %v3843
    %v3972 = vadd.f32 %v2941, %v3844
    %v3973 = vadd.f32 %v2942, %v3845
    %v3974 = vadd.f32 %v2943, %v3846
    %v3975 = vadd.f32 %v2944, %v3847
    %v3976 = vadd.f32 %v2945, %v3848
    %v3977 = vadd.f32 %v2946, %v3849
    %v3978 = vadd.f32 %v2947, %v3850
    %v3979 = vadd.f32 %v2948, %v3851
    %v3980 = vadd.f32 %v2949, %v3852
    %v3981 = vadd.f32 %v2950, %v3853
    %v3982 = vadd.f32 %v2951, %v3854
    %v3983 = vadd.f32 %v2952, %v3855
    %v3984 = vadd.f32 %v2953, %v3856
    %v3985 = vadd.f32 %v2954, %v3857
    %v3986 = vadd.f32 %v2955, %v3858
    %v3987 = vadd.f32 %v2956, %v3859
    %v3988 = vadd.f32 %v2957, %v3860
    %v3989 = vadd.f32 %v2958, %v3861
    %v3990 = vadd.f32 %v2959, %v3862
    %v3991 = vadd.f32 %v2960, %v3863
    %v3992 = vadd.f32 %v2961, %v3864
    %v3993 = vadd.f32 %v2962, %v3865
    %v3994 = vadd.f32 %v2963, %v3866
    %v3995 = vadd.f32 %v2964, %v3867
    %v3996 = vadd.f32 %v2965, %v3868
    %v3997 = vadd.f32 %v2966, %v3869
    %v3998 = vadd.f32 %v2967, %v3870
    %v3999 = vadd.f32 %v2968, %v3871
    %v4000 = vadd.f32 %v2969, %v3872
    %v4001 = vadd.f32 %v2970, %v3873
    %v4002 = vadd.f32 %v2971, %v3874
    %v4003 = vadd.f32 %v2972, %v3875
    %v4004 = vadd.f32 %v2973, %v3876
    %v4005 = vadd.f32 %v2974, %v3877
    %v4006 = vadd.f32 %v2975, %v3878
    %v4007 = vadd.f32 %v2976, %v3879
    %v4008 = vadd.f32 %v2977, %v3880
    %v4009 = vadd.f32 %v2978, %v3881
    %v4010 = vadd.f32 %v2979, %v3882
    %v4011 = vadd.f32 %v2980, %v3883
    %v4012 = vadd.f32 %v2981, %v3884
    %v4013 = vadd.f32 %v2982, %v3885
    %v4014 = vadd.f32 %v2983, %v3886
    %v4015 = vadd.f32 %v2984, %v3887
    %v4016 = vadd.f32 %v2985, %v3888
    %v4017 = vadd.f32 %v2986, %v3889
    %v4018 = vadd.f32 %v2987, %v3890
    %v4019 = vadd.f32 %v2988, %v3891
    %v4020 = vadd.f32 %v2989, %v3892
    %v4021 = vadd.f32 %v2990, %v3893
    %v4022 = vadd.f32 %v2991, %v3894
    %v4023 = vadd.f32 %v2992, %v3895
    %v4024 = vadd.f32 %v2993, %v3896
    %v4025 = vadd.f32 %v2994, %v3897
    %v4026 = vadd.f32 %v2995, %v3898
    %v4027 = vadd.f32 %v2996, %v3899
    %v4028 = vadd.f32 %v2997, %v3900
    %v4029 = vadd.f32 %v2998, %v3901
    %v4030 = vadd.f32 %v2999, %v3902
    %v4031 = vadd.f32 %v3000, %v3903
    %v4032 = vadd.f32 %v3001, %v3904
    %v4033 = vadd.f32 %v3002, %v3905
    %v4034 = vadd.f32 %v3003, %v3906
    %v4035 = vadd.f32 %v3004, %v3907
    %v4036 = vadd.f32 %v3005, %v3908
    %v4037 = vadd.f32 %v3006, %v3909
    %v4038 = vadd.f32 %v3007, %v3910
    %v4039 = vadd.f32 %v3008, %v3911
    %v4040 = vadd.f32 %v3009, %v3912
    %v4041 = vadd.f32 %v3010, %v3913
    %v4042 = vadd.f32 %v3011, %v3914
    %v4043 = vadd.f32 %v3012, %v3915
    %v4044 = vadd.f32 %v3013, %v3916
    %v4045 = vadd.f32 %v3014, %v3917
    %v4046 = vadd.f32 %v3015, %v3918
    %v4047 = vadd.f32 %v3016, %v3919
    %v4048 = vadd.f32 %v3017, %v3920
    %v4049 = vadd.f32 %v3018, %v3921
    %v4050 = vadd.f32 %v3019, %v3922
    %v4051 = vadd.f32 %v3020, %v3923
    %v4052 = vadd.f32 %v3021, %v3924
    %v4053 = vadd.f32 %v3022, %v3925
    %v4054 = vadd.f32 %v3023, %v3926
    %v4055 = vadd.f32 %v3024, %v3927
    %v4056 = vadd.f32 %v3025, %v3928
    %v4057 = vadd.f32 %v3026, %v3929
    %v4058 = vadd.f32 %v3027, %v3930
    %v4059 = vadd.f32 %v3028, %v3931
    %v4060 = vadd.f32 %v3029, %v3932
    %v4061 = vadd.f32 %v3030, %v3933
    %v4062 = vadd.f32 %v3031, %v3934
    %v4063 = vadd.f32 %v3032, %v3935
    %v4064 = vadd.f32 %v3033, %v3936
    %v4065 = vadd.f32 %v3034, %v3937
    %v4066 = vadd.f32 %v3035, %v3938
    %v4067 = vadd.f32 %v3036, %v3939
    %v4068 = vadd.f32 %v3037, %v3940
    %v4069 = vadd.f32 %v3038, %v3941
    %v4070 = vadd.f32 %v3039, %v3942
    %v4071 = vadd.f32 %v3040, %v3943
    %v4072 = vadd.f32 %v3041, %v3944
    %v4073 = vadd.f32 %v3042, %v3945
    %v4074 = vadd.f32 %v3043, %v3946
    %v4075 = vadd.f32 %v3044, %v3947
    %v4076 = vadd.f32 %v3045, %v3948
    %v4077 = vadd.f32 %v3046, %v3949
    %v4078 = vadd.f32 %v3047, %v3950
    %v4079 = vadd.f32 %v3048, %v3951
    %v4080 = vadd.f32 %v3049, %v3952
    %v4081 = vadd.f32 %v3050, %v3953
    %v4082 = vld [vmem:[%s6] sm:$0x1]
    %v4084 = vlaneseq
    %v4085 = vshrl.u32 %v4084, 7
    %v4086 = vsub.s32 0, %v4085
    %v4087 = vrot.slane %v4082, %v4086
    %v4089 = vadd.f32 %v3954, %v4087
    %v4090 = vadd.f32 %v3955, %v4087
    %v4091 = vadd.f32 %v3956, %v4087
    %v4092 = vadd.f32 %v3957, %v4087
    %v4093 = vadd.f32 %v3958, %v4087
    %v4094 = vadd.f32 %v3959, %v4087
    %v4095 = vadd.f32 %v3960, %v4087
    %v4096 = vadd.f32 %v3961, %v4087
    %v4097 = vadd.f32 %v3962, %v4087
    %v4098 = vadd.f32 %v3963, %v4087
    %v4099 = vadd.f32 %v3964, %v4087
    %v4100 = vadd.f32 %v3965, %v4087
    %v4101 = vadd.f32 %v3966, %v4087
    %v4102 = vadd.f32 %v3967, %v4087
    %v4103 = vadd.f32 %v3968, %v4087
    %v4104 = vadd.f32 %v3969, %v4087
    %v4105 = vadd.f32 %v3970, %v4087
    %v4106 = vadd.f32 %v3971, %v4087
    %v4107 = vadd.f32 %v3972, %v4087
    %v4108 = vadd.f32 %v3973, %v4087
    %v4109 = vadd.f32 %v3974, %v4087
    %v4110 = vadd.f32 %v3975, %v4087
    %v4111 = vadd.f32 %v3976, %v4087
    %v4112 = vadd.f32 %v3977, %v4087
    %v4113 = vadd.f32 %v3978, %v4087
    %v4114 = vadd.f32 %v3979, %v4087
    %v4115 = vadd.f32 %v3980, %v4087
    %v4116 = vadd.f32 %v3981, %v4087
    %v4117 = vadd.f32 %v3982, %v4087
    %v4118 = vadd.f32 %v3983, %v4087
    %v4119 = vadd.f32 %v3984, %v4087
    %v4120 = vadd.f32 %v3985, %v4087
    %v4121 = vadd.f32 %v3986, %v4087
    %v4122 = vadd.f32 %v3987, %v4087
    %v4123 = vadd.f32 %v3988, %v4087
    %v4124 = vadd.f32 %v3989, %v4087
    %v4125 = vadd.f32 %v3990, %v4087
    %v4126 = vadd.f32 %v3991, %v4087
    %v4127 = vadd.f32 %v3992, %v4087
    %v4128 = vadd.f32 %v3993, %v4087
    %v4129 = vadd.f32 %v3994, %v4087
    %v4130 = vadd.f32 %v3995, %v4087
    %v4131 = vadd.f32 %v3996, %v4087
    %v4132 = vadd.f32 %v3997, %v4087
    %v4133 = vadd.f32 %v3998, %v4087
    %v4134 = vadd.f32 %v3999, %v4087
    %v4135 = vadd.f32 %v4000, %v4087
    %v4136 = vadd.f32 %v4001, %v4087
    %v4137 = vadd.f32 %v4002, %v4087
    %v4138 = vadd.f32 %v4003, %v4087
    %v4139 = vadd.f32 %v4004, %v4087
    %v4140 = vadd.f32 %v4005, %v4087
    %v4141 = vadd.f32 %v4006, %v4087
    %v4142 = vadd.f32 %v4007, %v4087
    %v4143 = vadd.f32 %v4008, %v4087
    %v4144 = vadd.f32 %v4009, %v4087
    %v4145 = vadd.f32 %v4010, %v4087
    %v4146 = vadd.f32 %v4011, %v4087
    %v4147 = vadd.f32 %v4012, %v4087
    %v4148 = vadd.f32 %v4013, %v4087
    %v4149 = vadd.f32 %v4014, %v4087
    %v4150 = vadd.f32 %v4015, %v4087
    %v4151 = vadd.f32 %v4016, %v4087
    %v4152 = vadd.f32 %v4017, %v4087
    %v4153 = vadd.f32 %v4018, %v4087
    %v4154 = vadd.f32 %v4019, %v4087
    %v4155 = vadd.f32 %v4020, %v4087
    %v4156 = vadd.f32 %v4021, %v4087
    %v4157 = vadd.f32 %v4022, %v4087
    %v4158 = vadd.f32 %v4023, %v4087
    %v4159 = vadd.f32 %v4024, %v4087
    %v4160 = vadd.f32 %v4025, %v4087
    %v4161 = vadd.f32 %v4026, %v4087
    %v4162 = vadd.f32 %v4027, %v4087
    %v4163 = vadd.f32 %v4028, %v4087
    %v4164 = vadd.f32 %v4029, %v4087
    %v4165 = vadd.f32 %v4030, %v4087
    %v4166 = vadd.f32 %v4031, %v4087
    %v4167 = vadd.f32 %v4032, %v4087
    %v4168 = vadd.f32 %v4033, %v4087
    %v4169 = vadd.f32 %v4034, %v4087
    %v4170 = vadd.f32 %v4035, %v4087
    %v4171 = vadd.f32 %v4036, %v4087
    %v4172 = vadd.f32 %v4037, %v4087
    %v4173 = vadd.f32 %v4038, %v4087
    %v4174 = vadd.f32 %v4039, %v4087
    %v4175 = vadd.f32 %v4040, %v4087
    %v4176 = vadd.f32 %v4041, %v4087
    %v4177 = vadd.f32 %v4042, %v4087
    %v4178 = vadd.f32 %v4043, %v4087
    %v4179 = vadd.f32 %v4044, %v4087
    %v4180 = vadd.f32 %v4045, %v4087
    %v4181 = vadd.f32 %v4046, %v4087
    %v4182 = vadd.f32 %v4047, %v4087
    %v4183 = vadd.f32 %v4048, %v4087
    %v4184 = vadd.f32 %v4049, %v4087
    %v4185 = vadd.f32 %v4050, %v4087
    %v4186 = vadd.f32 %v4051, %v4087
    %v4187 = vadd.f32 %v4052, %v4087
    %v4188 = vadd.f32 %v4053, %v4087
    %v4189 = vadd.f32 %v4054, %v4087
    %v4190 = vadd.f32 %v4055, %v4087
    %v4191 = vadd.f32 %v4056, %v4087
    %v4192 = vadd.f32 %v4057, %v4087
    %v4193 = vadd.f32 %v4058, %v4087
    %v4194 = vadd.f32 %v4059, %v4087
    %v4195 = vadd.f32 %v4060, %v4087
    %v4196 = vadd.f32 %v4061, %v4087
    %v4197 = vadd.f32 %v4062, %v4087
    %v4198 = vadd.f32 %v4063, %v4087
    %v4199 = vadd.f32 %v4064, %v4087
    %v4200 = vadd.f32 %v4065, %v4087
    %v4201 = vadd.f32 %v4066, %v4087
    %v4202 = vadd.f32 %v4067, %v4087
    %v4203 = vadd.f32 %v4068, %v4087
    %v4204 = vadd.f32 %v4069, %v4087
    %v4205 = vadd.f32 %v4070, %v4087
    %v4206 = vadd.f32 %v4071, %v4087
    %v4207 = vadd.f32 %v4072, %v4087
    %v4208 = vadd.f32 %v4073, %v4087
    %v4209 = vadd.f32 %v4074, %v4087
    %v4210 = vadd.f32 %v4075, %v4087
    %v4211 = vadd.f32 %v4076, %v4087
    %v4212 = vadd.f32 %v4077, %v4087
    %v4213 = vadd.f32 %v4078, %v4087
    %v4214 = vadd.f32 %v4079, %v4087
    %v4215 = vadd.f32 %v4080, %v4087
    %v4216 = vadd.f32 %v4081, %v4087
    %4217 = vst [vmem:[#allocation4] sm:$0xff] %v4089
    %4218 = vst [vmem:[#allocation4 + $0x8] sm:$0xff] %v4090
    %4219 = vst [vmem:[#allocation4 + $0x10] sm:$0xff] %v4091
    %4220 = vst [vmem:[#allocation4 + $0x18] sm:$0xff] %v4092
    %4221 = vst [vmem:[#allocation4 + $0x20] sm:$0xff] %v4093
    %4222 = vst [vmem:[#allocation4 + $0x28] sm:$0xff] %v4094
    %4223 = vst [vmem:[#allocation4 + $0x30] sm:$0xff] %v4095
    %4224 = vst [vmem:[#allocation4 + $0x38] sm:$0xff] %v4096
    %4225 = vst [vmem:[#allocation4 + $0x40] sm:$0xff] %v4097
    %4226 = vst [vmem:[#allocation4 + $0x48] sm:$0xff] %v4098
    %4227 = vst [vmem:[#allocation4 + $0x50] sm:$0xff] %v4099
    %4228 = vst [vmem:[#allocation4 + $0x58] sm:$0xff] %v4100
    %4229 = vst [vmem:[#allocation4 + $0x60] sm:$0xff] %v4101
    %4230 = vst [vmem:[#allocation4 + $0x68] sm:$0xff] %v4102
    %4231 = vst [vmem:[#allocation4 + $0x70] sm:$0xff] %v4103
    %4232 = vst [vmem:[#allocation4 + $0x78] sm:$0xff] %v4104
    %4233 = vst [vmem:[#allocation4 + $0x80] sm:$0xff] %v4105
    %4234 = vst [vmem:[#allocation4 + $0x88] sm:$0xff] %v4106
    %4235 = vst [vmem:[#allocation4 + $0x90] sm:$0xff] %v4107
    %4236 = vst [vmem:[#allocation4 + $0x98] sm:$0xff] %v4108
    %4237 = vst [vmem:[#allocation4 + $0xa0] sm:$0xff] %v4109
    %4238 = vst [vmem:[#allocation4 + $0xa8] sm:$0xff] %v4110
    %4239 = vst [vmem:[#allocation4 + $0xb0] sm:$0xff] %v4111
    %4240 = vst [vmem:[#allocation4 + $0xb8] sm:$0xff] %v4112
    %4241 = vst [vmem:[#allocation4 + $0xc0] sm:$0xff] %v4113
    %4242 = vst [vmem:[#allocation4 + $0xc8] sm:$0xff] %v4114
    %4243 = vst [vmem:[#allocation4 + $0xd0] sm:$0xff] %v4115
    %4244 = vst [vmem:[#allocation4 + $0xd8] sm:$0xff] %v4116
    %4245 = vst [vmem:[#allocation4 + $0xe0] sm:$0xff] %v4117
    %4246 = vst [vmem:[#allocation4 + $0xe8] sm:$0xff] %v4118
    %4247 = vst [vmem:[#allocation4 + $0xf0] sm:$0xff] %v4119
    %4248 = vst [vmem:[#allocation4 + $0xf8] sm:$0xff] %v4120
    %4249 = vst [vmem:[#allocation4 + $0x100] sm:$0xff] %v4121
    %4250 = vst [vmem:[#allocation4 + $0x108] sm:$0xff] %v4122
    %4251 = vst [vmem:[#allocation4 + $0x110] sm:$0xff] %v4123
    %4252 = vst [vmem:[#allocation4 + $0x118] sm:$0xff] %v4124
    %4253 = vst [vmem:[#allocation4 + $0x120] sm:$0xff] %v4125
    %4254 = vst [vmem:[#allocation4 + $0x128] sm:$0xff] %v4126
    %4255 = vst [vmem:[#allocation4 + $0x130] sm:$0xff] %v4127
    %4256 = vst [vmem:[#allocation4 + $0x138] sm:$0xff] %v4128
    %4257 = vst [vmem:[#allocation4 + $0x140] sm:$0xff] %v4129
    %4258 = vst [vmem:[#allocation4 + $0x148] sm:$0xff] %v4130
    %4259 = vst [vmem:[#allocation4 + $0x150] sm:$0xff] %v4131
    %4260 = vst [vmem:[#allocation4 + $0x158] sm:$0xff] %v4132
    %4261 = vst [vmem:[#allocation4 + $0x160] sm:$0xff] %v4133
    %4262 = vst [vmem:[#allocation4 + $0x168] sm:$0xff] %v4134
    %4263 = vst [vmem:[#allocation4 + $0x170] sm:$0xff] %v4135
    %4264 = vst [vmem:[#allocation4 + $0x178] sm:$0xff] %v4136
    %4265 = vst [vmem:[#allocation4 + $0x180] sm:$0xff] %v4137
    %4266 = vst [vmem:[#allocation4 + $0x188] sm:$0xff] %v4138
    %4267 = vst [vmem:[#allocation4 + $0x190] sm:$0xff] %v4139
    %4268 = vst [vmem:[#allocation4 + $0x198] sm:$0xff] %v4140
    %4269 = vst [vmem:[#allocation4 + $0x1a0] sm:$0xff] %v4141
    %4270 = vst [vmem:[#allocation4 + $0x1a8] sm:$0xff] %v4142
    %4271 = vst [vmem:[#allocation4 + $0x1b0] sm:$0xff] %v4143
    %4272 = vst [vmem:[#allocation4 + $0x1b8] sm:$0xff] %v4144
    %4273 = vst [vmem:[#allocation4 + $0x1c0] sm:$0xff] %v4145
    %4274 = vst [vmem:[#allocation4 + $0x1c8] sm:$0xff] %v4146
    %4275 = vst [vmem:[#allocation4 + $0x1d0] sm:$0xff] %v4147
    %4276 = vst [vmem:[#allocation4 + $0x1d8] sm:$0xff] %v4148
    %4277 = vst [vmem:[#allocation4 + $0x1e0] sm:$0xff] %v4149
    %4278 = vst [vmem:[#allocation4 + $0x1e8] sm:$0xff] %v4150
    %4279 = vst [vmem:[#allocation4 + $0x1f0] sm:$0xff] %v4151
    %4280 = vst [vmem:[#allocation4 + $0x1f8] sm:$0xff] %v4152
    %4281 = vst [vmem:[#allocation4 + $0x200] sm:$0xff] %v4153
    %4282 = vst [vmem:[#allocation4 + $0x208] sm:$0xff] %v4154
    %4283 = vst [vmem:[#allocation4 + $0x210] sm:$0xff] %v4155
    %4284 = vst [vmem:[#allocation4 + $0x218] sm:$0xff] %v4156
    %4285 = vst [vmem:[#allocation4 + $0x220] sm:$0xff] %v4157
    %4286 = vst [vmem:[#allocation4 + $0x228] sm:$0xff] %v4158
    %4287 = vst [vmem:[#allocation4 + $0x230] sm:$0xff] %v4159
    %4288 = vst [vmem:[#allocation4 + $0x238] sm:$0xff] %v4160
    %4289 = vst [vmem:[#allocation4 + $0x240] sm:$0xff] %v4161
    %4290 = vst [vmem:[#allocation4 + $0x248] sm:$0xff] %v4162
    %4291 = vst [vmem:[#allocation4 + $0x250] sm:$0xff] %v4163
    %4292 = vst [vmem:[#allocation4 + $0x258] sm:$0xff] %v4164
    %4293 = vst [vmem:[#allocation4 + $0x260] sm:$0xff] %v4165
    %4294 = vst [vmem:[#allocation4 + $0x268] sm:$0xff] %v4166
    %4295 = vst [vmem:[#allocation4 + $0x270] sm:$0xff] %v4167
    %4296 = vst [vmem:[#allocation4 + $0x278] sm:$0xff] %v4168
    %4297 = vst [vmem:[#allocation4 + $0x280] sm:$0xff] %v4169
    %4298 = vst [vmem:[#allocation4 + $0x288] sm:$0xff] %v4170
    %4299 = vst [vmem:[#allocation4 + $0x290] sm:$0xff] %v4171
    %4300 = vst [vmem:[#allocation4 + $0x298] sm:$0xff] %v4172
    %4301 = vst [vmem:[#allocation4 + $0x2a0] sm:$0xff] %v4173
    %4302 = vst [vmem:[#allocation4 + $0x2a8] sm:$0xff] %v4174
    %4303 = vst [vmem:[#allocation4 + $0x2b0] sm:$0xff] %v4175
    %4304 = vst [vmem:[#allocation4 + $0x2b8] sm:$0xff] %v4176
    %4305 = vst [vmem:[#allocation4 + $0x2c0] sm:$0xff] %v4177
    %4306 = vst [vmem:[#allocation4 + $0x2c8] sm:$0xff] %v4178
    %4307 = vst [vmem:[#allocation4 + $0x2d0] sm:$0xff] %v4179
    %4308 = vst [vmem:[#allocation4 + $0x2d8] sm:$0xff] %v4180
    %4309 = vst [vmem:[#allocation4 + $0x2e0] sm:$0xff] %v4181
    %4310 = vst [vmem:[#allocation4 + $0x2e8] sm:$0xff] %v4182
    %4311 = vst [vmem:[#allocation4 + $0x2f0] sm:$0xff] %v4183
    %4312 = vst [vmem:[#allocation4 + $0x2f8] sm:$0xff] %v4184
    %4313 = vst [vmem:[#allocation4 + $0x300] sm:$0xff] %v4185
    %4314 = vst [vmem:[#allocation4 + $0x308] sm:$0xff] %v4186
    %4315 = vst [vmem:[#allocation4 + $0x310] sm:$0xff] %v4187
    %4316 = vst [vmem:[#allocation4 + $0x318] sm:$0xff] %v4188
    %4317 = vst [vmem:[#allocation4 + $0x320] sm:$0xff] %v4189
    %4318 = vst [vmem:[#allocation4 + $0x328] sm:$0xff] %v4190
    %4319 = vst [vmem:[#allocation4 + $0x330] sm:$0xff] %v4191
    %4320 = vst [vmem:[#allocation4 + $0x338] sm:$0xff] %v4192
    %4321 = vst [vmem:[#allocation4 + $0x340] sm:$0xff] %v4193
    %4322 = vst [vmem:[#allocation4 + $0x348] sm:$0xff] %v4194
    %4323 = vst [vmem:[#allocation4 + $0x350] sm:$0xff] %v4195
    %4324 = vst [vmem:[#allocation4 + $0x358] sm:$0xff] %v4196
    %4325 = vst [vmem:[#allocation4 + $0x360] sm:$0xff] %v4197
    %4326 = vst [vmem:[#allocation4 + $0x368] sm:$0xff] %v4198
    %4327 = vst [vmem:[#allocation4 + $0x370] sm:$0xff] %v4199
    %4328 = vst [vmem:[#allocation4 + $0x378] sm:$0xff] %v4200
    %4329 = vst [vmem:[#allocation4 + $0x380] sm:$0xff] %v4201
    %4330 = vst [vmem:[#allocation4 + $0x388] sm:$0xff] %v4202
    %4331 = vst [vmem:[#allocation4 + $0x390] sm:$0xff] %v4203
    %4332 = vst [vmem:[#allocation4 + $0x398] sm:$0xff] %v4204
    %4333 = vst [vmem:[#allocation4 + $0x3a0] sm:$0xff] %v4205
    %4334 = vst [vmem:[#allocation4 + $0x3a8] sm:$0xff] %v4206
    %4335 = vst [vmem:[#allocation4 + $0x3b0] sm:$0xff] %v4207
    %4336 = vst [vmem:[#allocation4 + $0x3b8] sm:$0xff] %v4208
    %4337 = vst [vmem:[#allocation4 + $0x3c0] sm:$0xff] %v4209
    %4338 = vst [vmem:[#allocation4 + $0x3c8] sm:$0xff] %v4210
    %4339 = vst [vmem:[#allocation4 + $0x3d0] sm:$0xff] %v4211
    %4340 = vst [vmem:[#allocation4 + $0x3d8] sm:$0xff] %v4212
    %4341 = vst [vmem:[#allocation4 + $0x3e0] sm:$0xff] %v4213
    %4342 = vst [vmem:[#allocation4 + $0x3e8] sm:$0xff] %v4214
    %4343 = vst [vmem:[#allocation4 + $0x3f0] sm:$0xff] %v4215
    %4344 = vst [vmem:[#allocation4 + $0x3f8] sm:$0xff] %v4216
    // Predicated region
    $region30: #{tpu_custom_call.1} parent=1 // pred_check
      _
    $region31: #{tpu_custom_call.1} parent=1 // pred_check_branch
      %4346 = sbr.rel (0) target = $region33
    $region32: #{tpu_custom_call.1} parent=1 // pred_region
      %s4348 = ssub.s32 8192, 8192
      %4349 = vsyncadd [#allocation3], %s4348
      %s4350 = sshll.u32 [#allocation2], 4
      %s4351 = int_to_ptr.vmem [resolvable:$true] %s4350
      %4356 = dma.vmem_to_hbm [thread:$0]  %s4351, 8192, %s7, [#allocation3], 64, 64, 4
    $region33: #{tpu_custom_call.1} parent=1 // pred_fallthru
      _
    // Predicated region
    $region34: #{tpu_custom_call.1} parent=1 // pred_check
      _
    $region35: #{tpu_custom_call.1} parent=1 // pred_check_branch
      %4358 = sbr.rel (0) target = $region37
    $region36: #{tpu_custom_call.1} parent=1 // pred_region
      %s4360 = ssub.s32 16384, 16384
      %4361 = vsyncadd [#allocation5], %s4360
      %s4362 = sshll.u32 [#allocation4], 4
      %s4363 = int_to_ptr.vmem [resolvable:$true] %s4362
      %4368 = dma.vmem_to_hbm [thread:$0]  %s4363, 16384, %s8, [#allocation5], 128, 128, 8
    $region37: #{tpu_custom_call.1} parent=1 // pred_fallthru
      _
    // Predicated region
    $region38: #{tpu_custom_call.1} parent=1 // pred_check
      _
    $region39: #{tpu_custom_call.1} parent=1 // pred_check_branch
      %4370 = sbr.rel (0) target = $region41
    $region40: #{tpu_custom_call.1} parent=1 // pred_region
      %4371 = dma.done [#allocation3], 8192
    $region41: #{tpu_custom_call.1} parent=1 // pred_fallthru
      _
    // Predicated region
    $region42: #{tpu_custom_call.1} parent=1 // pred_check
      _
    $region43: #{tpu_custom_call.1} parent=1 // pred_check_branch
      %4373 = sbr.rel (0) target = $region45
    $region44: #{tpu_custom_call.1} parent=1 // pred_region
      %4374 = dma.done [#allocation5], 16384
    $region45: #{tpu_custom_call.1} parent=1 // pred_fallthru
      _
    %4375 = vsyncpa [#allocation3], 1
    %4376 = vsyncpa [#allocation5], 1

</llo_original>
